<compile_context>
chip_gen: v7x
topology: tpu7x:2x2x1
jax: 0.10.0
libtpu: 0.0.40
codegen_flags: <defaults>
</compile_context>

<pallas_src>
import functools

import jax
import jax.numpy as jnp
from jax.experimental import pallas as pl
from jax.experimental.pallas import tpu as pltpu

EPS = 1e-5


# ---------------------------------------------------------------------------
# Small helpers
# ---------------------------------------------------------------------------
def _round_up(a, b):
    return (a + b - 1) // b * b


def _vmem_capacity_bytes():
    try:
        return int(pltpu.get_tpu_info().vmem_capacity_bytes)
    except Exception:
        return 64 * 1024 * 1024          # conservative: v7x has 64 MiB / TC


def _vmem_limit(work_bytes, cap):
    # generous headroom above the estimated working set, never more than ~3/4
    # of physical VMEM (do not assume 128 MiB: v7x has 64 MiB per TensorCore).
    return int(min(cap * 3 // 4, max(32 * 1024 * 1024, 2 * work_bytes)))


# ---------------------------------------------------------------------------
# Pallas kernels
# ---------------------------------------------------------------------------
def _stats_kernel(x_ref, y_ref, wx_ref, wy_ref, stat_ref,
                  *, s_valid, tile_s, ragged):
    """Pass 1: bias-free conv + per-(sample,channel) sum / sum-of-squares."""
    t = pl.program_id(1)

    @pl.when(t == 0)
    def _():
        stat_ref[...] = jnp.zeros_like(stat_ref)

    # 1x1x1 conv on the concatenated channels == Wx @ x + Wy @ y  (bias folded
    # analytically on the host, so zero columns contribute exactly zero).
    z = (jnp.dot(wx_ref[...], x_ref[0], preferred_element_type=jnp.float32)
         + jnp.dot(wy_ref[...], y_ref[0], preferred_element_type=jnp.float32))

    if ragged:  # clipped edge block -> out-of-range lanes are undefined: mask
        col = t * tile_s + jax.lax.broadcasted_iota(jnp.int32, z.shape, 1)
        z = jnp.where(col < s_valid, z, 0.0)

    stat_ref[0, 0] += jnp.sum(z, axis=1, keepdims=True)
    stat_ref[0, 1] += jnp.sum(z * z, axis=1, keepdims=True)


def _apply_kernel(x_ref, y_ref, wx_ref, wy_ref, scale_ref, shift_ref, out_ref):
    """Pass 2: conv + folded (BN affine * dropout) + ReLU, lane-dense store."""
    z = (jnp.dot(wx_ref[...], x_ref[0], preferred_element_type=jnp.float32)
         + jnp.dot(wy_ref[...], y_ref[0], preferred_element_type=jnp.float32))
    out_ref[0] = jnp.maximum(z * scale_ref[0] + shift_ref[0], 0.0
                             ).astype(out_ref.dtype)


def _fused_kernel(x_ref, y_ref, wx_ref, wy_ref, b_ref, gamma_ref, beta_ref,
                  drop_ref, out_ref, z_scr, stat_scr,
                  *, s_valid, tile_s, num_t, m_total, ragged):
    """Single pass: z stays resident in VMEM, x/y are read from HBM once.

    Grid = (phase, n, t) with phase outermost:
      phase 0: conv -> z_scr + accumulate batch statistics (no output writes;
               the output index_map is frozen at block 0 so nothing is flushed).
      phase 1: folded BN affine (+bias, +dropout) + ReLU from the resident z
               (the x/y index_maps are frozen at block 0 so nothing is re-read).
    """
    p = pl.program_id(0)
    i = pl.program_id(1)
    t = pl.program_id(2)
    step = i * num_t + t

    @pl.when((p == 0) & (i == 0) & (t == 0))
    def _():
        stat_scr[...] = jnp.zeros_like(stat_scr)

    @pl.when(p == 0)
    def _():
        z = (jnp.dot(wx_ref[...], x_ref[0], preferred_element_type=jnp.float32)
             + jnp.dot(wy_ref[...], y_ref[0], preferred_element_type=jnp.float32))
        z_scr[step] = z
        if ragged:
            col = t * tile_s + jax.lax.broadcasted_iota(jnp.int32, z.shape, 1)
            z = jnp.where(col < s_valid, z, 0.0)
        stat_scr[0] += jnp.sum(z, axis=1, keepdims=True)
        stat_scr[1] += jnp.sum(z * z, axis=1, keepdims=True)

    @pl.when(p == 1)
    def _():
        b = b_ref[...]                               # (Cout, 1)
        sum0 = stat_scr[0]                           # bias-free sums
        sumsq0 = stat_scr[1]
        mean = sum0 / m_total + b
        ex2 = (sumsq0 + 2.0 * b * sum0) / m_total + b * b
        var = jnp.maximum(ex2 - mean * mean, 0.0)
        scale = gamma_ref[...] * jax.lax.rsqrt(var + EPS)
        shift = beta_ref[...] + (b - mean) * scale
        d = drop_ref[0]                              # (Cout, 1), >= 0
        out_ref[0] = jnp.maximum(z_scr[step] * (scale * d) + shift * d, 0.0
                                 ).astype(out_ref.dtype)


# ---------------------------------------------------------------------------
# Wrapper
# ---------------------------------------------------------------------------
def xmodule2_forward(x_ncdhw, y_ncdhw, params, drop_scale=None, *,
                     tile_s=32768, fuse="auto", out_dtype=jnp.float32):
    n, cin, d, h, w = x_ncdhw.shape
    cout = params["w"].shape[0]
    s = d * h * w
    cap = _vmem_capacity_bytes()

    # channels-on-sublane / spatial-on-lane layout (no transposes, no padding)
    x2 = x_ncdhw.reshape(n, cin, s)
    y2 = y_ncdhw.reshape(n, cin, s)

    # Lane-dense tile, large enough to amortize the ~0.35us/step pipeline cost,
    # clamped so the (double-buffered blocks + temporaries) working set stays
    # comfortably inside scoped VMEM on every generation.
    tile_s = max(128, _round_up(min(tile_s, _round_up(s, 128)), 128))
    rows = 4 * cin + 6 * cout                  # f32 rows of length tile_s live
    max_tile = max(128, ((cap // 3) // (rows * 4)) // 128 * 128)
    tile_s = min(tile_s, max_tile)
    num_t = (s + tile_s - 1) // tile_s
    ragged = (s % tile_s) != 0

    wx = params["w"][:, :cin].astype(jnp.float32)     # (Cout, Cin)
    wy = params["w"][:, cin:].astype(jnp.float32)     # (Cout, Cin)
    b = params["b"].astype(jnp.float32)
    gamma = params["gamma"].astype(jnp.float32)
    beta = params["beta"].astype(jnp.float32)

    # Dropout3d: per-(sample, channel) keep-mask / (1-p); identity in eval mode.
    if drop_scale is None:
        drop = jnp.ones((n, cout), jnp.float32)
    else:
        drop = drop_scale.reshape(n, cout).astype(jnp.float32)

    m_total = float(n * s)
    work_bytes = rows * tile_s * 4
    z_bytes = n * num_t * cout * tile_s * 4
    if fuse == "auto":                     # gate on ~1/3 of this chip's VMEM
        fuse = (z_bytes + work_bytes) <= cap // 3

    if fuse:
        # ---- single pass: conv output resident in VMEM (x,y read once) -----
        xf_spec = pl.BlockSpec((1, cin, tile_s),
                               lambda p, i, t: (i * (1 - p), 0, t * (1 - p)))
        wf_spec = pl.BlockSpec((cout, cin), lambda p, i, t: (0, 0))
        cf_spec = pl.BlockSpec((cout, 1), lambda p, i, t: (0, 0))
        df_spec = pl.BlockSpec((1, cout, 1), lambda p, i, t: (i, 0, 0))
        of_spec = pl.BlockSpec((1, cout, tile_s),
                               lambda p, i, t: (i * p, 0, t * p))
        out = pl.pallas_call(
            functools.partial(_fused_kernel, s_valid=s, tile_s=tile_s,
                              num_t=num_t, m_total=m_total, ragged=ragged),
            out_shape=jax.ShapeDtypeStruct((n, cout, s), out_dtype),
            grid=(2, n, num_t),
            in_specs=[xf_spec, xf_spec, wf_spec, wf_spec,
                      cf_spec, cf_spec, cf_spec, df_spec],
            out_specs=of_spec,
            scratch_shapes=[pltpu.VMEM((n * num_t, cout, tile_s), jnp.float32),
                            pltpu.VMEM((2, cout, 1), jnp.float32)],
            compiler_params=pltpu.CompilerParams(
                dimension_semantics=("arbitrary", "arbitrary", "arbitrary"),
                vmem_limit_bytes=_vmem_limit(z_bytes + work_bytes, cap)),
        )(x2, y2, wx, wy, b.reshape(cout, 1), gamma.reshape(cout, 1),
          beta.reshape(cout, 1), drop.reshape(n, cout, 1))
        return out.reshape(n, cout, d, h, w)

    # ---- two-pass fallback (recompute the cheap K=Cin conv in pass 2) -------
    x_spec = pl.BlockSpec((1, cin, tile_s), lambda i, t: (i, 0, t))
    w_spec = pl.BlockSpec((cout, cin), lambda i, t: (0, 0))
    nc_spec = pl.BlockSpec((1, cout, 1), lambda i, t: (i, 0, 0))

    # pass 1: per-sample BN batch statistics (N axis parallel -> both TCs on v7x)
    stats = pl.pallas_call(
        functools.partial(_stats_kernel, s_valid=s, tile_s=tile_s, ragged=ragged),
        out_shape=jax.ShapeDtypeStruct((n, 2, cout, 1), jnp.float32),
        grid=(n, num_t),
        in_specs=[x_spec, x_spec, w_spec, w_spec],
        out_specs=pl.BlockSpec((1, 2, cout, 1), lambda i, t: (i, 0, 0, 0)),
        compiler_params=pltpu.CompilerParams(
            dimension_semantics=("parallel", "arbitrary"),
            vmem_limit_bytes=_vmem_limit(work_bytes, cap)),
    )(x2, y2, wx, wy)

    # fold the conv bias analytically (the kernel accumulated bias-free sums):
    #   mean = sum0/M + b ;  E[z^2] = (sumsq0 + 2*b*sum0)/M + b^2
    sum0 = stats[:, 0, :, 0].sum(axis=0)
    sumsq0 = stats[:, 1, :, 0].sum(axis=0)
    mean = sum0 / m_total + b
    ex2 = (sumsq0 + 2.0 * b * sum0) / m_total + b * b
    var = jnp.maximum(ex2 - mean * mean, 0.0)          # biased (training) BN
    scale = gamma * jax.lax.rsqrt(var + EPS)
    shift = beta + (b - mean) * scale
    # Dropout3d folded into the per-sample affine (drop >= 0 commutes with relu)
    eff_scale = (scale[None, :] * drop).reshape(n, cout, 1)
    eff_shift = (shift[None, :] * drop).reshape(n, cout, 1)

    # pass 2: conv + fused affine + ReLU (fully parallel, lane-dense stores)
    out = pl.pallas_call(
        _apply_kernel,
        out_shape=jax.ShapeDtypeStruct((n, cout, s), out_dtype),
        grid=(n, num_t),
        in_specs=[x_spec, x_spec, w_spec, w_spec, nc_spec, nc_spec],
        out_specs=pl.BlockSpec((1, cout, tile_s), lambda i, t: (i, 0, t)),
        compiler_params=pltpu.CompilerParams(
            dimension_semantics=("parallel", "parallel"),
            vmem_limit_bytes=_vmem_limit(work_bytes, cap)),
    )(x2, y2, wx, wy, eff_scale, eff_shift)

    return out.reshape(n, cout, d, h, w)


# ---------------------------------------------------------------------------
# Deterministic parameter init (shapes per the module's __init__)
# ---------------------------------------------------------------------------
def init_params(key, cin, cout):
    k1, k2 = jax.random.split(key)
    return dict(
        w=jax.random.normal(k1, (cout, 2 * cin), jnp.float32) * 0.1,  # 1x1x1 conv
        b=jax.random.normal(k2, (cout,), jnp.float32) * 0.1,
        gamma=jnp.ones((cout,), jnp.float32),    # PyTorch BN default init
        beta=jnp.zeros((cout,), jnp.float32),
    )


# ---------------------------------------------------------------------------
# Pure-JAX reference (for a sanity check)
# TODO(synk): BatchNorm3d's running_mean/running_var buffer updates (a training
#             side effect) are not produced by this pure forward pass.
# ---------------------------------------------------------------------------
def _ref_forward(x, y, p, drop_scale):
    n, cin, d, h, w = x.shape
    cout = p["w"].shape[0]
    xc = jnp.concatenate([x, y], axis=1).reshape(n, 2 * cin, -1)      # (N, 2Cin, S)
    z = jnp.einsum("ok,nks->nos", p["w"], xc) + p["b"].reshape(1, cout, 1)
    mu = z.mean(axis=(0, 2), keepdims=True)
    var = ((z - mu) ** 2).mean(axis=(0, 2), keepdims=True)
    zn = (z - mu) * jax.lax.rsqrt(var + EPS)
    zn = zn * p["gamma"].reshape(1, cout, 1) + p["beta"].reshape(1, cout, 1)
    a = jnp.maximum(zn, 0.0) * drop_scale.reshape(n, cout, 1)
    return a.reshape(n, cout, d, h, w)


if __name__ == "__main__":
    key = jax.random.PRNGKey(0)
    kx, ky, kp, kd = jax.random.split(key, 4)

    N, Cin, Cout = 2, 4, 8
    D = H = W = 16
    x = jax.random.normal(kx, (N, Cin, D, H, W), jnp.float32)
    y = jax.random.normal(ky, (N, Cin, D, H, W), jnp.float32)
    params = init_params(kp, Cin, Cout)

    # Dropout3d(p=0.25) channel mask, drawn with JAX RNG (training mode).
    # TODO(synk): PyTorch's RNG stream is not reproducible here; the mask has
    # the same distribution but different draws, so it is shared with the ref.
    keep = jax.random.bernoulli(kd, 0.75, (N, Cout)).astype(jnp.float32)
    drop_scale = keep / 0.75

    ref = _ref_forward(x, y, params, drop_scale)
    for fuse in (True, False):                    # exercise both code paths
        fwd = jax.jit(functools.partial(xmodule2_forward, fuse=fuse))
        out = jax.block_until_ready(fwd(x, y, params, drop_scale))
        assert out.shape == (N, Cout, D, H, W), out.shape
        err = float(jnp.max(jnp.abs(out - ref)))
        assert err < 5e-3, f"fuse={fuse}: max abs error vs reference {err}"

    # Ragged spatial extent (S not a multiple of the lane tile): exercises the
    # clipped edge blocks and the masked-statistics path (no host pad/slice).
    Dr, Hr, Wr = 5, 7, 9
    xr = jax.random.normal(kx, (N, Cin, Dr, Hr, Wr), jnp.float32)
    yr = jax.random.normal(ky, (N, Cin, Dr, Hr, Wr), jnp.float32)
    refr = _ref_forward(xr, yr, params, drop_scale)
    for fuse in (True, False):
        outr = jax.block_until_ready(
            jax.jit(functools.partial(xmodule2_forward, fuse=fuse))(
                xr, yr, params, drop_scale))
        err = float(jnp.max(jnp.abs(outr - refr)))
        assert err < 5e-3, f"ragged fuse={fuse}: max abs error {err}"

    print("KERNEL_OK")
</pallas_src>

<mosaic_0001>
module attributes {stable_mosaic.version = 11 : i64} {
  func.func @_fused_kernel(%arg0: i32, %arg1: i32, %arg2: i32, %arg3: memref<1x4x4096xf32, #tpu.memory_space<vmem>>, %arg4: memref<1x4x4096xf32, #tpu.memory_space<vmem>>, %arg5: memref<8x4xf32, #tpu.memory_space<vmem>>, %arg6: memref<8x4xf32, #tpu.memory_space<vmem>>, %arg7: memref<8x1xf32, #tpu.memory_space<vmem>>, %arg8: memref<8x1xf32, #tpu.memory_space<vmem>>, %arg9: memref<8x1xf32, #tpu.memory_space<vmem>>, %arg10: memref<1x8x1xf32, #tpu.memory_space<vmem>>, %arg11: memref<1x8x4096xf32, #tpu.memory_space<vmem>>, %arg12: memref<2x8x4096xf32, #tpu.memory_space<vmem>>, %arg13: memref<2x8x1xf32, #tpu.memory_space<vmem>>) attributes {dimension_semantics = [#tpu.dimension_semantics<arbitrary>, #tpu.dimension_semantics<arbitrary>, #tpu.dimension_semantics<arbitrary>], iteration_bounds = array<i64: 2, 2, 1>, scalar_prefetch = 0 : i64, scratch_operands = 2 : i64, tpu.core_type = #tpu.core_type<tc>, window_params = [{transform_indices = @transform_0, window_bounds = array<i64: 1, 4, 4096>}, {transform_indices = @transform_1, window_bounds = array<i64: 1, 4, 4096>}, {pipeline_mode = #tpu.pipeline_mode<synchronous>, transform_indices = @transform_2, window_bounds = array<i64: 8, 4>}, {pipeline_mode = #tpu.pipeline_mode<synchronous>, transform_indices = @transform_3, window_bounds = array<i64: 8, 4>}, {pipeline_mode = #tpu.pipeline_mode<synchronous>, transform_indices = @transform_4, window_bounds = array<i64: 8, 1>}, {pipeline_mode = #tpu.pipeline_mode<synchronous>, transform_indices = @transform_5, window_bounds = array<i64: 8, 1>}, {pipeline_mode = #tpu.pipeline_mode<synchronous>, transform_indices = @transform_6, window_bounds = array<i64: 8, 1>}, {transform_indices = @transform_7, window_bounds = array<i64: 1, 8, 1>}, {transform_indices = @transform_8, window_bounds = array<i64: 1, 8, 4096>}]} {
    %c1_i32 = arith.constant 1 : i32
    %0 = arith.muli %arg1, %c1_i32 : i32
    %1 = arith.addi %0, %arg2 : i32
    %c0_i32 = arith.constant 0 : i32
    %2 = arith.cmpi eq, %arg0, %c0_i32 : i32
    %c0_i32_0 = arith.constant 0 : i32
    %3 = arith.cmpi eq, %arg1, %c0_i32_0 : i32
    %4 = arith.andi %2, %3 : i1
    %c0_i32_1 = arith.constant 0 : i32
    %5 = arith.cmpi eq, %arg2, %c0_i32_1 : i32
    %6 = arith.andi %4, %5 : i1
    %7 = arith.extui %6 : i1 to i32
    %c0_i32_2 = arith.constant 0 : i32
    %8 = arith.cmpi ne, %7, %c0_i32_2 : i32
    scf.if %8 {
      %cst = arith.constant 0.000000e+00 : f32
      %15 = vector.broadcast %cst : f32 to vector<2x8x1xf32>
      %c0 = arith.constant 0 : index
      %c0_7 = arith.constant 0 : index
      %c0_8 = arith.constant 0 : index
      %16 = vector.load %arg13[%c0, %c0_7, %c0_8] : memref<2x8x1xf32, #tpu.memory_space<vmem>>, vector<2x8x1xf32>
      tpu.vector_store %arg13[%c0, %c0_7, %c0_8], %15 {strides = array<i32>} : memref<2x8x1xf32, #tpu.memory_space<vmem>>, vector<2x8x1xf32>,
    } else {
    }
    %c0_i32_3 = arith.constant 0 : i32
    %9 = arith.cmpi eq, %arg0, %c0_i32_3 : i32
    %10 = arith.extui %9 : i1 to i32
    %c0_i32_4 = arith.constant 0 : i32
    %11 = arith.cmpi ne, %10, %c0_i32_4 : i32
    scf.if %11 {
      %c0 = arith.constant 0 : index
      %c0_7 = arith.constant 0 : index
      %15 = vector.load %arg5[%c0, %c0_7] : memref<8x4xf32, #tpu.memory_space<vmem>>, vector<8x4xf32>
      %c0_8 = arith.constant 0 : index
      %c0_9 = arith.constant 0 : index
      %c0_10 = arith.constant 0 : index
      %16 = vector.load %arg3[%c0_8, %c0_9, %c0_10] : memref<1x4x4096xf32, #tpu.memory_space<vmem>>, vector<1x4x4096xf32>
      %17 = vector.shape_cast %16 : vector<1x4x4096xf32> to vector<4x4096xf32>
      %cst = arith.constant dense<0.000000e+00> : vector<8x4096xf32>
      %18 = tpu.matmul %15, %17, %cst {dimension_numbers = #tpu.dot_dimension_numbers<[1], [0], [0], [1], [0, 0, 1, 1], [], []>} : vector<8x4xf32>, vector<4x4096xf32>, vector<8x4096xf32> -> vector<8x4096xf32>
      %c0_11 = arith.constant 0 : index
      %c0_12 = arith.constant 0 : index
      %19 = vector.load %arg6[%c0_11, %c0_12] : memref<8x4xf32, #tpu.memory_space<vmem>>, vector<8x4xf32>
      %c0_13 = arith.constant 0 : index
      %c0_14 = arith.constant 0 : index
      %c0_15 = arith.constant 0 : index
      %20 = vector.load %arg4[%c0_13, %c0_14, %c0_15] : memref<1x4x4096xf32, #tpu.memory_space<vmem>>, vector<1x4x4096xf32>
      %21 = vector.shape_cast %20 : vector<1x4x4096xf32> to vector<4x4096xf32>
      %cst_16 = arith.constant dense<0.000000e+00> : vector<8x4096xf32>
      %22 = tpu.matmul %19, %21, %cst_16 {dimension_numbers = #tpu.dot_dimension_numbers<[1], [0], [0], [1], [0, 0, 1, 1], [], []>} : vector<8x4xf32>, vector<4x4096xf32>, vector<8x4096xf32> -> vector<8x4096xf32>
      %23 = arith.addf %18, %22 : vector<8x4096xf32>
      %24 = arith.index_cast %1 : i32 to index
      %c0_17 = arith.constant 0 : index
      %c0_18 = arith.constant 0 : index
      %25 = vector.load %arg12[%24, %c0_17, %c0_18] : memref<2x8x4096xf32, #tpu.memory_space<vmem>>, vector<1x8x4096xf32>
      %26 = vector.shape_cast %25 : vector<1x8x4096xf32> to vector<8x4096xf32>
      %27 = vector.shape_cast %23 : vector<8x4096xf32> to vector<1x8x4096xf32>
      tpu.vector_store %arg12[%24, %c0_17, %c0_18], %27 {strides = array<i32>} : memref<2x8x4096xf32, #tpu.memory_space<vmem>>, vector<1x8x4096xf32>,
      %c0_19 = arith.constant 0 : index
      %c0_20 = arith.constant 0 : index
      %c0_21 = arith.constant 0 : index
      %28 = vector.load %arg13[%c0_19, %c0_20, %c0_21] : memref<2x8x1xf32, #tpu.memory_space<vmem>>, vector<1x8x1xf32>
      %29 = vector.shape_cast %28 : vector<1x8x1xf32> to vector<8x1xf32>
      %cst_22 = arith.constant dense<0.000000e+00> : vector<8xf32>
      %30 = vector.multi_reduction <add>, %23, %cst_22 [1] : vector<8x4096xf32> to vector<8xf32>
      %31 = vector.shape_cast %30 : vector<8xf32> to vector<8x1xf32>
      %32 = arith.addf %29, %31 : vector<8x1xf32>
      %c0_23 = arith.constant 0 : index
      %c0_24 = arith.constant 0 : index
      %c0_25 = arith.constant 0 : index
      %33 = vector.load %arg13[%c0_23, %c0_24, %c0_25] : memref<2x8x1xf32, #tpu.memory_space<vmem>>, vector<1x8x1xf32>
      %34 = vector.shape_cast %33 : vector<1x8x1xf32> to vector<8x1xf32>
      %35 = vector.shape_cast %32 : vector<8x1xf32> to vector<1x8x1xf32>
      tpu.vector_store %arg13[%c0_23, %c0_24, %c0_25], %35 {strides = array<i32>} : memref<2x8x1xf32, #tpu.memory_space<vmem>>, vector<1x8x1xf32>,
      %c1 = arith.constant 1 : index
      %c0_26 = arith.constant 0 : index
      %c0_27 = arith.constant 0 : index
      %36 = vector.load %arg13[%c1, %c0_26, %c0_27] : memref<2x8x1xf32, #tpu.memory_space<vmem>>, vector<1x8x1xf32>
      %37 = vector.shape_cast %36 : vector<1x8x1xf32> to vector<8x1xf32>
      %38 = arith.mulf %23, %23 : vector<8x4096xf32>
      %cst_28 = arith.constant dense<0.000000e+00> : vector<8xf32>
      %39 = vector.multi_reduction <add>, %38, %cst_28 [1] : vector<8x4096xf32> to vector<8xf32>
      %40 = vector.shape_cast %39 : vector<8xf32> to vector<8x1xf32>
      %41 = arith.addf %37, %40 : vector<8x1xf32>
      %c1_29 = arith.constant 1 : index
      %c0_30 = arith.constant 0 : index
      %c0_31 = arith.constant 0 : index
      %42 = vector.load %arg13[%c1_29, %c0_30, %c0_31] : memref<2x8x1xf32, #tpu.memory_space<vmem>>, vector<1x8x1xf32>
      %43 = vector.shape_cast %42 : vector<1x8x1xf32> to vector<8x1xf32>
      %44 = vector.shape_cast %41 : vector<8x1xf32> to vector<1x8x1xf32>
      tpu.vector_store %arg13[%c1_29, %c0_30, %c0_31], %44 {strides = array<i32>} : memref<2x8x1xf32, #tpu.memory_space<vmem>>, vector<1x8x1xf32>,
    } else {
    }
    %c1_i32_5 = arith.constant 1 : i32
    %12 = arith.cmpi eq, %arg0, %c1_i32_5 : i32
    %13 = arith.extui %12 : i1 to i32
    %c0_i32_6 = arith.constant 0 : i32
    %14 = arith.cmpi ne, %13, %c0_i32_6 : i32
    scf.if %14 {
      %c0 = arith.constant 0 : index
      %c0_7 = arith.constant 0 : index
      %15 = vector.load %arg7[%c0, %c0_7] : memref<8x1xf32, #tpu.memory_space<vmem>>, vector<8x1xf32>
      %c0_8 = arith.constant 0 : index
      %c0_9 = arith.constant 0 : index
      %c0_10 = arith.constant 0 : index
      %16 = vector.load %arg13[%c0_8, %c0_9, %c0_10] : memref<2x8x1xf32, #tpu.memory_space<vmem>>, vector<1x8x1xf32>
      %17 = vector.shape_cast %16 : vector<1x8x1xf32> to vector<8x1xf32>
      %c1 = arith.constant 1 : index
      %c0_11 = arith.constant 0 : index
      %c0_12 = arith.constant 0 : index
      %18 = vector.load %arg13[%c1, %c0_11, %c0_12] : memref<2x8x1xf32, #tpu.memory_space<vmem>>, vector<1x8x1xf32>
      %19 = vector.shape_cast %18 : vector<1x8x1xf32> to vector<8x1xf32>
      %cst = arith.constant 8.192000e+03 : f32
      %20 = vector.broadcast %cst : f32 to vector<8x1xf32>
      %21 = arith.divf %17, %20 : vector<8x1xf32>
      %22 = arith.addf %21, %15 : vector<8x1xf32>
      %cst_13 = arith.constant 2.000000e+00 : f32
      %23 = vector.broadcast %cst_13 : f32 to vector<8x1xf32>
      %24 = arith.mulf %23, %15 : vector<8x1xf32>
      %25 = arith.mulf %24, %17 : vector<8x1xf32>
      %26 = arith.addf %19, %25 : vector<8x1xf32>
      %cst_14 = arith.constant 8.192000e+03 : f32
      %27 = vector.broadcast %cst_14 : f32 to vector<8x1xf32>
      %28 = arith.divf %26, %27 : vector<8x1xf32>
      %29 = arith.mulf %15, %15 : vector<8x1xf32>
      %30 = arith.addf %28, %29 : vector<8x1xf32>
      %31 = arith.mulf %22, %22 : vector<8x1xf32>
      %32 = arith.subf %30, %31 : vector<8x1xf32>
      %cst_15 = arith.constant 0.000000e+00 : f32
      %33 = vector.broadcast %cst_15 : f32 to vector<8x1xf32>
      %34 = arith.maximumf %32, %33 : vector<8x1xf32>
      %c0_16 = arith.constant 0 : index
      %c0_17 = arith.constant 0 : index
      %35 = vector.load %arg8[%c0_16, %c0_17] : memref<8x1xf32, #tpu.memory_space<vmem>>, vector<8x1xf32>
      %cst_18 = arith.constant 9.99999974E-6 : f32
      %36 = vector.broadcast %cst_18 : f32 to vector<8x1xf32>
      %37 = arith.addf %34, %36 : vector<8x1xf32>
      %38 = math.rsqrt %37 : vector<8x1xf32>
      %39 = arith.mulf %35, %38 : vector<8x1xf32>
      %c0_19 = arith.constant 0 : index
      %c0_20 = arith.constant 0 : index
      %40 = vector.load %arg9[%c0_19, %c0_20] : memref<8x1xf32, #tpu.memory_space<vmem>>, vector<8x1xf32>
      %41 = arith.subf %15, %22 : vector<8x1xf32>
      %42 = arith.mulf %41, %39 : vector<8x1xf32>
      %43 = arith.addf %40, %42 : vector<8x1xf32>
      %c0_21 = arith.constant 0 : index
      %c0_22 = arith.constant 0 : index
      %c0_23 = arith.constant 0 : index
      %44 = vector.load %arg10[%c0_21, %c0_22, %c0_23] : memref<1x8x1xf32, #tpu.memory_space<vmem>>, vector<1x8x1xf32>
      %45 = vector.shape_cast %44 : vector<1x8x1xf32> to vector<8x1xf32>
      %46 = arith.index_cast %1 : i32 to index
      %c0_24 = arith.constant 0 : index
      %c0_25 = arith.constant 0 : index
      %47 = vector.load %arg12[%46, %c0_24, %c0_25] : memref<2x8x4096xf32, #tpu.memory_space<vmem>>, vector<1x8x4096xf32>
      %48 = vector.shape_cast %47 : vector<1x8x4096xf32> to vector<8x4096xf32>
      %49 = arith.mulf %39, %45 : vector<8x1xf32>
      %50 = vector.broadcast %49 : vector<8x1xf32> to vector<8x4096xf32>
      %51 = arith.mulf %48, %50 : vector<8x4096xf32>
      %52 = arith.mulf %43, %45 : vector<8x1xf32>
      %53 = vector.broadcast %52 : vector<8x1xf32> to vector<8x4096xf32>
      %54 = arith.addf %51, %53 : vector<8x4096xf32>
      %cst_26 = arith.constant 0.000000e+00 : f32
      %55 = vector.broadcast %cst_26 : f32 to vector<8x4096xf32>
      %56 = arith.maximumf %54, %55 : vector<8x4096xf32>
      %c0_27 = arith.constant 0 : index
      %c0_28 = arith.constant 0 : index
      %c0_29 = arith.constant 0 : index
      %57 = vector.load %arg11[%c0_27, %c0_28, %c0_29] : memref<1x8x4096xf32, #tpu.memory_space<vmem>>, vector<1x8x4096xf32>
      %58 = vector.shape_cast %57 : vector<1x8x4096xf32> to vector<8x4096xf32>
      %59 = vector.shape_cast %56 : vector<8x4096xf32> to vector<1x8x4096xf32>
      tpu.vector_store %arg11[%c0_27, %c0_28, %c0_29], %59 {strides = array<i32>} : memref<1x8x4096xf32, #tpu.memory_space<vmem>>, vector<1x8x4096xf32>,
    } else {
    }
    return
  }
  func.func @transform_0(%arg0: i32, %arg1: i32, %arg2: i32) -> (i32, i32, i32) {
    %c1_i32 = arith.constant 1 : i32
    %0 = arith.subi %c1_i32, %arg0 : i32
    %1 = arith.muli %arg1, %0 : i32
    %c1_i32_0 = arith.constant 1 : i32
    %2 = arith.subi %c1_i32_0, %arg0 : i32
    %3 = arith.muli %arg2, %2 : i32
    %c0_i32 = arith.constant 0 : i32
    %c0_i32_1 = arith.constant 0 : i32
    return %1, %c0_i32, %3 : i32, i32, i32
  }
  func.func @transform_1(%arg0: i32, %arg1: i32, %arg2: i32) -> (i32, i32, i32) {
    %c1_i32 = arith.constant 1 : i32
    %0 = arith.subi %c1_i32, %arg0 : i32
    %1 = arith.muli %arg1, %0 : i32
    %c1_i32_0 = arith.constant 1 : i32
    %2 = arith.subi %c1_i32_0, %arg0 : i32
    %3 = arith.muli %arg2, %2 : i32
    %c0_i32 = arith.constant 0 : i32
    %c0_i32_1 = arith.constant 0 : i32
    return %1, %c0_i32, %3 : i32, i32, i32
  }
  func.func @transform_2(%arg0: i32, %arg1: i32, %arg2: i32) -> (i32, i32) {
    %c0_i32 = arith.constant 0 : i32
    %c0_i32_0 = arith.constant 0 : i32
    %c0_i32_1 = arith.constant 0 : i32
    return %c0_i32, %c0_i32_0 : i32, i32
  }
  func.func @transform_3(%arg0: i32, %arg1: i32, %arg2: i32) -> (i32, i32) {
    %c0_i32 = arith.constant 0 : i32
    %c0_i32_0 = arith.constant 0 : i32
    %c0_i32_1 = arith.constant 0 : i32
    return %c0_i32, %c0_i32_0 : i32, i32
  }
  func.func @transform_4(%arg0: i32, %arg1: i32, %arg2: i32) -> (i32, i32) {
    %c0_i32 = arith.constant 0 : i32
    %c0_i32_0 = arith.constant 0 : i32
    %c0_i32_1 = arith.constant 0 : i32
    return %c0_i32, %c0_i32_0 : i32, i32
  }
  func.func @transform_5(%arg0: i32, %arg1: i32, %arg2: i32) -> (i32, i32) {
    %c0_i32 = arith.constant 0 : i32
    %c0_i32_0 = arith.constant 0 : i32
    %c0_i32_1 = arith.constant 0 : i32
    return %c0_i32, %c0_i32_0 : i32, i32
  }
  func.func @transform_6(%arg0: i32, %arg1: i32, %arg2: i32) -> (i32, i32) {
    %c0_i32 = arith.constant 0 : i32
    %c0_i32_0 = arith.constant 0 : i32
    %c0_i32_1 = arith.constant 0 : i32
    return %c0_i32, %c0_i32_0 : i32, i32
  }
  func.func @transform_7(%arg0: i32, %arg1: i32, %arg2: i32) -> (i32, i32, i32) {
    %c0_i32 = arith.constant 0 : i32
    %c0_i32_0 = arith.constant 0 : i32
    %c0_i32_1 = arith.constant 0 : i32
    return %arg1, %c0_i32, %c0_i32_0 : i32, i32, i32
  }
  func.func @transform_8(%arg0: i32, %arg1: i32, %arg2: i32) -> (i32, i32, i32) {
    %0 = arith.muli %arg1, %arg0 : i32
    %1 = arith.muli %arg2, %arg0 : i32
    %c0_i32 = arith.constant 0 : i32
    %c0_i32_0 = arith.constant 0 : i32
    return %0, %c0_i32, %1 : i32, i32, i32
  }
}

</mosaic_0001>

<llo_original>
// kernel: xmodule2_forward.1
$region0: #{xmodule2_forward.1}
  #allocation0 [shape = 'u32[]', space=smem, size = 0x4, offset = 0x4, fixed_abs, tag = 'smem constant byte address 0x4 - core index']
  #allocation1 [shape = 'u32[144,128]{1,0:T(1,128)}', space=vmem, size = 0x12000, scoped, tag = 'internal scratch']
  #allocation2 [shape = 'f32[2,8,4096]{2,1,0:T(8,128)}', space=vmem, size = 0x40000, scoped, tag = 'scratch operand']
  #allocation3 [shape = 'f32[2,8,1]{2,1,0:T(8,128)}', space=vmem, size = 0x2000, scoped, tag = 'scratch operand']
  %s0 = inlined_call_operand.vmem [shape: f32[2,4,4096], index: 0, kind: input, shape index: {}]
  %s1 = inlined_call_operand.vmem [shape: f32[2,4,4096], index: 1, kind: input, shape index: {}]
  %s2 = inlined_call_operand.vmem [shape: f32[8,4], index: 2, kind: input, shape index: {}]
  %s3 = inlined_call_operand.vmem [shape: f32[8,4], index: 3, kind: input, shape index: {}]
  %s4 = inlined_call_operand.vmem [shape: f32[8,1], index: 4, kind: input, shape index: {}]
  %s5 = inlined_call_operand.vmem [shape: f32[8,1], index: 5, kind: input, shape index: {}]
  %s6 = inlined_call_operand.vmem [shape: f32[8,1], index: 6, kind: input, shape index: {}]
  %s7 = inlined_call_operand.vmem [shape: f32[2,8,1], index: 7, kind: input, shape index: {}]
  %s8 = inlined_call_operand.vmem [shape: f32[2,8,4096], index: 8, kind: output, shape index: {}]
  %s9 = sld [smem:[#allocation0]]
  $region77: #{xmodule2_forward.1} parent=0
    _
  %s11 = ssub.s32 1, %s9
  %s12 = scalar_select 0, %s11, %s9
  loop: start=0, step=1, limit=6
  $region2: #{xmodule2_forward.1} parent=0 // loop_pre_header
    _
  $region3: #{xmodule2_forward.1} parent=0 // loop_header
    %s14 = sphi 0, %s18
    %p15 = scmp.ge.s32.totalorder %s14, 6
    %s21 = sphi 0, %s40
    %s22 = sphi 0, %s36
    %s23 = sphi 0, %s32
    %s24 = sphi 0, %s21
    %s25 = sphi 0, %s22
    %s26 = sphi 0, %s23
    %s27 = sphi 0, %s24
    %s28 = sphi 0, %s25
    %s29 = sphi 0, %s26
    %s51 = sphi 0, %s53
    %s54 = sphi 0, %s51
    %s55 = sphi 0, %s54
    %s71 = sphi 0, %s55
    %s85 = sphi 0, %s87
    %s88 = sphi 0, %s85
    %s89 = sphi 0, %s88
    %s105 = sphi 0, %s89
    %s109 = sphi 0, %s109
    %s111 = sphi 0, %s109
    %s112 = sphi 0, %s111
    %s126 = sphi 0, %s112
    %s130 = sphi 0, %s130
    %s132 = sphi 0, %s130
    %s133 = sphi 0, %s132
    %s147 = sphi 0, %s133
    %s151 = sphi 0, %s151
    %s153 = sphi 0, %s151
    %s154 = sphi 0, %s153
    %s168 = sphi 0, %s154
    %s172 = sphi 0, %s172
    %s174 = sphi 0, %s172
    %s175 = sphi 0, %s174
    %s189 = sphi 0, %s175
    %s193 = sphi 0, %s193
    %s195 = sphi 0, %s193
    %s196 = sphi 0, %s195
    %s210 = sphi 0, %s196
    %s216 = sphi 0, %s218
    %s219 = sphi 0, %s216
    %s220 = sphi 0, %s219
    %s236 = sphi 0, %s220
    %s248 = sphi 0, %s250
    %s251 = sphi 0, %s248
    %s252 = sphi 0, %s251
    %s268 = sphi 0, %s252
  $region4: #{xmodule2_forward.1} parent=0 // loop_header_branch
    %17 = sbr.rel (%p15) target = $region8
  $region5: #{xmodule2_forward.1} parent=0 // loop_body
    %s19 = ssub.s32 %s14, 1
    %s20 = ssub.s32 %s14, 2
    %s30 = sadd.s32 1, %s23
    %p31 = scmp.ge.s32.totalorder %s30, 1
    %s32 = scalar_select %p31, 0, %s30
    %s33 = sadd.s32 1, %s22
    %s34 = scalar_select %p31, %s33, %s22
    %p35 = scmp.ge.s32.totalorder %s34, 2
    %s36 = scalar_select %p35, 0, %s34
    %s37 = sadd.s32 1, %s21
    %s38 = scalar_select %p35, %s37, %s21
    %p39 = scmp.ge.s32.totalorder %s38, 2
    %s40 = scalar_select %p39, 0, %s38
    %s41 = ssub.s32 1, %s21
    %s42 = smul.u32 %s22, %s41
    %s43 = smul.u32 %s23, %s41
    %s44 = ssub.s32 1, %s40
    %s45 = smul.u32 %s36, %s44
    %s46 = smul.u32 %s32, %s44
    %s47 = ssub.s32 %s42, %s45
    %s48 = ssub.s32 %s43, %s46
    %s49 = sor.u32 %s47, %s48
    %p50 = scmp.eq.s32.totalorder %s49, 0
    %s52 = sadd.s32 %s51, 1
    %s53 = scalar_select %p50, %s51, %s52
    %p56 = pneg %p50
    %p57 = scmp.eq.s32.totalorder %s14, 3
    %p58 = por %p56, %p57
    %p59 = scmp.ne.s32.totalorder %s51, %s54
    %p60 = scmp.eq.s32.totalorder %s14, 0
    %p61 = por %p59, %p60
    %p62 = scmp.ne.s32.totalorder %s51, %s54
    %p63 = scmp.eq.s32.totalorder %s19, 3
    %p64 = por %p62, %p63
    %p65 = scmp.ne.s32.totalorder %s54, %s55
    %p66 = scmp.eq.s32.totalorder %s19, 0
    %p67 = por %p65, %p66
    %p68 = scmp.ne.s32.totalorder %s54, %s55
    %p69 = scmp.eq.s32.totalorder %s20, 3
    %p70 = por %p68, %p69
    %p72 = scmp.ne.s32.totalorder %s55, %s71
    %p73 = scmp.eq.s32.totalorder %s20, 0
    %p74 = por %p72, %p73
    %s75 = ssub.s32 1, %s21
    %s76 = smul.u32 %s22, %s75
    %s77 = smul.u32 %s23, %s75
    %s78 = ssub.s32 1, %s40
    %s79 = smul.u32 %s36, %s78
    %s80 = smul.u32 %s32, %s78
    %s81 = ssub.s32 %s76, %s79
    %s82 = ssub.s32 %s77, %s80
    %s83 = sor.u32 %s81, %s82
    %p84 = scmp.eq.s32.totalorder %s83, 0
    %s86 = sadd.s32 %s85, 1
    %s87 = scalar_select %p84, %s85, %s86
    %p90 = pneg %p84
    %p91 = scmp.eq.s32.totalorder %s14, 3
    %p92 = por %p90, %p91
    %p93 = scmp.ne.s32.totalorder %s85, %s88
    %p94 = scmp.eq.s32.totalorder %s14, 0
    %p95 = por %p93, %p94
    %p96 = scmp.ne.s32.totalorder %s85, %s88
    %p97 = scmp.eq.s32.totalorder %s19, 3
    %p98 = por %p96, %p97
    %p99 = scmp.ne.s32.totalorder %s88, %s89
    %p100 = scmp.eq.s32.totalorder %s19, 0
    %p101 = por %p99, %p100
    %p102 = scmp.ne.s32.totalorder %s88, %s89
    %p103 = scmp.eq.s32.totalorder %s20, 3
    %p104 = por %p102, %p103
    %p106 = scmp.ne.s32.totalorder %s89, %s105
    %p107 = scmp.eq.s32.totalorder %s20, 0
    %p108 = por %p106, %p107
    %s110 = sadd.s32 %s109, 1
    %p113 = scmp.eq.s32.totalorder %s14, 3
    %p114 = scmp.ne.s32.totalorder %s109, %s111
    %p115 = scmp.eq.s32.totalorder %s14, 0
    %p116 = por %p114, %p115
    %p117 = scmp.ne.s32.totalorder %s109, %s111
    %p118 = scmp.eq.s32.totalorder %s19, 3
    %p119 = por %p117, %p118
    %p120 = scmp.ne.s32.totalorder %s111, %s112
    %p121 = scmp.eq.s32.totalorder %s19, 0
    %p122 = por %p120, %p121
    %p123 = scmp.ne.s32.totalorder %s111, %s112
    %p124 = scmp.eq.s32.totalorder %s20, 3
    %p125 = por %p123, %p124
    %p127 = scmp.ne.s32.totalorder %s112, %s126
    %p128 = scmp.eq.s32.totalorder %s20, 0
    %p129 = por %p127, %p128
    %s131 = sadd.s32 %s130, 1
    %p134 = scmp.eq.s32.totalorder %s14, 3
    %p135 = scmp.ne.s32.totalorder %s130, %s132
    %p136 = scmp.eq.s32.totalorder %s14, 0
    %p137 = por %p135, %p136
    %p138 = scmp.ne.s32.totalorder %s130, %s132
    %p139 = scmp.eq.s32.totalorder %s19, 3
    %p140 = por %p138, %p139
    %p141 = scmp.ne.s32.totalorder %s132, %s133
    %p142 = scmp.eq.s32.totalorder %s19, 0
    %p143 = por %p141, %p142
    %p144 = scmp.ne.s32.totalorder %s132, %s133
    %p145 = scmp.eq.s32.totalorder %s20, 3
    %p146 = por %p144, %p145
    %p148 = scmp.ne.s32.totalorder %s133, %s147
    %p149 = scmp.eq.s32.totalorder %s20, 0
    %p150 = por %p148, %p149
    %s152 = sadd.s32 %s151, 1
    %p155 = scmp.eq.s32.totalorder %s14, 3
    %p156 = scmp.ne.s32.totalorder %s151, %s153
    %p157 = scmp.eq.s32.totalorder %s14, 0
    %p158 = por %p156, %p157
    %p159 = scmp.ne.s32.totalorder %s151, %s153
    %p160 = scmp.eq.s32.totalorder %s19, 3
    %p161 = por %p159, %p160
    %p162 = scmp.ne.s32.totalorder %s153, %s154
    %p163 = scmp.eq.s32.totalorder %s19, 0
    %p164 = por %p162, %p163
    %p165 = scmp.ne.s32.totalorder %s153, %s154
    %p166 = scmp.eq.s32.totalorder %s20, 3
    %p167 = por %p165, %p166
    %p169 = scmp.ne.s32.totalorder %s154, %s168
    %p170 = scmp.eq.s32.totalorder %s20, 0
    %p171 = por %p169, %p170
    %s173 = sadd.s32 %s172, 1
    %p176 = scmp.eq.s32.totalorder %s14, 3
    %p177 = scmp.ne.s32.totalorder %s172, %s174
    %p178 = scmp.eq.s32.totalorder %s14, 0
    %p179 = por %p177, %p178
    %p180 = scmp.ne.s32.totalorder %s172, %s174
    %p181 = scmp.eq.s32.totalorder %s19, 3
    %p182 = por %p180, %p181
    %p183 = scmp.ne.s32.totalorder %s174, %s175
    %p184 = scmp.eq.s32.totalorder %s19, 0
    %p185 = por %p183, %p184
    %p186 = scmp.ne.s32.totalorder %s174, %s175
    %p187 = scmp.eq.s32.totalorder %s20, 3
    %p188 = por %p186, %p187
    %p190 = scmp.ne.s32.totalorder %s175, %s189
    %p191 = scmp.eq.s32.totalorder %s20, 0
    %p192 = por %p190, %p191
    %s194 = sadd.s32 %s193, 1
    %p197 = scmp.eq.s32.totalorder %s14, 3
    %p198 = scmp.ne.s32.totalorder %s193, %s195
    %p199 = scmp.eq.s32.totalorder %s14, 0
    %p200 = por %p198, %p199
    %p201 = scmp.ne.s32.totalorder %s193, %s195
    %p202 = scmp.eq.s32.totalorder %s19, 3
    %p203 = por %p201, %p202
    %p204 = scmp.ne.s32.totalorder %s195, %s196
    %p205 = scmp.eq.s32.totalorder %s19, 0
    %p206 = por %p204, %p205
    %p207 = scmp.ne.s32.totalorder %s195, %s196
    %p208 = scmp.eq.s32.totalorder %s20, 3
    %p209 = por %p207, %p208
    %p211 = scmp.ne.s32.totalorder %s196, %s210
    %p212 = scmp.eq.s32.totalorder %s20, 0
    %p213 = por %p211, %p212
    %s214 = ssub.s32 %s22, %s36
    %p215 = scmp.eq.s32.totalorder %s214, 0
    %s217 = sadd.s32 %s216, 1
    %s218 = scalar_select %p215, %s216, %s217
    %p221 = pneg %p215
    %p222 = scmp.eq.s32.totalorder %s14, 3
    %p223 = por %p221, %p222
    %p224 = scmp.ne.s32.totalorder %s216, %s219
    %p225 = scmp.eq.s32.totalorder %s14, 0
    %p226 = por %p224, %p225
    %p227 = scmp.ne.s32.totalorder %s216, %s219
    %p228 = scmp.eq.s32.totalorder %s19, 3
    %p229 = por %p227, %p228
    %p230 = scmp.ne.s32.totalorder %s219, %s220
    %p231 = scmp.eq.s32.totalorder %s19, 0
    %p232 = por %p230, %p231
    %p233 = scmp.ne.s32.totalorder %s219, %s220
    %p234 = scmp.eq.s32.totalorder %s20, 3
    %p235 = por %p233, %p234
    %p237 = scmp.ne.s32.totalorder %s220, %s236
    %p238 = scmp.eq.s32.totalorder %s20, 0
    %p239 = por %p237, %p238
    %s240 = smul.u32 %s22, %s21
    %s241 = smul.u32 %s23, %s21
    %s242 = smul.u32 %s36, %s40
    %s243 = smul.u32 %s32, %s40
    %s244 = ssub.s32 %s240, %s242
    %s245 = ssub.s32 %s241, %s243
    %s246 = sor.u32 %s244, %s245
    %p247 = scmp.eq.s32.totalorder %s246, 0
    %s249 = sadd.s32 %s248, 1
    %s250 = scalar_select %p247, %s248, %s249
    %p253 = pneg %p247
    %p254 = scmp.eq.s32.totalorder %s14, 3
    %p255 = por %p253, %p254
    %p256 = scmp.ne.s32.totalorder %s248, %s251
    %p257 = scmp.eq.s32.totalorder %s14, 0
    %p258 = por %p256, %p257
    %p259 = scmp.ne.s32.totalorder %s248, %s251
    %p260 = scmp.eq.s32.totalorder %s19, 3
    %p261 = por %p259, %p260
    %p262 = scmp.ne.s32.totalorder %s251, %s252
    %p263 = scmp.eq.s32.totalorder %s19, 0
    %p264 = por %p262, %p263
    %p265 = scmp.ne.s32.totalorder %s251, %s252
    %p266 = scmp.eq.s32.totalorder %s20, 3
    %p267 = por %p265, %p266
    %p269 = scmp.ne.s32.totalorder %s252, %s268
    %p270 = scmp.eq.s32.totalorder %s20, 0
    %p271 = por %p269, %p270
    %p272 = scmp.le.s32.totalorder 1, %s14
    %p273 = scmp.lt.s32.totalorder %s14, 5
    %p274 = pnand %p272, %p273
    %p275 = pneg %p274
    // Predicated region
    $region9: #{xmodule2_forward.1} parent=5 // pred_check
      _
    $region10: #{xmodule2_forward.1} parent=5 // pred_check_branch
      %277 = sbr.rel (%p274) target = $region12
    $region11: #{xmodule2_forward.1} parent=5 // pred_region
      %s278 = ssub.s32 %s14, 1
      // Predicated region
      $region13: #{xmodule2_forward.1} parent=11 // pred_check
        %p279 = pneg %p122
      $region14: #{xmodule2_forward.1} parent=11 // pred_check_branch
        %281 = sbr.rel (%p279) target = $region16
      $region15: #{xmodule2_forward.1} parent=11 // pred_region
        _
      $region16: #{xmodule2_forward.1} parent=11 // pred_fallthru
        _
      // Predicated region
      $region17: #{xmodule2_forward.1} parent=11 // pred_check
        %p282 = pneg %p143
      $region18: #{xmodule2_forward.1} parent=11 // pred_check_branch
        %284 = sbr.rel (%p282) target = $region20
      $region19: #{xmodule2_forward.1} parent=11 // pred_region
        _
      $region20: #{xmodule2_forward.1} parent=11 // pred_fallthru
        _
      // Predicated region
      $region21: #{xmodule2_forward.1} parent=11 // pred_check
        %p285 = pneg %p164
      $region22: #{xmodule2_forward.1} parent=11 // pred_check_branch
        %287 = sbr.rel (%p285) target = $region24
      $region23: #{xmodule2_forward.1} parent=11 // pred_region
        _
      $region24: #{xmodule2_forward.1} parent=11 // pred_fallthru
        _
      // Predicated region
      $region25: #{xmodule2_forward.1} parent=11 // pred_check
        %p288 = pneg %p185
      $region26: #{xmodule2_forward.1} parent=11 // pred_check_branch
        %290 = sbr.rel (%p288) target = $region28
      $region27: #{xmodule2_forward.1} parent=11 // pred_region
        _
      $region28: #{xmodule2_forward.1} parent=11 // pred_fallthru
        _
      // Predicated region
      $region29: #{xmodule2_forward.1} parent=11 // pred_check
        %p291 = pneg %p206
      $region30: #{xmodule2_forward.1} parent=11 // pred_check_branch
        %293 = sbr.rel (%p291) target = $region32
      $region31: #{xmodule2_forward.1} parent=11 // pred_region
        _
      $region32: #{xmodule2_forward.1} parent=11 // pred_fallthru
        _
    $region12: #{xmodule2_forward.1} parent=5 // pred_fallthru
      _
    %p294 = scmp.lt.s32.totalorder %s14, 4
    // Predicated region
    $region33: #{xmodule2_forward.1} parent=5 // pred_check
      %p295 = pneg %p294
    $region34: #{xmodule2_forward.1} parent=5 // pred_check_branch
      %297 = sbr.rel (%p295) target = $region36
    $region35: #{xmodule2_forward.1} parent=5 // pred_region
      // Predicated region
      $region37: #{xmodule2_forward.1} parent=35 // pred_check
        %p298 = pneg %p61
      $region38: #{xmodule2_forward.1} parent=35 // pred_check_branch
        %300 = sbr.rel (%p298) target = $region40
      $region39: #{xmodule2_forward.1} parent=35 // pred_region
        %s301 = ssub.s32 1, %s21
        %s302 = smul.u32 %s22, %s301
        %s303 = smul.u32 %s23, %s301
        %s304 = smul.u32 32, %s303
        %p305 = scmp.lt.s32.totalorder %s302, 1
        %s306 = scalar_select %p305, %s302, 1
        %p307 = scmp.lt.s32.totalorder %s304, 31
        %s308 = scalar_select %p307, %s304, 31
        %s309 = smul.addr %s306, 32
        %s310 = sadd.s32 %s308, %s309
        %s311 = smul.addr %s310, 4
        %s312 = scalar_lea.vmem %s0, %s311
        %s313 = ssub.s32 1, %s21
        %s314 = smul.u32 %s22, %s313
        %s315 = smul.u32 %s23, %s313
        %s316 = smul.u32 32, %s315
      $region40: #{xmodule2_forward.1} parent=35 // pred_fallthru
        _
      // Predicated region
      $region41: #{xmodule2_forward.1} parent=35 // pred_check
        %p317 = pneg %p95
      $region42: #{xmodule2_forward.1} parent=35 // pred_check_branch
        %319 = sbr.rel (%p317) target = $region44
      $region43: #{xmodule2_forward.1} parent=35 // pred_region
        %s320 = ssub.s32 1, %s21
        %s321 = smul.u32 %s22, %s320
        %s322 = smul.u32 %s23, %s320
        %s323 = smul.u32 32, %s322
        %p324 = scmp.lt.s32.totalorder %s321, 1
        %s325 = scalar_select %p324, %s321, 1
        %p326 = scmp.lt.s32.totalorder %s323, 31
        %s327 = scalar_select %p326, %s323, 31
        %s328 = smul.addr %s325, 32
        %s329 = sadd.s32 %s327, %s328
        %s330 = smul.addr %s329, 4
        %s331 = scalar_lea.vmem %s1, %s330
        %s332 = ssub.s32 1, %s21
        %s333 = smul.u32 %s22, %s332
        %s334 = smul.u32 %s23, %s332
        %s335 = smul.u32 32, %s334
      $region44: #{xmodule2_forward.1} parent=35 // pred_fallthru
        _
      // Predicated region
      $region45: #{xmodule2_forward.1} parent=35 // pred_check
        %p336 = pneg %p226
      $region46: #{xmodule2_forward.1} parent=35 // pred_check_branch
        %338 = sbr.rel (%p336) target = $region48
      $region47: #{xmodule2_forward.1} parent=35 // pred_region
        %p339 = scmp.lt.s32.totalorder %s22, 1
        %s340 = scalar_select %p339, %s22, 1
        %s341 = smul.addr %s340, 8
        %s342 = scalar_lea.vmem %s7, %s341
      $region48: #{xmodule2_forward.1} parent=35 // pred_fallthru
        _
    $region36: #{xmodule2_forward.1} parent=5 // pred_fallthru
      _
    %p343 = scmp.le.s32.totalorder 1, %s14
    %p344 = scmp.lt.s32.totalorder %s14, 5
    %p345 = pnand %p343, %p344
    %p346 = pneg %p345
    // Predicated region
    $region49: #{xmodule2_forward.1} parent=5 // pred_check
      _
    $region50: #{xmodule2_forward.1} parent=5 // pred_check_branch
      %348 = sbr.rel (%p345) target = $region52
    $region51: #{xmodule2_forward.1} parent=5 // pred_region
      %s349 = ssub.s32 %s14, 1
      %s350 = ssub.s32 1, %s24
      %s351 = smul.u32 %s25, %s350
      %s352 = smul.u32 %s26, %s350
      %s353 = smul.u32 32, %s352
      %p354 = scmp.lt.s32.totalorder %s351, 1
      %s355 = scalar_select %p354, %s351, 1
      %p356 = scmp.lt.s32.totalorder %s353, 31
      %s357 = scalar_select %p356, %s353, 31
      %s358 = smul.addr %s355, 32
      %s359 = sadd.s32 %s357, %s358
      %s360 = smul.addr %s359, 4
      %s361 = scalar_lea.vmem %s0, %s360
      %p362 = pneg %p67
      %p363 = pneg %p64
      %s364 = ssub.s32 1, %s24
      %s365 = smul.u32 %s25, %s364
      %s366 = smul.u32 %s26, %s364
      %s367 = smul.u32 32, %s366
      %p368 = scmp.lt.s32.totalorder %s365, 1
      %s369 = scalar_select %p368, %s365, 1
      %p370 = scmp.lt.s32.totalorder %s367, 31
      %s371 = scalar_select %p370, %s367, 31
      %s372 = smul.addr %s369, 32
      %s373 = sadd.s32 %s371, %s372
      %s374 = smul.addr %s373, 4
      %s375 = scalar_lea.vmem %s1, %s374
      %p376 = pneg %p101
      %p377 = pneg %p98
      %p378 = pneg %p122
      %p379 = pneg %p119
      %p380 = pneg %p143
      %p381 = pneg %p140
      %p382 = pneg %p164
      %p383 = pneg %p161
      %p384 = pneg %p185
      %p385 = pneg %p182
      %p386 = pneg %p206
      %p387 = pneg %p203
      %p388 = scmp.lt.s32.totalorder %s25, 1
      %s389 = scalar_select %p388, %s25, 1
      %s390 = smul.addr %s389, 8
      %s391 = scalar_lea.vmem %s7, %s390
      %p392 = pneg %p232
      %p393 = pneg %p229
      %p394 = pneg %p264
      %p395 = pneg %p261
      %s396 = smul.u32 %s25, %s24
      %s397 = smul.u32 %s26, %s24
      %s398 = smul.u32 32, %s397
      %p399 = scmp.lt.s32.totalorder %s396, 1
      %s400 = scalar_select %p399, %s396, 1
      %p401 = scmp.lt.s32.totalorder %s398, 31
      %s402 = scalar_select %p401, %s398, 31
      %s403 = smul.addr %s400, 32
      %s404 = sadd.s32 %s402, %s403
      %s405 = smul.addr %s404, 8
      %s406 = scalar_lea.vmem %s8, %s405
      %s407 = ssub.s32 1, %s24
      %s408 = smul.u32 %s25, %s407
      %s409 = smul.u32 %s26, %s407
      %s410 = smul.u32 32, %s409
      %p411 = scmp.lt.s32.totalorder %s408, 1
      %s412 = scalar_select %p411, %s408, 1
      %p413 = scmp.lt.s32.totalorder %s410, 31
      %s414 = scalar_select %p413, %s410, 31
      %s415 = smul.addr %s412, 32
      %s416 = sadd.s32 %s414, %s415
      %s417 = smul.addr %s416, 4
      %s418 = scalar_lea.vmem %s0, %s417
      %s419 = ssub.s32 1, %s24
      %s420 = smul.u32 %s25, %s419
      %s421 = smul.u32 %s26, %s419
      %s422 = smul.u32 32, %s421
      %s423 = ssub.s32 1, %s24
      %s424 = smul.u32 %s25, %s423
      %s425 = smul.u32 %s26, %s423
      %s426 = smul.u32 32, %s425
      %p427 = scmp.lt.s32.totalorder %s424, 1
      %s428 = scalar_select %p427, %s424, 1
      %p429 = scmp.lt.s32.totalorder %s426, 31
      %s430 = scalar_select %p429, %s426, 31
      %s431 = smul.addr %s428, 32
      %s432 = sadd.s32 %s430, %s431
      %s433 = smul.addr %s432, 4
      %s434 = scalar_lea.vmem %s1, %s433
      %s435 = ssub.s32 1, %s24
      %s436 = smul.u32 %s25, %s435
      %s437 = smul.u32 %s26, %s435
      %s438 = smul.u32 32, %s437
      %p439 = scmp.lt.s32.totalorder %s25, 1
      %s440 = scalar_select %p439, %s25, 1
      %s441 = smul.addr %s440, 8
      %s442 = scalar_lea.vmem %s7, %s441
      %s443 = smul.u32 %s25, %s24
      %s444 = smul.u32 %s26, %s24
      %s445 = smul.u32 32, %s444
      %p446 = scmp.lt.s32.totalorder %s443, 1
      %s447 = scalar_select %p446, %s443, 1
      %p448 = scmp.lt.s32.totalorder %s445, 31
      %s449 = scalar_select %p448, %s445, 31
      %s450 = smul.addr %s447, 32
      %s451 = sadd.s32 %s449, %s450
      %s452 = smul.addr %s451, 8
      %s453 = scalar_lea.vmem %s8, %s452
      %s454 = smul.u32 %s25, %s24
      %s455 = smul.u32 %s26, %s24
      %s456 = smul.u32 32, %s455
      %s457 = sadd.s32 %s25, %s26
      %p458 = scmp.eq.s32.totalorder %s24, 0
      %p459 = scmp.eq.s32.totalorder %s25, 0
      %p460 = pnand %p458, %p459
      %p461 = pneg %p460
      %p462 = scmp.eq.s32.totalorder %s26, 0
      %p463 = pnand %p461, %p462
      %p464 = pneg %p463
      // Predicated region
      $region53: #{xmodule2_forward.1} parent=51 // pred_check
        _
      $region54: #{xmodule2_forward.1} parent=51 // pred_check_branch
        %466 = sbr.rel (%p463) target = $region56
      $region55: #{xmodule2_forward.1} parent=51 // pred_region
        %vm467 = vcmask 7168
        %468 = vst.msk [vmem:[#allocation3] sm:$0xff] %vm467, 0.0
        %469 = vst.msk [vmem:[#allocation3 + $0x8] sm:$0xff] %vm467, 0.0
      $region56: #{xmodule2_forward.1} parent=51 // pred_fallthru
        _
      // Predicated region
      $region57: #{xmodule2_forward.1} parent=51 // pred_check
        %p470 = pneg %p458
      $region58: #{xmodule2_forward.1} parent=51 // pred_check_branch
        %472 = sbr.rel (%p470) target = $region60
      $region59: #{xmodule2_forward.1} parent=51 // pred_region
        %v473 = vld [vmem:[%s2] sm:$0xff]
        %v474 = vld [vmem:[%s418] sm:$0xff]
        %v475 = vld [vmem:[%s418 + $0x8] sm:$0xff]
        %v476 = vld [vmem:[%s418 + $0x10] sm:$0xff]
        %v477 = vld [vmem:[%s418 + $0x18] sm:$0xff]
        %v478 = vld [vmem:[%s418 + $0x20] sm:$0xff]
        %v479 = vld [vmem:[%s418 + $0x28] sm:$0xff]
        %v480 = vld [vmem:[%s418 + $0x30] sm:$0xff]
        %v481 = vld [vmem:[%s418 + $0x38] sm:$0xff]
        %v482 = vld [vmem:[%s418 + $0x40] sm:$0xff]
        %v483 = vld [vmem:[%s418 + $0x48] sm:$0xff]
        %v484 = vld [vmem:[%s418 + $0x50] sm:$0xff]
        %v485 = vld [vmem:[%s418 + $0x58] sm:$0xff]
        %v486 = vld [vmem:[%s418 + $0x60] sm:$0xff]
        %v487 = vld [vmem:[%s418 + $0x68] sm:$0xff]
        %v488 = vld [vmem:[%s418 + $0x70] sm:$0xff]
        %v489 = vld [vmem:[%s418 + $0x78] sm:$0xff]
        %v490 = vld [vmem:[%s3] sm:$0xff]
        %v491 = vld [vmem:[%s434] sm:$0xff]
        %v492 = vld [vmem:[%s434 + $0x8] sm:$0xff]
        %v493 = vld [vmem:[%s434 + $0x10] sm:$0xff]
        %v494 = vld [vmem:[%s434 + $0x18] sm:$0xff]
        %v495 = vld [vmem:[%s434 + $0x20] sm:$0xff]
        %v496 = vld [vmem:[%s434 + $0x28] sm:$0xff]
        %v497 = vld [vmem:[%s434 + $0x30] sm:$0xff]
        %v498 = vld [vmem:[%s434 + $0x38] sm:$0xff]
        %v499 = vld [vmem:[%s434 + $0x40] sm:$0xff]
        %v500 = vld [vmem:[%s434 + $0x48] sm:$0xff]
        %v501 = vld [vmem:[%s434 + $0x50] sm:$0xff]
        %v502 = vld [vmem:[%s434 + $0x58] sm:$0xff]
        %v503 = vld [vmem:[%s434 + $0x60] sm:$0xff]
        %v504 = vld [vmem:[%s434 + $0x68] sm:$0xff]
        %v505 = vld [vmem:[%s434 + $0x70] sm:$0xff]
        %v506 = vld [vmem:[%s434 + $0x78] sm:$0xff]
        %v523 = vcombine.high %v491, %v491
        %v524 = vcombine.high %v492, %v492
        %v525 = vcombine.high %v493, %v493
        %v526 = vcombine.high %v494, %v494
        %v527 = vcombine.high %v495, %v495
        %v528 = vcombine.high %v496, %v496
        %v529 = vcombine.high %v497, %v497
        %v530 = vcombine.high %v498, %v498
        %v531 = vcombine.high %v499, %v499
        %v532 = vcombine.high %v500, %v500
        %v533 = vcombine.high %v501, %v501
        %v534 = vcombine.high %v502, %v502
        %v535 = vcombine.high %v503, %v503
        %v536 = vcombine.high %v504, %v504
        %v537 = vcombine.high %v505, %v505
        %v538 = vcombine.high %v506, %v506
        %vm539 = vcmask 31744
        %v541 = vsel %vm539, %v490, 0
        %vm543 = vcmask 1043456
        %v544 = vsel %vm543, %v491, 0
        %v546 = vsel %vm543, %v523, 0
        %v548 = vsel %vm543, %v492, 0
        %v550 = vsel %vm543, %v524, 0
        %v552 = vsel %vm543, %v493, 0
        %v554 = vsel %vm543, %v525, 0
        %v556 = vsel %vm543, %v494, 0
        %v558 = vsel %vm543, %v526, 0
        %v560 = vsel %vm543, %v495, 0
        %v562 = vsel %vm543, %v527, 0
        %v564 = vsel %vm543, %v496, 0
        %v566 = vsel %vm543, %v528, 0
        %v568 = vsel %vm543, %v497, 0
        %v570 = vsel %vm543, %v529, 0
        %v572 = vsel %vm543, %v498, 0
        %v574 = vsel %vm543, %v530, 0
        %v576 = vsel %vm543, %v499, 0
        %v578 = vsel %vm543, %v531, 0
        %v580 = vsel %vm543, %v500, 0
        %v582 = vsel %vm543, %v532, 0
        %v584 = vsel %vm543, %v501, 0
        %v586 = vsel %vm543, %v533, 0
        %v588 = vsel %vm543, %v502, 0
        %v590 = vsel %vm543, %v534, 0
        %v592 = vsel %vm543, %v503, 0
        %v594 = vsel %vm543, %v535, 0
        %v596 = vsel %vm543, %v504, 0
        %v598 = vsel %vm543, %v536, 0
        %v600 = vsel %vm543, %v505, 0
        %v602 = vsel %vm543, %v537, 0
        %v604 = vsel %vm543, %v506, 0
        %v606 = vsel %vm543, %v538, 0
        %608 = vmatprep.subr.mxu0 %v546
        %609 = vmatpush1.msra.mxu0 %v544
        %610 = vmatprep.subr.mxu0 0.0
        %611 = vmatpush1.msra.mxu0 0.0
        %612 = vmatprep.subr.mxu0 0.0
        %613 = vmatpush1.msra.mxu0 0.0
        %614 = vmatprep.subr.mxu0 0.0
        %615 = vmatpush1.msra.mxu0 0.0
        %616 = vmatprep.subr.mxu0 0.0
        %617 = vmatpush1.msra.mxu0 0.0
        %618 = vmatprep.subr.mxu0 0.0
        %619 = vmatpush1.msra.mxu0 0.0
        %620 = vmatprep.subr.mxu0 0.0
        %621 = vmatpush1.msra.mxu0 0.0
        %622 = vmatprep.subr.mxu0 0.0
        %623 = vmatpush1.msra.mxu0 0.0
        %624 = vmatprep.subr.mxu0 0.0
        %625 = vmatpush1.msra.mxu0 0.0
        %626 = vmatprep.subr.mxu0 0.0
        %627 = vmatpush1.msra.mxu0 0.0
        %628 = vmatprep.subr.mxu0 0.0
        %629 = vmatpush1.msra.mxu0 0.0
        %630 = vmatprep.subr.mxu0 0.0
        %631 = vmatpush1.msra.mxu0 0.0
        %632 = vmatprep.subr.mxu0 0.0
        %633 = vmatpush1.msra.mxu0 0.0
        %634 = vmatprep.subr.mxu0 0.0
        %635 = vmatpush1.msra.mxu0 0.0
        %636 = vmatprep.subr.mxu0 0.0
        %637 = vmatpush1.msra.mxu0 0.0
        %638 = vmatprep.subr.mxu0 0.0
        %639 = vmatpush1.msra.mxu0 0.0
        %640 = vmatprep.subr.mxu0 0.0
        %641 = vmatpush1.msra.mxu0 0.0
        %642 = vmatprep.subr.mxu0 0.0
        %643 = vmatpush1.msra.mxu0 0.0
        %644 = vmatprep.subr.mxu0 0.0
        %645 = vmatpush1.msra.mxu0 0.0
        %646 = vmatprep.subr.mxu0 0.0
        %647 = vmatpush1.msra.mxu0 0.0
        %648 = vmatprep.subr.mxu0 0.0
        %649 = vmatpush1.msra.mxu0 0.0
        %650 = vmatprep.subr.mxu0 0.0
        %651 = vmatpush1.msra.mxu0 0.0
        %652 = vmatprep.subr.mxu0 0.0
        %653 = vmatpush1.msra.mxu0 0.0
        %654 = vmatprep.subr.mxu0 0.0
        %655 = vmatpush1.msra.mxu0 0.0
        %656 = vmatprep.subr.mxu0 0.0
        %657 = vmatpush1.msra.mxu0 0.0
        %658 = vmatprep.subr.mxu0 0.0
        %659 = vmatpush1.msra.mxu0 0.0
        %660 = vmatprep.subr.mxu0 0.0
        %661 = vmatpush1.msra.mxu0 0.0
        %662 = vmatprep.subr.mxu0 0.0
        %663 = vmatpush1.msra.mxu0 0.0
        %664 = vmatprep.subr.mxu0 0.0
        %665 = vmatpush1.msra.mxu0 0.0
        %666 = vmatprep.subr.mxu0 0.0
        %667 = vmatpush1.msra.mxu0 0.0
        %668 = vmatprep.subr.mxu0 0.0
        %669 = vmatpush1.msra.mxu0 0.0
        %670 = vmatprep.subr.mxu0 0.0
        %671 = vmatpush1.msra.mxu0 0.0
        %672 = vmatprep.mubr.f32.mxu0 0.0
        %673 = vmatmul.mubr.f32.gmra.mrb[0].mxu0 %v541
        %v674 = vpop.f32.mrb[0].mxu0
        %v675 = vadd.f32 0.0, %v674
        %v676 = vpop.f32.mrb[0].mxu0
        %v677 = vadd.f32 0.0, %v676
        %678 = vdwg.mxu0
        %679 = vmatprep.subr.mxu0 %v550
        %680 = vmatpush1.msra.mxu0 %v548
        %681 = vmatprep.subr.mxu0 0.0
        %682 = vmatpush1.msra.mxu0 0.0
        %683 = vmatprep.subr.mxu0 0.0
        %684 = vmatpush1.msra.mxu0 0.0
        %685 = vmatprep.subr.mxu0 0.0
        %686 = vmatpush1.msra.mxu0 0.0
        %687 = vmatprep.subr.mxu0 0.0
        %688 = vmatpush1.msra.mxu0 0.0
        %689 = vmatprep.subr.mxu0 0.0
        %690 = vmatpush1.msra.mxu0 0.0
        %691 = vmatprep.subr.mxu0 0.0
        %692 = vmatpush1.msra.mxu0 0.0
        %693 = vmatprep.subr.mxu0 0.0
        %694 = vmatpush1.msra.mxu0 0.0
        %695 = vmatprep.subr.mxu0 0.0
        %696 = vmatpush1.msra.mxu0 0.0
        %697 = vmatprep.subr.mxu0 0.0
        %698 = vmatpush1.msra.mxu0 0.0
        %699 = vmatprep.subr.mxu0 0.0
        %700 = vmatpush1.msra.mxu0 0.0
        %701 = vmatprep.subr.mxu0 0.0
        %702 = vmatpush1.msra.mxu0 0.0
        %703 = vmatprep.subr.mxu0 0.0
        %704 = vmatpush1.msra.mxu0 0.0
        %705 = vmatprep.subr.mxu0 0.0
        %706 = vmatpush1.msra.mxu0 0.0
        %707 = vmatprep.subr.mxu0 0.0
        %708 = vmatpush1.msra.mxu0 0.0
        %709 = vmatprep.subr.mxu0 0.0
        %710 = vmatpush1.msra.mxu0 0.0
        %711 = vmatprep.subr.mxu0 0.0
        %712 = vmatpush1.msra.mxu0 0.0
        %713 = vmatprep.subr.mxu0 0.0
        %714 = vmatpush1.msra.mxu0 0.0
        %715 = vmatprep.subr.mxu0 0.0
        %716 = vmatpush1.msra.mxu0 0.0
        %717 = vmatprep.subr.mxu0 0.0
        %718 = vmatpush1.msra.mxu0 0.0
        %719 = vmatprep.subr.mxu0 0.0
        %720 = vmatpush1.msra.mxu0 0.0
        %721 = vmatprep.subr.mxu0 0.0
        %722 = vmatpush1.msra.mxu0 0.0
        %723 = vmatprep.subr.mxu0 0.0
        %724 = vmatpush1.msra.mxu0 0.0
        %725 = vmatprep.subr.mxu0 0.0
        %726 = vmatpush1.msra.mxu0 0.0
        %727 = vmatprep.subr.mxu0 0.0
        %728 = vmatpush1.msra.mxu0 0.0
        %729 = vmatprep.subr.mxu0 0.0
        %730 = vmatpush1.msra.mxu0 0.0
        %731 = vmatprep.subr.mxu0 0.0
        %732 = vmatpush1.msra.mxu0 0.0
        %733 = vmatprep.subr.mxu0 0.0
        %734 = vmatpush1.msra.mxu0 0.0
        %735 = vmatprep.subr.mxu0 0.0
        %736 = vmatpush1.msra.mxu0 0.0
        %737 = vmatprep.subr.mxu0 0.0
        %738 = vmatpush1.msra.mxu0 0.0
        %739 = vmatprep.subr.mxu0 0.0
        %740 = vmatpush1.msra.mxu0 0.0
        %741 = vmatprep.subr.mxu0 0.0
        %742 = vmatpush1.msra.mxu0 0.0
        %743 = vmatprep.mubr.f32.mxu0 0.0
        %744 = vmatmul.mubr.f32.gmra.mrb[0].mxu0 %v541
        %v745 = vpop.f32.mrb[0].mxu0
        %v746 = vadd.f32 0.0, %v745
        %v747 = vpop.f32.mrb[0].mxu0
        %v748 = vadd.f32 0.0, %v747
        %749 = vdwg.mxu0
        %750 = vmatprep.subr.mxu0 %v554
        %751 = vmatpush1.msra.mxu0 %v552
        %752 = vmatprep.subr.mxu0 0.0
        %753 = vmatpush1.msra.mxu0 0.0
        %754 = vmatprep.subr.mxu0 0.0
        %755 = vmatpush1.msra.mxu0 0.0
        %756 = vmatprep.subr.mxu0 0.0
        %757 = vmatpush1.msra.mxu0 0.0
        %758 = vmatprep.subr.mxu0 0.0
        %759 = vmatpush1.msra.mxu0 0.0
        %760 = vmatprep.subr.mxu0 0.0
        %761 = vmatpush1.msra.mxu0 0.0
        %762 = vmatprep.subr.mxu0 0.0
        %763 = vmatpush1.msra.mxu0 0.0
        %764 = vmatprep.subr.mxu0 0.0
        %765 = vmatpush1.msra.mxu0 0.0
        %766 = vmatprep.subr.mxu0 0.0
        %767 = vmatpush1.msra.mxu0 0.0
        %768 = vmatprep.subr.mxu0 0.0
        %769 = vmatpush1.msra.mxu0 0.0
        %770 = vmatprep.subr.mxu0 0.0
        %771 = vmatpush1.msra.mxu0 0.0
        %772 = vmatprep.subr.mxu0 0.0
        %773 = vmatpush1.msra.mxu0 0.0
        %774 = vmatprep.subr.mxu0 0.0
        %775 = vmatpush1.msra.mxu0 0.0
        %776 = vmatprep.subr.mxu0 0.0
        %777 = vmatpush1.msra.mxu0 0.0
        %778 = vmatprep.subr.mxu0 0.0
        %779 = vmatpush1.msra.mxu0 0.0
        %780 = vmatprep.subr.mxu0 0.0
        %781 = vmatpush1.msra.mxu0 0.0
        %782 = vmatprep.subr.mxu0 0.0
        %783 = vmatpush1.msra.mxu0 0.0
        %784 = vmatprep.subr.mxu0 0.0
        %785 = vmatpush1.msra.mxu0 0.0
        %786 = vmatprep.subr.mxu0 0.0
        %787 = vmatpush1.msra.mxu0 0.0
        %788 = vmatprep.subr.mxu0 0.0
        %789 = vmatpush1.msra.mxu0 0.0
        %790 = vmatprep.subr.mxu0 0.0
        %791 = vmatpush1.msra.mxu0 0.0
        %792 = vmatprep.subr.mxu0 0.0
        %793 = vmatpush1.msra.mxu0 0.0
        %794 = vmatprep.subr.mxu0 0.0
        %795 = vmatpush1.msra.mxu0 0.0
        %796 = vmatprep.subr.mxu0 0.0
        %797 = vmatpush1.msra.mxu0 0.0
        %798 = vmatprep.subr.mxu0 0.0
        %799 = vmatpush1.msra.mxu0 0.0
        %800 = vmatprep.subr.mxu0 0.0
        %801 = vmatpush1.msra.mxu0 0.0
        %802 = vmatprep.subr.mxu0 0.0
        %803 = vmatpush1.msra.mxu0 0.0
        %804 = vmatprep.subr.mxu0 0.0
        %805 = vmatpush1.msra.mxu0 0.0
        %806 = vmatprep.subr.mxu0 0.0
        %807 = vmatpush1.msra.mxu0 0.0
        %808 = vmatprep.subr.mxu0 0.0
        %809 = vmatpush1.msra.mxu0 0.0
        %810 = vmatprep.subr.mxu0 0.0
        %811 = vmatpush1.msra.mxu0 0.0
        %812 = vmatprep.subr.mxu0 0.0
        %813 = vmatpush1.msra.mxu0 0.0
        %814 = vmatprep.mubr.f32.mxu0 0.0
        %815 = vmatmul.mubr.f32.gmra.mrb[0].mxu0 %v541
        %v816 = vpop.f32.mrb[0].mxu0
        %v817 = vadd.f32 0.0, %v816
        %v818 = vpop.f32.mrb[0].mxu0
        %v819 = vadd.f32 0.0, %v818
        %820 = vdwg.mxu0
        %821 = vmatprep.subr.mxu0 %v558
        %822 = vmatpush1.msra.mxu0 %v556
        %823 = vmatprep.subr.mxu0 0.0
        %824 = vmatpush1.msra.mxu0 0.0
        %825 = vmatprep.subr.mxu0 0.0
        %826 = vmatpush1.msra.mxu0 0.0
        %827 = vmatprep.subr.mxu0 0.0
        %828 = vmatpush1.msra.mxu0 0.0
        %829 = vmatprep.subr.mxu0 0.0
        %830 = vmatpush1.msra.mxu0 0.0
        %831 = vmatprep.subr.mxu0 0.0
        %832 = vmatpush1.msra.mxu0 0.0
        %833 = vmatprep.subr.mxu0 0.0
        %834 = vmatpush1.msra.mxu0 0.0
        %835 = vmatprep.subr.mxu0 0.0
        %836 = vmatpush1.msra.mxu0 0.0
        %837 = vmatprep.subr.mxu0 0.0
        %838 = vmatpush1.msra.mxu0 0.0
        %839 = vmatprep.subr.mxu0 0.0
        %840 = vmatpush1.msra.mxu0 0.0
        %841 = vmatprep.subr.mxu0 0.0
        %842 = vmatpush1.msra.mxu0 0.0
        %843 = vmatprep.subr.mxu0 0.0
        %844 = vmatpush1.msra.mxu0 0.0
        %845 = vmatprep.subr.mxu0 0.0
        %846 = vmatpush1.msra.mxu0 0.0
        %847 = vmatprep.subr.mxu0 0.0
        %848 = vmatpush1.msra.mxu0 0.0
        %849 = vmatprep.subr.mxu0 0.0
        %850 = vmatpush1.msra.mxu0 0.0
        %851 = vmatprep.subr.mxu0 0.0
        %852 = vmatpush1.msra.mxu0 0.0
        %853 = vmatprep.subr.mxu0 0.0
        %854 = vmatpush1.msra.mxu0 0.0
        %855 = vmatprep.subr.mxu0 0.0
        %856 = vmatpush1.msra.mxu0 0.0
        %857 = vmatprep.subr.mxu0 0.0
        %858 = vmatpush1.msra.mxu0 0.0
        %859 = vmatprep.subr.mxu0 0.0
        %860 = vmatpush1.msra.mxu0 0.0
        %861 = vmatprep.subr.mxu0 0.0
        %862 = vmatpush1.msra.mxu0 0.0
        %863 = vmatprep.subr.mxu0 0.0
        %864 = vmatpush1.msra.mxu0 0.0
        %865 = vmatprep.subr.mxu0 0.0
        %866 = vmatpush1.msra.mxu0 0.0
        %867 = vmatprep.subr.mxu0 0.0
        %868 = vmatpush1.msra.mxu0 0.0
        %869 = vmatprep.subr.mxu0 0.0
        %870 = vmatpush1.msra.mxu0 0.0
        %871 = vmatprep.subr.mxu0 0.0
        %872 = vmatpush1.msra.mxu0 0.0
        %873 = vmatprep.subr.mxu0 0.0
        %874 = vmatpush1.msra.mxu0 0.0
        %875 = vmatprep.subr.mxu0 0.0
        %876 = vmatpush1.msra.mxu0 0.0
        %877 = vmatprep.subr.mxu0 0.0
        %878 = vmatpush1.msra.mxu0 0.0
        %879 = vmatprep.subr.mxu0 0.0
        %880 = vmatpush1.msra.mxu0 0.0
        %881 = vmatprep.subr.mxu0 0.0
        %882 = vmatpush1.msra.mxu0 0.0
        %883 = vmatprep.subr.mxu0 0.0
        %884 = vmatpush1.msra.mxu0 0.0
        %885 = vmatprep.mubr.f32.mxu0 0.0
        %886 = vmatmul.mubr.f32.gmra.mrb[0].mxu0 %v541
        %v887 = vpop.f32.mrb[0].mxu0
        %v888 = vadd.f32 0.0, %v887
        %v889 = vpop.f32.mrb[0].mxu0
        %v890 = vadd.f32 0.0, %v889
        %891 = vdwg.mxu0
        %892 = vmatprep.subr.mxu0 %v562
        %893 = vmatpush1.msra.mxu0 %v560
        %894 = vmatprep.subr.mxu0 0.0
        %895 = vmatpush1.msra.mxu0 0.0
        %896 = vmatprep.subr.mxu0 0.0
        %897 = vmatpush1.msra.mxu0 0.0
        %898 = vmatprep.subr.mxu0 0.0
        %899 = vmatpush1.msra.mxu0 0.0
        %900 = vmatprep.subr.mxu0 0.0
        %901 = vmatpush1.msra.mxu0 0.0
        %902 = vmatprep.subr.mxu0 0.0
        %903 = vmatpush1.msra.mxu0 0.0
        %904 = vmatprep.subr.mxu0 0.0
        %905 = vmatpush1.msra.mxu0 0.0
        %906 = vmatprep.subr.mxu0 0.0
        %907 = vmatpush1.msra.mxu0 0.0
        %908 = vmatprep.subr.mxu0 0.0
        %909 = vmatpush1.msra.mxu0 0.0
        %910 = vmatprep.subr.mxu0 0.0
        %911 = vmatpush1.msra.mxu0 0.0
        %912 = vmatprep.subr.mxu0 0.0
        %913 = vmatpush1.msra.mxu0 0.0
        %914 = vmatprep.subr.mxu0 0.0
        %915 = vmatpush1.msra.mxu0 0.0
        %916 = vmatprep.subr.mxu0 0.0
        %917 = vmatpush1.msra.mxu0 0.0
        %918 = vmatprep.subr.mxu0 0.0
        %919 = vmatpush1.msra.mxu0 0.0
        %920 = vmatprep.subr.mxu0 0.0
        %921 = vmatpush1.msra.mxu0 0.0
        %922 = vmatprep.subr.mxu0 0.0
        %923 = vmatpush1.msra.mxu0 0.0
        %924 = vmatprep.subr.mxu0 0.0
        %925 = vmatpush1.msra.mxu0 0.0
        %926 = vmatprep.subr.mxu0 0.0
        %927 = vmatpush1.msra.mxu0 0.0
        %928 = vmatprep.subr.mxu0 0.0
        %929 = vmatpush1.msra.mxu0 0.0
        %930 = vmatprep.subr.mxu0 0.0
        %931 = vmatpush1.msra.mxu0 0.0
        %932 = vmatprep.subr.mxu0 0.0
        %933 = vmatpush1.msra.mxu0 0.0
        %934 = vmatprep.subr.mxu0 0.0
        %935 = vmatpush1.msra.mxu0 0.0
        %936 = vmatprep.subr.mxu0 0.0
        %937 = vmatpush1.msra.mxu0 0.0
        %938 = vmatprep.subr.mxu0 0.0
        %939 = vmatpush1.msra.mxu0 0.0
        %940 = vmatprep.subr.mxu0 0.0
        %941 = vmatpush1.msra.mxu0 0.0
        %942 = vmatprep.subr.mxu0 0.0
        %943 = vmatpush1.msra.mxu0 0.0
        %944 = vmatprep.subr.mxu0 0.0
        %945 = vmatpush1.msra.mxu0 0.0
        %946 = vmatprep.subr.mxu0 0.0
        %947 = vmatpush1.msra.mxu0 0.0
        %948 = vmatprep.subr.mxu0 0.0
        %949 = vmatpush1.msra.mxu0 0.0
        %950 = vmatprep.subr.mxu0 0.0
        %951 = vmatpush1.msra.mxu0 0.0
        %952 = vmatprep.subr.mxu0 0.0
        %953 = vmatpush1.msra.mxu0 0.0
        %954 = vmatprep.subr.mxu0 0.0
        %955 = vmatpush1.msra.mxu0 0.0
        %956 = vmatprep.mubr.f32.mxu0 0.0
        %957 = vmatmul.mubr.f32.gmra.mrb[0].mxu0 %v541
        %v958 = vpop.f32.mrb[0].mxu0
        %v959 = vadd.f32 0.0, %v958
        %v960 = vpop.f32.mrb[0].mxu0
        %v961 = vadd.f32 0.0, %v960
        %962 = vdwg.mxu0
        %963 = vmatprep.subr.mxu0 %v566
        %964 = vmatpush1.msra.mxu0 %v564
        %965 = vmatprep.subr.mxu0 0.0
        %966 = vmatpush1.msra.mxu0 0.0
        %967 = vmatprep.subr.mxu0 0.0
        %968 = vmatpush1.msra.mxu0 0.0
        %969 = vmatprep.subr.mxu0 0.0
        %970 = vmatpush1.msra.mxu0 0.0
        %971 = vmatprep.subr.mxu0 0.0
        %972 = vmatpush1.msra.mxu0 0.0
        %973 = vmatprep.subr.mxu0 0.0
        %974 = vmatpush1.msra.mxu0 0.0
        %975 = vmatprep.subr.mxu0 0.0
        %976 = vmatpush1.msra.mxu0 0.0
        %977 = vmatprep.subr.mxu0 0.0
        %978 = vmatpush1.msra.mxu0 0.0
        %979 = vmatprep.subr.mxu0 0.0
        %980 = vmatpush1.msra.mxu0 0.0
        %981 = vmatprep.subr.mxu0 0.0
        %982 = vmatpush1.msra.mxu0 0.0
        %983 = vmatprep.subr.mxu0 0.0
        %984 = vmatpush1.msra.mxu0 0.0
        %985 = vmatprep.subr.mxu0 0.0
        %986 = vmatpush1.msra.mxu0 0.0
        %987 = vmatprep.subr.mxu0 0.0
        %988 = vmatpush1.msra.mxu0 0.0
        %989 = vmatprep.subr.mxu0 0.0
        %990 = vmatpush1.msra.mxu0 0.0
        %991 = vmatprep.subr.mxu0 0.0
        %992 = vmatpush1.msra.mxu0 0.0
        %993 = vmatprep.subr.mxu0 0.0
        %994 = vmatpush1.msra.mxu0 0.0
        %995 = vmatprep.subr.mxu0 0.0
        %996 = vmatpush1.msra.mxu0 0.0
        %997 = vmatprep.subr.mxu0 0.0
        %998 = vmatpush1.msra.mxu0 0.0
        %999 = vmatprep.subr.mxu0 0.0
        %1000 = vmatpush1.msra.mxu0 0.0
        %1001 = vmatprep.subr.mxu0 0.0
        %1002 = vmatpush1.msra.mxu0 0.0
        %1003 = vmatprep.subr.mxu0 0.0
        %1004 = vmatpush1.msra.mxu0 0.0
        %1005 = vmatprep.subr.mxu0 0.0
        %1006 = vmatpush1.msra.mxu0 0.0
        %1007 = vmatprep.subr.mxu0 0.0
        %1008 = vmatpush1.msra.mxu0 0.0
        %1009 = vmatprep.subr.mxu0 0.0
        %1010 = vmatpush1.msra.mxu0 0.0
        %1011 = vmatprep.subr.mxu0 0.0
        %1012 = vmatpush1.msra.mxu0 0.0
        %1013 = vmatprep.subr.mxu0 0.0
        %1014 = vmatpush1.msra.mxu0 0.0
        %1015 = vmatprep.subr.mxu0 0.0
        %1016 = vmatpush1.msra.mxu0 0.0
        %1017 = vmatprep.subr.mxu0 0.0
        %1018 = vmatpush1.msra.mxu0 0.0
        %1019 = vmatprep.subr.mxu0 0.0
        %1020 = vmatpush1.msra.mxu0 0.0
        %1021 = vmatprep.subr.mxu0 0.0
        %1022 = vmatpush1.msra.mxu0 0.0
        %1023 = vmatprep.subr.mxu0 0.0
        %1024 = vmatpush1.msra.mxu0 0.0
        %1025 = vmatprep.subr.mxu0 0.0
        %1026 = vmatpush1.msra.mxu0 0.0
        %1027 = vmatprep.mubr.f32.mxu0 0.0
        %1028 = vmatmul.mubr.f32.gmra.mrb[0].mxu0 %v541
        %v1029 = vpop.f32.mrb[0].mxu0
        %v1030 = vadd.f32 0.0, %v1029
        %v1031 = vpop.f32.mrb[0].mxu0
        %v1032 = vadd.f32 0.0, %v1031
        %1033 = vdwg.mxu0
        %1034 = vmatprep.subr.mxu0 %v570
        %1035 = vmatpush1.msra.mxu0 %v568
        %1036 = vmatprep.subr.mxu0 0.0
        %1037 = vmatpush1.msra.mxu0 0.0
        %1038 = vmatprep.subr.mxu0 0.0
        %1039 = vmatpush1.msra.mxu0 0.0
        %1040 = vmatprep.subr.mxu0 0.0
        %1041 = vmatpush1.msra.mxu0 0.0
        %1042 = vmatprep.subr.mxu0 0.0
        %1043 = vmatpush1.msra.mxu0 0.0
        %1044 = vmatprep.subr.mxu0 0.0
        %1045 = vmatpush1.msra.mxu0 0.0
        %1046 = vmatprep.subr.mxu0 0.0
        %1047 = vmatpush1.msra.mxu0 0.0
        %1048 = vmatprep.subr.mxu0 0.0
        %1049 = vmatpush1.msra.mxu0 0.0
        %1050 = vmatprep.subr.mxu0 0.0
        %1051 = vmatpush1.msra.mxu0 0.0
        %1052 = vmatprep.subr.mxu0 0.0
        %1053 = vmatpush1.msra.mxu0 0.0
        %1054 = vmatprep.subr.mxu0 0.0
        %1055 = vmatpush1.msra.mxu0 0.0
        %1056 = vmatprep.subr.mxu0 0.0
        %1057 = vmatpush1.msra.mxu0 0.0
        %1058 = vmatprep.subr.mxu0 0.0
        %1059 = vmatpush1.msra.mxu0 0.0
        %1060 = vmatprep.subr.mxu0 0.0
        %1061 = vmatpush1.msra.mxu0 0.0
        %1062 = vmatprep.subr.mxu0 0.0
        %1063 = vmatpush1.msra.mxu0 0.0
        %1064 = vmatprep.subr.mxu0 0.0
        %1065 = vmatpush1.msra.mxu0 0.0
        %1066 = vmatprep.subr.mxu0 0.0
        %1067 = vmatpush1.msra.mxu0 0.0
        %1068 = vmatprep.subr.mxu0 0.0
        %1069 = vmatpush1.msra.mxu0 0.0
        %1070 = vmatprep.subr.mxu0 0.0
        %1071 = vmatpush1.msra.mxu0 0.0
        %1072 = vmatprep.subr.mxu0 0.0
        %1073 = vmatpush1.msra.mxu0 0.0
        %1074 = vmatprep.subr.mxu0 0.0
        %1075 = vmatpush1.msra.mxu0 0.0
        %1076 = vmatprep.subr.mxu0 0.0
        %1077 = vmatpush1.msra.mxu0 0.0
        %1078 = vmatprep.subr.mxu0 0.0
        %1079 = vmatpush1.msra.mxu0 0.0
        %1080 = vmatprep.subr.mxu0 0.0
        %1081 = vmatpush1.msra.mxu0 0.0
        %1082 = vmatprep.subr.mxu0 0.0
        %1083 = vmatpush1.msra.mxu0 0.0
        %1084 = vmatprep.subr.mxu0 0.0
        %1085 = vmatpush1.msra.mxu0 0.0
        %1086 = vmatprep.subr.mxu0 0.0
        %1087 = vmatpush1.msra.mxu0 0.0
        %1088 = vmatprep.subr.mxu0 0.0
        %1089 = vmatpush1.msra.mxu0 0.0
        %1090 = vmatprep.subr.mxu0 0.0
        %1091 = vmatpush1.msra.mxu0 0.0
        %1092 = vmatprep.subr.mxu0 0.0
        %1093 = vmatpush1.msra.mxu0 0.0
        %1094 = vmatprep.subr.mxu0 0.0
        %1095 = vmatpush1.msra.mxu0 0.0
        %1096 = vmatprep.subr.mxu0 0.0
        %1097 = vmatpush1.msra.mxu0 0.0
        %1098 = vmatprep.mubr.f32.mxu0 0.0
        %1099 = vmatmul.mubr.f32.gmra.mrb[0].mxu0 %v541
        %v1100 = vpop.f32.mrb[0].mxu0
        %v1101 = vadd.f32 0.0, %v1100
        %v1102 = vpop.f32.mrb[0].mxu0
        %v1103 = vadd.f32 0.0, %v1102
        %1104 = vdwg.mxu0
        %1105 = vmatprep.subr.mxu0 %v574
        %1106 = vmatpush1.msra.mxu0 %v572
        %1107 = vmatprep.subr.mxu0 0.0
        %1108 = vmatpush1.msra.mxu0 0.0
        %1109 = vmatprep.subr.mxu0 0.0
        %1110 = vmatpush1.msra.mxu0 0.0
        %1111 = vmatprep.subr.mxu0 0.0
        %1112 = vmatpush1.msra.mxu0 0.0
        %1113 = vmatprep.subr.mxu0 0.0
        %1114 = vmatpush1.msra.mxu0 0.0
        %1115 = vmatprep.subr.mxu0 0.0
        %1116 = vmatpush1.msra.mxu0 0.0
        %1117 = vmatprep.subr.mxu0 0.0
        %1118 = vmatpush1.msra.mxu0 0.0
        %1119 = vmatprep.subr.mxu0 0.0
        %1120 = vmatpush1.msra.mxu0 0.0
        %1121 = vmatprep.subr.mxu0 0.0
        %1122 = vmatpush1.msra.mxu0 0.0
        %1123 = vmatprep.subr.mxu0 0.0
        %1124 = vmatpush1.msra.mxu0 0.0
        %1125 = vmatprep.subr.mxu0 0.0
        %1126 = vmatpush1.msra.mxu0 0.0
        %1127 = vmatprep.subr.mxu0 0.0
        %1128 = vmatpush1.msra.mxu0 0.0
        %1129 = vmatprep.subr.mxu0 0.0
        %1130 = vmatpush1.msra.mxu0 0.0
        %1131 = vmatprep.subr.mxu0 0.0
        %1132 = vmatpush1.msra.mxu0 0.0
        %1133 = vmatprep.subr.mxu0 0.0
        %1134 = vmatpush1.msra.mxu0 0.0
        %1135 = vmatprep.subr.mxu0 0.0
        %1136 = vmatpush1.msra.mxu0 0.0
        %1137 = vmatprep.subr.mxu0 0.0
        %1138 = vmatpush1.msra.mxu0 0.0
        %1139 = vmatprep.subr.mxu0 0.0
        %1140 = vmatpush1.msra.mxu0 0.0
        %1141 = vmatprep.subr.mxu0 0.0
        %1142 = vmatpush1.msra.mxu0 0.0
        %1143 = vmatprep.subr.mxu0 0.0
        %1144 = vmatpush1.msra.mxu0 0.0
        %1145 = vmatprep.subr.mxu0 0.0
        %1146 = vmatpush1.msra.mxu0 0.0
        %1147 = vmatprep.subr.mxu0 0.0
        %1148 = vmatpush1.msra.mxu0 0.0
        %1149 = vmatprep.subr.mxu0 0.0
        %1150 = vmatpush1.msra.mxu0 0.0
        %1151 = vmatprep.subr.mxu0 0.0
        %1152 = vmatpush1.msra.mxu0 0.0
        %1153 = vmatprep.subr.mxu0 0.0
        %1154 = vmatpush1.msra.mxu0 0.0
        %1155 = vmatprep.subr.mxu0 0.0
        %1156 = vmatpush1.msra.mxu0 0.0
        %1157 = vmatprep.subr.mxu0 0.0
        %1158 = vmatpush1.msra.mxu0 0.0
        %1159 = vmatprep.subr.mxu0 0.0
        %1160 = vmatpush1.msra.mxu0 0.0
        %1161 = vmatprep.subr.mxu0 0.0
        %1162 = vmatpush1.msra.mxu0 0.0
        %1163 = vmatprep.subr.mxu0 0.0
        %1164 = vmatpush1.msra.mxu0 0.0
        %1165 = vmatprep.subr.mxu0 0.0
        %1166 = vmatpush1.msra.mxu0 0.0
        %1167 = vmatprep.subr.mxu0 0.0
        %1168 = vmatpush1.msra.mxu0 0.0
        %1169 = vmatprep.mubr.f32.mxu0 0.0
        %1170 = vmatmul.mubr.f32.gmra.mrb[0].mxu0 %v541
        %v1171 = vpop.f32.mrb[0].mxu0
        %v1172 = vadd.f32 0.0, %v1171
        %v1173 = vpop.f32.mrb[0].mxu0
        %v1174 = vadd.f32 0.0, %v1173
        %1175 = vdwg.mxu0
        %1176 = vmatprep.subr.mxu0 %v578
        %1177 = vmatpush1.msra.mxu0 %v576
        %1178 = vmatprep.subr.mxu0 0.0
        %1179 = vmatpush1.msra.mxu0 0.0
        %1180 = vmatprep.subr.mxu0 0.0
        %1181 = vmatpush1.msra.mxu0 0.0
        %1182 = vmatprep.subr.mxu0 0.0
        %1183 = vmatpush1.msra.mxu0 0.0
        %1184 = vmatprep.subr.mxu0 0.0
        %1185 = vmatpush1.msra.mxu0 0.0
        %1186 = vmatprep.subr.mxu0 0.0
        %1187 = vmatpush1.msra.mxu0 0.0
        %1188 = vmatprep.subr.mxu0 0.0
        %1189 = vmatpush1.msra.mxu0 0.0
        %1190 = vmatprep.subr.mxu0 0.0
        %1191 = vmatpush1.msra.mxu0 0.0
        %1192 = vmatprep.subr.mxu0 0.0
        %1193 = vmatpush1.msra.mxu0 0.0
        %1194 = vmatprep.subr.mxu0 0.0
        %1195 = vmatpush1.msra.mxu0 0.0
        %1196 = vmatprep.subr.mxu0 0.0
        %1197 = vmatpush1.msra.mxu0 0.0
        %1198 = vmatprep.subr.mxu0 0.0
        %1199 = vmatpush1.msra.mxu0 0.0
        %1200 = vmatprep.subr.mxu0 0.0
        %1201 = vmatpush1.msra.mxu0 0.0
        %1202 = vmatprep.subr.mxu0 0.0
        %1203 = vmatpush1.msra.mxu0 0.0
        %1204 = vmatprep.subr.mxu0 0.0
        %1205 = vmatpush1.msra.mxu0 0.0
        %1206 = vmatprep.subr.mxu0 0.0
        %1207 = vmatpush1.msra.mxu0 0.0
        %1208 = vmatprep.subr.mxu0 0.0
        %1209 = vmatpush1.msra.mxu0 0.0
        %1210 = vmatprep.subr.mxu0 0.0
        %1211 = vmatpush1.msra.mxu0 0.0
        %1212 = vmatprep.subr.mxu0 0.0
        %1213 = vmatpush1.msra.mxu0 0.0
        %1214 = vmatprep.subr.mxu0 0.0
        %1215 = vmatpush1.msra.mxu0 0.0
        %1216 = vmatprep.subr.mxu0 0.0
        %1217 = vmatpush1.msra.mxu0 0.0
        %1218 = vmatprep.subr.mxu0 0.0
        %1219 = vmatpush1.msra.mxu0 0.0
        %1220 = vmatprep.subr.mxu0 0.0
        %1221 = vmatpush1.msra.mxu0 0.0
        %1222 = vmatprep.subr.mxu0 0.0
        %1223 = vmatpush1.msra.mxu0 0.0
        %1224 = vmatprep.subr.mxu0 0.0
        %1225 = vmatpush1.msra.mxu0 0.0
        %1226 = vmatprep.subr.mxu0 0.0
        %1227 = vmatpush1.msra.mxu0 0.0
        %1228 = vmatprep.subr.mxu0 0.0
        %1229 = vmatpush1.msra.mxu0 0.0
        %1230 = vmatprep.subr.mxu0 0.0
        %1231 = vmatpush1.msra.mxu0 0.0
        %1232 = vmatprep.subr.mxu0 0.0
        %1233 = vmatpush1.msra.mxu0 0.0
        %1234 = vmatprep.subr.mxu0 0.0
        %1235 = vmatpush1.msra.mxu0 0.0
        %1236 = vmatprep.subr.mxu0 0.0
        %1237 = vmatpush1.msra.mxu0 0.0
        %1238 = vmatprep.subr.mxu0 0.0
        %1239 = vmatpush1.msra.mxu0 0.0
        %1240 = vmatprep.mubr.f32.mxu0 0.0
        %1241 = vmatmul.mubr.f32.gmra.mrb[0].mxu0 %v541
        %v1242 = vpop.f32.mrb[0].mxu0
        %v1243 = vadd.f32 0.0, %v1242
        %v1244 = vpop.f32.mrb[0].mxu0
        %v1245 = vadd.f32 0.0, %v1244
        %1246 = vdwg.mxu0
        %1247 = vmatprep.subr.mxu0 %v582
        %1248 = vmatpush1.msra.mxu0 %v580
        %1249 = vmatprep.subr.mxu0 0.0
        %1250 = vmatpush1.msra.mxu0 0.0
        %1251 = vmatprep.subr.mxu0 0.0
        %1252 = vmatpush1.msra.mxu0 0.0
        %1253 = vmatprep.subr.mxu0 0.0
        %1254 = vmatpush1.msra.mxu0 0.0
        %1255 = vmatprep.subr.mxu0 0.0
        %1256 = vmatpush1.msra.mxu0 0.0
        %1257 = vmatprep.subr.mxu0 0.0
        %1258 = vmatpush1.msra.mxu0 0.0
        %1259 = vmatprep.subr.mxu0 0.0
        %1260 = vmatpush1.msra.mxu0 0.0
        %1261 = vmatprep.subr.mxu0 0.0
        %1262 = vmatpush1.msra.mxu0 0.0
        %1263 = vmatprep.subr.mxu0 0.0
        %1264 = vmatpush1.msra.mxu0 0.0
        %1265 = vmatprep.subr.mxu0 0.0
        %1266 = vmatpush1.msra.mxu0 0.0
        %1267 = vmatprep.subr.mxu0 0.0
        %1268 = vmatpush1.msra.mxu0 0.0
        %1269 = vmatprep.subr.mxu0 0.0
        %1270 = vmatpush1.msra.mxu0 0.0
        %1271 = vmatprep.subr.mxu0 0.0
        %1272 = vmatpush1.msra.mxu0 0.0
        %1273 = vmatprep.subr.mxu0 0.0
        %1274 = vmatpush1.msra.mxu0 0.0
        %1275 = vmatprep.subr.mxu0 0.0
        %1276 = vmatpush1.msra.mxu0 0.0
        %1277 = vmatprep.subr.mxu0 0.0
        %1278 = vmatpush1.msra.mxu0 0.0
        %1279 = vmatprep.subr.mxu0 0.0
        %1280 = vmatpush1.msra.mxu0 0.0
        %1281 = vmatprep.subr.mxu0 0.0
        %1282 = vmatpush1.msra.mxu0 0.0
        %1283 = vmatprep.subr.mxu0 0.0
        %1284 = vmatpush1.msra.mxu0 0.0
        %1285 = vmatprep.subr.mxu0 0.0
        %1286 = vmatpush1.msra.mxu0 0.0
        %1287 = vmatprep.subr.mxu0 0.0
        %1288 = vmatpush1.msra.mxu0 0.0
        %1289 = vmatprep.subr.mxu0 0.0
        %1290 = vmatpush1.msra.mxu0 0.0
        %1291 = vmatprep.subr.mxu0 0.0
        %1292 = vmatpush1.msra.mxu0 0.0
        %1293 = vmatprep.subr.mxu0 0.0
        %1294 = vmatpush1.msra.mxu0 0.0
        %1295 = vmatprep.subr.mxu0 0.0
        %1296 = vmatpush1.msra.mxu0 0.0
        %1297 = vmatprep.subr.mxu0 0.0
        %1298 = vmatpush1.msra.mxu0 0.0
        %1299 = vmatprep.subr.mxu0 0.0
        %1300 = vmatpush1.msra.mxu0 0.0
        %1301 = vmatprep.subr.mxu0 0.0
        %1302 = vmatpush1.msra.mxu0 0.0
        %1303 = vmatprep.subr.mxu0 0.0
        %1304 = vmatpush1.msra.mxu0 0.0
        %1305 = vmatprep.subr.mxu0 0.0
        %1306 = vmatpush1.msra.mxu0 0.0
        %1307 = vmatprep.subr.mxu0 0.0
        %1308 = vmatpush1.msra.mxu0 0.0
        %1309 = vmatprep.subr.mxu0 0.0
        %1310 = vmatpush1.msra.mxu0 0.0
        %1311 = vmatprep.mubr.f32.mxu0 0.0
        %1312 = vmatmul.mubr.f32.gmra.mrb[0].mxu0 %v541
        %v1313 = vpop.f32.mrb[0].mxu0
        %v1314 = vadd.f32 0.0, %v1313
        %v1315 = vpop.f32.mrb[0].mxu0
        %v1316 = vadd.f32 0.0, %v1315
        %1317 = vdwg.mxu0
        %1318 = vmatprep.subr.mxu0 %v586
        %1319 = vmatpush1.msra.mxu0 %v584
        %1320 = vmatprep.subr.mxu0 0.0
        %1321 = vmatpush1.msra.mxu0 0.0
        %1322 = vmatprep.subr.mxu0 0.0
        %1323 = vmatpush1.msra.mxu0 0.0
        %1324 = vmatprep.subr.mxu0 0.0
        %1325 = vmatpush1.msra.mxu0 0.0
        %1326 = vmatprep.subr.mxu0 0.0
        %1327 = vmatpush1.msra.mxu0 0.0
        %1328 = vmatprep.subr.mxu0 0.0
        %1329 = vmatpush1.msra.mxu0 0.0
        %1330 = vmatprep.subr.mxu0 0.0
        %1331 = vmatpush1.msra.mxu0 0.0
        %1332 = vmatprep.subr.mxu0 0.0
        %1333 = vmatpush1.msra.mxu0 0.0
        %1334 = vmatprep.subr.mxu0 0.0
        %1335 = vmatpush1.msra.mxu0 0.0
        %1336 = vmatprep.subr.mxu0 0.0
        %1337 = vmatpush1.msra.mxu0 0.0
        %1338 = vmatprep.subr.mxu0 0.0
        %1339 = vmatpush1.msra.mxu0 0.0
        %1340 = vmatprep.subr.mxu0 0.0
        %1341 = vmatpush1.msra.mxu0 0.0
        %1342 = vmatprep.subr.mxu0 0.0
        %1343 = vmatpush1.msra.mxu0 0.0
        %1344 = vmatprep.subr.mxu0 0.0
        %1345 = vmatpush1.msra.mxu0 0.0
        %1346 = vmatprep.subr.mxu0 0.0
        %1347 = vmatpush1.msra.mxu0 0.0
        %1348 = vmatprep.subr.mxu0 0.0
        %1349 = vmatpush1.msra.mxu0 0.0
        %1350 = vmatprep.subr.mxu0 0.0
        %1351 = vmatpush1.msra.mxu0 0.0
        %1352 = vmatprep.subr.mxu0 0.0
        %1353 = vmatpush1.msra.mxu0 0.0
        %1354 = vmatprep.subr.mxu0 0.0
        %1355 = vmatpush1.msra.mxu0 0.0
        %1356 = vmatprep.subr.mxu0 0.0
        %1357 = vmatpush1.msra.mxu0 0.0
        %1358 = vmatprep.subr.mxu0 0.0
        %1359 = vmatpush1.msra.mxu0 0.0
        %1360 = vmatprep.subr.mxu0 0.0
        %1361 = vmatpush1.msra.mxu0 0.0
        %1362 = vmatprep.subr.mxu0 0.0
        %1363 = vmatpush1.msra.mxu0 0.0
        %1364 = vmatprep.subr.mxu0 0.0
        %1365 = vmatpush1.msra.mxu0 0.0
        %1366 = vmatprep.subr.mxu0 0.0
        %1367 = vmatpush1.msra.mxu0 0.0
        %1368 = vmatprep.subr.mxu0 0.0
        %1369 = vmatpush1.msra.mxu0 0.0
        %1370 = vmatprep.subr.mxu0 0.0
        %1371 = vmatpush1.msra.mxu0 0.0
        %1372 = vmatprep.subr.mxu0 0.0
        %1373 = vmatpush1.msra.mxu0 0.0
        %1374 = vmatprep.subr.mxu0 0.0
        %1375 = vmatpush1.msra.mxu0 0.0
        %1376 = vmatprep.subr.mxu0 0.0
        %1377 = vmatpush1.msra.mxu0 0.0
        %1378 = vmatprep.subr.mxu0 0.0
        %1379 = vmatpush1.msra.mxu0 0.0
        %1380 = vmatprep.subr.mxu0 0.0
        %1381 = vmatpush1.msra.mxu0 0.0
        %1382 = vmatprep.mubr.f32.mxu0 0.0
        %1383 = vmatmul.mubr.f32.gmra.mrb[0].mxu0 %v541
        %v1384 = vpop.f32.mrb[0].mxu0
        %v1385 = vadd.f32 0.0, %v1384
        %v1386 = vpop.f32.mrb[0].mxu0
        %v1387 = vadd.f32 0.0, %v1386
        %1388 = vdwg.mxu0
        %1389 = vmatprep.subr.mxu0 %v590
        %1390 = vmatpush1.msra.mxu0 %v588
        %1391 = vmatprep.subr.mxu0 0.0
        %1392 = vmatpush1.msra.mxu0 0.0
        %1393 = vmatprep.subr.mxu0 0.0
        %1394 = vmatpush1.msra.mxu0 0.0
        %1395 = vmatprep.subr.mxu0 0.0
        %1396 = vmatpush1.msra.mxu0 0.0
        %1397 = vmatprep.subr.mxu0 0.0
        %1398 = vmatpush1.msra.mxu0 0.0
        %1399 = vmatprep.subr.mxu0 0.0
        %1400 = vmatpush1.msra.mxu0 0.0
        %1401 = vmatprep.subr.mxu0 0.0
        %1402 = vmatpush1.msra.mxu0 0.0
        %1403 = vmatprep.subr.mxu0 0.0
        %1404 = vmatpush1.msra.mxu0 0.0
        %1405 = vmatprep.subr.mxu0 0.0
        %1406 = vmatpush1.msra.mxu0 0.0
        %1407 = vmatprep.subr.mxu0 0.0
        %1408 = vmatpush1.msra.mxu0 0.0
        %1409 = vmatprep.subr.mxu0 0.0
        %1410 = vmatpush1.msra.mxu0 0.0
        %1411 = vmatprep.subr.mxu0 0.0
        %1412 = vmatpush1.msra.mxu0 0.0
        %1413 = vmatprep.subr.mxu0 0.0
        %1414 = vmatpush1.msra.mxu0 0.0
        %1415 = vmatprep.subr.mxu0 0.0
        %1416 = vmatpush1.msra.mxu0 0.0
        %1417 = vmatprep.subr.mxu0 0.0
        %1418 = vmatpush1.msra.mxu0 0.0
        %1419 = vmatprep.subr.mxu0 0.0
        %1420 = vmatpush1.msra.mxu0 0.0
        %1421 = vmatprep.subr.mxu0 0.0
        %1422 = vmatpush1.msra.mxu0 0.0
        %1423 = vmatprep.subr.mxu0 0.0
        %1424 = vmatpush1.msra.mxu0 0.0
        %1425 = vmatprep.subr.mxu0 0.0
        %1426 = vmatpush1.msra.mxu0 0.0
        %1427 = vmatprep.subr.mxu0 0.0
        %1428 = vmatpush1.msra.mxu0 0.0
        %1429 = vmatprep.subr.mxu0 0.0
        %1430 = vmatpush1.msra.mxu0 0.0
        %1431 = vmatprep.subr.mxu0 0.0
        %1432 = vmatpush1.msra.mxu0 0.0
        %1433 = vmatprep.subr.mxu0 0.0
        %1434 = vmatpush1.msra.mxu0 0.0
        %1435 = vmatprep.subr.mxu0 0.0
        %1436 = vmatpush1.msra.mxu0 0.0
        %1437 = vmatprep.subr.mxu0 0.0
        %1438 = vmatpush1.msra.mxu0 0.0
        %1439 = vmatprep.subr.mxu0 0.0
        %1440 = vmatpush1.msra.mxu0 0.0
        %1441 = vmatprep.subr.mxu0 0.0
        %1442 = vmatpush1.msra.mxu0 0.0
        %1443 = vmatprep.subr.mxu0 0.0
        %1444 = vmatpush1.msra.mxu0 0.0
        %1445 = vmatprep.subr.mxu0 0.0
        %1446 = vmatpush1.msra.mxu0 0.0
        %1447 = vmatprep.subr.mxu0 0.0
        %1448 = vmatpush1.msra.mxu0 0.0
        %1449 = vmatprep.subr.mxu0 0.0
        %1450 = vmatpush1.msra.mxu0 0.0
        %1451 = vmatprep.subr.mxu0 0.0
        %1452 = vmatpush1.msra.mxu0 0.0
        %1453 = vmatprep.mubr.f32.mxu0 0.0
        %1454 = vmatmul.mubr.f32.gmra.mrb[0].mxu0 %v541
        %v1455 = vpop.f32.mrb[0].mxu0
        %v1456 = vadd.f32 0.0, %v1455
        %v1457 = vpop.f32.mrb[0].mxu0
        %v1458 = vadd.f32 0.0, %v1457
        %1459 = vdwg.mxu0
        %1460 = vmatprep.subr.mxu0 %v594
        %1461 = vmatpush1.msra.mxu0 %v592
        %1462 = vmatprep.subr.mxu0 0.0
        %1463 = vmatpush1.msra.mxu0 0.0
        %1464 = vmatprep.subr.mxu0 0.0
        %1465 = vmatpush1.msra.mxu0 0.0
        %1466 = vmatprep.subr.mxu0 0.0
        %1467 = vmatpush1.msra.mxu0 0.0
        %1468 = vmatprep.subr.mxu0 0.0
        %1469 = vmatpush1.msra.mxu0 0.0
        %1470 = vmatprep.subr.mxu0 0.0
        %1471 = vmatpush1.msra.mxu0 0.0
        %1472 = vmatprep.subr.mxu0 0.0
        %1473 = vmatpush1.msra.mxu0 0.0
        %1474 = vmatprep.subr.mxu0 0.0
        %1475 = vmatpush1.msra.mxu0 0.0
        %1476 = vmatprep.subr.mxu0 0.0
        %1477 = vmatpush1.msra.mxu0 0.0
        %1478 = vmatprep.subr.mxu0 0.0
        %1479 = vmatpush1.msra.mxu0 0.0
        %1480 = vmatprep.subr.mxu0 0.0
        %1481 = vmatpush1.msra.mxu0 0.0
        %1482 = vmatprep.subr.mxu0 0.0
        %1483 = vmatpush1.msra.mxu0 0.0
        %1484 = vmatprep.subr.mxu0 0.0
        %1485 = vmatpush1.msra.mxu0 0.0
        %1486 = vmatprep.subr.mxu0 0.0
        %1487 = vmatpush1.msra.mxu0 0.0
        %1488 = vmatprep.subr.mxu0 0.0
        %1489 = vmatpush1.msra.mxu0 0.0
        %1490 = vmatprep.subr.mxu0 0.0
        %1491 = vmatpush1.msra.mxu0 0.0
        %1492 = vmatprep.subr.mxu0 0.0
        %1493 = vmatpush1.msra.mxu0 0.0
        %1494 = vmatprep.subr.mxu0 0.0
        %1495 = vmatpush1.msra.mxu0 0.0
        %1496 = vmatprep.subr.mxu0 0.0
        %1497 = vmatpush1.msra.mxu0 0.0
        %1498 = vmatprep.subr.mxu0 0.0
        %1499 = vmatpush1.msra.mxu0 0.0
        %1500 = vmatprep.subr.mxu0 0.0
        %1501 = vmatpush1.msra.mxu0 0.0
        %1502 = vmatprep.subr.mxu0 0.0
        %1503 = vmatpush1.msra.mxu0 0.0
        %1504 = vmatprep.subr.mxu0 0.0
        %1505 = vmatpush1.msra.mxu0 0.0
        %1506 = vmatprep.subr.mxu0 0.0
        %1507 = vmatpush1.msra.mxu0 0.0
        %1508 = vmatprep.subr.mxu0 0.0
        %1509 = vmatpush1.msra.mxu0 0.0
        %1510 = vmatprep.subr.mxu0 0.0
        %1511 = vmatpush1.msra.mxu0 0.0
        %1512 = vmatprep.subr.mxu0 0.0
        %1513 = vmatpush1.msra.mxu0 0.0
        %1514 = vmatprep.subr.mxu0 0.0
        %1515 = vmatpush1.msra.mxu0 0.0
        %1516 = vmatprep.subr.mxu0 0.0
        %1517 = vmatpush1.msra.mxu0 0.0
        %1518 = vmatprep.subr.mxu0 0.0
        %1519 = vmatpush1.msra.mxu0 0.0
        %1520 = vmatprep.subr.mxu0 0.0
        %1521 = vmatpush1.msra.mxu0 0.0
        %1522 = vmatprep.subr.mxu0 0.0
        %1523 = vmatpush1.msra.mxu0 0.0
        %1524 = vmatprep.mubr.f32.mxu0 0.0
        %1525 = vmatmul.mubr.f32.gmra.mrb[0].mxu0 %v541
        %v1526 = vpop.f32.mrb[0].mxu0
        %v1527 = vadd.f32 0.0, %v1526
        %v1528 = vpop.f32.mrb[0].mxu0
        %v1529 = vadd.f32 0.0, %v1528
        %1530 = vdwg.mxu0
        %1531 = vmatprep.subr.mxu0 %v598
        %1532 = vmatpush1.msra.mxu0 %v596
        %1533 = vmatprep.subr.mxu0 0.0
        %1534 = vmatpush1.msra.mxu0 0.0
        %1535 = vmatprep.subr.mxu0 0.0
        %1536 = vmatpush1.msra.mxu0 0.0
        %1537 = vmatprep.subr.mxu0 0.0
        %1538 = vmatpush1.msra.mxu0 0.0
        %1539 = vmatprep.subr.mxu0 0.0
        %1540 = vmatpush1.msra.mxu0 0.0
        %1541 = vmatprep.subr.mxu0 0.0
        %1542 = vmatpush1.msra.mxu0 0.0
        %1543 = vmatprep.subr.mxu0 0.0
        %1544 = vmatpush1.msra.mxu0 0.0
        %1545 = vmatprep.subr.mxu0 0.0
        %1546 = vmatpush1.msra.mxu0 0.0
        %1547 = vmatprep.subr.mxu0 0.0
        %1548 = vmatpush1.msra.mxu0 0.0
        %1549 = vmatprep.subr.mxu0 0.0
        %1550 = vmatpush1.msra.mxu0 0.0
        %1551 = vmatprep.subr.mxu0 0.0
        %1552 = vmatpush1.msra.mxu0 0.0
        %1553 = vmatprep.subr.mxu0 0.0
        %1554 = vmatpush1.msra.mxu0 0.0
        %1555 = vmatprep.subr.mxu0 0.0
        %1556 = vmatpush1.msra.mxu0 0.0
        %1557 = vmatprep.subr.mxu0 0.0
        %1558 = vmatpush1.msra.mxu0 0.0
        %1559 = vmatprep.subr.mxu0 0.0
        %1560 = vmatpush1.msra.mxu0 0.0
        %1561 = vmatprep.subr.mxu0 0.0
        %1562 = vmatpush1.msra.mxu0 0.0
        %1563 = vmatprep.subr.mxu0 0.0
        %1564 = vmatpush1.msra.mxu0 0.0
        %1565 = vmatprep.subr.mxu0 0.0
        %1566 = vmatpush1.msra.mxu0 0.0
        %1567 = vmatprep.subr.mxu0 0.0
        %1568 = vmatpush1.msra.mxu0 0.0
        %1569 = vmatprep.subr.mxu0 0.0
        %1570 = vmatpush1.msra.mxu0 0.0
        %1571 = vmatprep.subr.mxu0 0.0
        %1572 = vmatpush1.msra.mxu0 0.0
        %1573 = vmatprep.subr.mxu0 0.0
        %1574 = vmatpush1.msra.mxu0 0.0
        %1575 = vmatprep.subr.mxu0 0.0
        %1576 = vmatpush1.msra.mxu0 0.0
        %1577 = vmatprep.subr.mxu0 0.0
        %1578 = vmatpush1.msra.mxu0 0.0
        %1579 = vmatprep.subr.mxu0 0.0
        %1580 = vmatpush1.msra.mxu0 0.0
        %1581 = vmatprep.subr.mxu0 0.0
        %1582 = vmatpush1.msra.mxu0 0.0
        %1583 = vmatprep.subr.mxu0 0.0
        %1584 = vmatpush1.msra.mxu0 0.0
        %1585 = vmatprep.subr.mxu0 0.0
        %1586 = vmatpush1.msra.mxu0 0.0
        %1587 = vmatprep.subr.mxu0 0.0
        %1588 = vmatpush1.msra.mxu0 0.0
        %1589 = vmatprep.subr.mxu0 0.0
        %1590 = vmatpush1.msra.mxu0 0.0
        %1591 = vmatprep.subr.mxu0 0.0
        %1592 = vmatpush1.msra.mxu0 0.0
        %1593 = vmatprep.subr.mxu0 0.0
        %1594 = vmatpush1.msra.mxu0 0.0
        %1595 = vmatprep.mubr.f32.mxu0 0.0
        %1596 = vmatmul.mubr.f32.gmra.mrb[0].mxu0 %v541
        %v1597 = vpop.f32.mrb[0].mxu0
        %v1598 = vadd.f32 0.0, %v1597
        %v1599 = vpop.f32.mrb[0].mxu0
        %v1600 = vadd.f32 0.0, %v1599
        %1601 = vdwg.mxu0
        %1602 = vmatprep.subr.mxu0 %v602
        %1603 = vmatpush1.msra.mxu0 %v600
        %1604 = vmatprep.subr.mxu0 0.0
        %1605 = vmatpush1.msra.mxu0 0.0
        %1606 = vmatprep.subr.mxu0 0.0
        %1607 = vmatpush1.msra.mxu0 0.0
        %1608 = vmatprep.subr.mxu0 0.0
        %1609 = vmatpush1.msra.mxu0 0.0
        %1610 = vmatprep.subr.mxu0 0.0
        %1611 = vmatpush1.msra.mxu0 0.0
        %1612 = vmatprep.subr.mxu0 0.0
        %1613 = vmatpush1.msra.mxu0 0.0
        %1614 = vmatprep.subr.mxu0 0.0
        %1615 = vmatpush1.msra.mxu0 0.0
        %1616 = vmatprep.subr.mxu0 0.0
        %1617 = vmatpush1.msra.mxu0 0.0
        %1618 = vmatprep.subr.mxu0 0.0
        %1619 = vmatpush1.msra.mxu0 0.0
        %1620 = vmatprep.subr.mxu0 0.0
        %1621 = vmatpush1.msra.mxu0 0.0
        %1622 = vmatprep.subr.mxu0 0.0
        %1623 = vmatpush1.msra.mxu0 0.0
        %1624 = vmatprep.subr.mxu0 0.0
        %1625 = vmatpush1.msra.mxu0 0.0
        %1626 = vmatprep.subr.mxu0 0.0
        %1627 = vmatpush1.msra.mxu0 0.0
        %1628 = vmatprep.subr.mxu0 0.0
        %1629 = vmatpush1.msra.mxu0 0.0
        %1630 = vmatprep.subr.mxu0 0.0
        %1631 = vmatpush1.msra.mxu0 0.0
        %1632 = vmatprep.subr.mxu0 0.0
        %1633 = vmatpush1.msra.mxu0 0.0
        %1634 = vmatprep.subr.mxu0 0.0
        %1635 = vmatpush1.msra.mxu0 0.0
        %1636 = vmatprep.subr.mxu0 0.0
        %1637 = vmatpush1.msra.mxu0 0.0
        %1638 = vmatprep.subr.mxu0 0.0
        %1639 = vmatpush1.msra.mxu0 0.0
        %1640 = vmatprep.subr.mxu0 0.0
        %1641 = vmatpush1.msra.mxu0 0.0
        %1642 = vmatprep.subr.mxu0 0.0
        %1643 = vmatpush1.msra.mxu0 0.0
        %1644 = vmatprep.subr.mxu0 0.0
        %1645 = vmatpush1.msra.mxu0 0.0
        %1646 = vmatprep.subr.mxu0 0.0
        %1647 = vmatpush1.msra.mxu0 0.0
        %1648 = vmatprep.subr.mxu0 0.0
        %1649 = vmatpush1.msra.mxu0 0.0
        %1650 = vmatprep.subr.mxu0 0.0
        %1651 = vmatpush1.msra.mxu0 0.0
        %1652 = vmatprep.subr.mxu0 0.0
        %1653 = vmatpush1.msra.mxu0 0.0
        %1654 = vmatprep.subr.mxu0 0.0
        %1655 = vmatpush1.msra.mxu0 0.0
        %1656 = vmatprep.subr.mxu0 0.0
        %1657 = vmatpush1.msra.mxu0 0.0
        %1658 = vmatprep.subr.mxu0 0.0
        %1659 = vmatpush1.msra.mxu0 0.0
        %1660 = vmatprep.subr.mxu0 0.0
        %1661 = vmatpush1.msra.mxu0 0.0
        %1662 = vmatprep.subr.mxu0 0.0
        %1663 = vmatpush1.msra.mxu0 0.0
        %1664 = vmatprep.subr.mxu0 0.0
        %1665 = vmatpush1.msra.mxu0 0.0
        %1666 = vmatprep.mubr.f32.mxu0 0.0
        %1667 = vmatmul.mubr.f32.gmra.mrb[0].mxu0 %v541
        %v1668 = vpop.f32.mrb[0].mxu0
        %v1669 = vadd.f32 0.0, %v1668
        %v1670 = vpop.f32.mrb[0].mxu0
        %v1671 = vadd.f32 0.0, %v1670
        %1672 = vdwg.mxu0
        %1673 = vmatprep.subr.mxu0 %v606
        %1674 = vmatpush1.msra.mxu0 %v604
        %1675 = vmatprep.subr.mxu0 0.0
        %1676 = vmatpush1.msra.mxu0 0.0
        %1677 = vmatprep.subr.mxu0 0.0
        %1678 = vmatpush1.msra.mxu0 0.0
        %1679 = vmatprep.subr.mxu0 0.0
        %1680 = vmatpush1.msra.mxu0 0.0
        %1681 = vmatprep.subr.mxu0 0.0
        %1682 = vmatpush1.msra.mxu0 0.0
        %1683 = vmatprep.subr.mxu0 0.0
        %1684 = vmatpush1.msra.mxu0 0.0
        %1685 = vmatprep.subr.mxu0 0.0
        %1686 = vmatpush1.msra.mxu0 0.0
        %1687 = vmatprep.subr.mxu0 0.0
        %1688 = vmatpush1.msra.mxu0 0.0
        %1689 = vmatprep.subr.mxu0 0.0
        %1690 = vmatpush1.msra.mxu0 0.0
        %1691 = vmatprep.subr.mxu0 0.0
        %1692 = vmatpush1.msra.mxu0 0.0
        %1693 = vmatprep.subr.mxu0 0.0
        %1694 = vmatpush1.msra.mxu0 0.0
        %1695 = vmatprep.subr.mxu0 0.0
        %1696 = vmatpush1.msra.mxu0 0.0
        %1697 = vmatprep.subr.mxu0 0.0
        %1698 = vmatpush1.msra.mxu0 0.0
        %1699 = vmatprep.subr.mxu0 0.0
        %1700 = vmatpush1.msra.mxu0 0.0
        %1701 = vmatprep.subr.mxu0 0.0
        %1702 = vmatpush1.msra.mxu0 0.0
        %1703 = vmatprep.subr.mxu0 0.0
        %1704 = vmatpush1.msra.mxu0 0.0
        %1705 = vmatprep.subr.mxu0 0.0
        %1706 = vmatpush1.msra.mxu0 0.0
        %1707 = vmatprep.subr.mxu0 0.0
        %1708 = vmatpush1.msra.mxu0 0.0
        %1709 = vmatprep.subr.mxu0 0.0
        %1710 = vmatpush1.msra.mxu0 0.0
        %1711 = vmatprep.subr.mxu0 0.0
        %1712 = vmatpush1.msra.mxu0 0.0
        %1713 = vmatprep.subr.mxu0 0.0
        %1714 = vmatpush1.msra.mxu0 0.0
        %1715 = vmatprep.subr.mxu0 0.0
        %1716 = vmatpush1.msra.mxu0 0.0
        %1717 = vmatprep.subr.mxu0 0.0
        %1718 = vmatpush1.msra.mxu0 0.0
        %1719 = vmatprep.subr.mxu0 0.0
        %1720 = vmatpush1.msra.mxu0 0.0
        %1721 = vmatprep.subr.mxu0 0.0
        %1722 = vmatpush1.msra.mxu0 0.0
        %1723 = vmatprep.subr.mxu0 0.0
        %1724 = vmatpush1.msra.mxu0 0.0
        %1725 = vmatprep.subr.mxu0 0.0
        %1726 = vmatpush1.msra.mxu0 0.0
        %1727 = vmatprep.subr.mxu0 0.0
        %1728 = vmatpush1.msra.mxu0 0.0
        %1729 = vmatprep.subr.mxu0 0.0
        %1730 = vmatpush1.msra.mxu0 0.0
        %1731 = vmatprep.subr.mxu0 0.0
        %1732 = vmatpush1.msra.mxu0 0.0
        %1733 = vmatprep.subr.mxu0 0.0
        %1734 = vmatpush1.msra.mxu0 0.0
        %1735 = vmatprep.subr.mxu0 0.0
        %1736 = vmatpush1.msra.mxu0 0.0
        %1737 = vmatprep.mubr.f32.mxu0 0.0
        %1738 = vmatmul.mubr.f32.gmra.mrb[0].mxu0 %v541
        %v1739 = vpop.f32.mrb[0].mxu0
        %v1740 = vadd.f32 0.0, %v1739
        %v1741 = vpop.f32.mrb[0].mxu0
        %v1742 = vadd.f32 0.0, %v1741
        %1743 = vdwg.mxu0
        %v1760 = vcombine.high %v474, %v474
        %v1761 = vcombine.high %v475, %v475
        %v1762 = vcombine.high %v476, %v476
        %v1763 = vcombine.high %v477, %v477
        %v1764 = vcombine.high %v478, %v478
        %v1765 = vcombine.high %v479, %v479
        %v1766 = vcombine.high %v480, %v480
        %v1767 = vcombine.high %v481, %v481
        %v1768 = vcombine.high %v482, %v482
        %v1769 = vcombine.high %v483, %v483
        %v1770 = vcombine.high %v484, %v484
        %v1771 = vcombine.high %v485, %v485
        %v1772 = vcombine.high %v486, %v486
        %v1773 = vcombine.high %v487, %v487
        %v1774 = vcombine.high %v488, %v488
        %v1775 = vcombine.high %v489, %v489
        %v1777 = vsel %vm539, %v473, 0
        %v1779 = vsel %vm543, %v474, 0
        %v1781 = vsel %vm543, %v1760, 0
        %v1783 = vsel %vm543, %v475, 0
        %v1785 = vsel %vm543, %v1761, 0
        %v1787 = vsel %vm543, %v476, 0
        %v1789 = vsel %vm543, %v1762, 0
        %v1791 = vsel %vm543, %v477, 0
        %v1793 = vsel %vm543, %v1763, 0
        %v1795 = vsel %vm543, %v478, 0
        %v1797 = vsel %vm543, %v1764, 0
        %v1799 = vsel %vm543, %v479, 0
        %v1801 = vsel %vm543, %v1765, 0
        %v1803 = vsel %vm543, %v480, 0
        %v1805 = vsel %vm543, %v1766, 0
        %v1807 = vsel %vm543, %v481, 0
        %v1809 = vsel %vm543, %v1767, 0
        %v1811 = vsel %vm543, %v482, 0
        %v1813 = vsel %vm543, %v1768, 0
        %v1815 = vsel %vm543, %v483, 0
        %v1817 = vsel %vm543, %v1769, 0
        %v1819 = vsel %vm543, %v484, 0
        %v1821 = vsel %vm543, %v1770, 0
        %v1823 = vsel %vm543, %v485, 0
        %v1825 = vsel %vm543, %v1771, 0
        %v1827 = vsel %vm543, %v486, 0
        %v1829 = vsel %vm543, %v1772, 0
        %v1831 = vsel %vm543, %v487, 0
        %v1833 = vsel %vm543, %v1773, 0
        %v1835 = vsel %vm543, %v488, 0
        %v1837 = vsel %vm543, %v1774, 0
        %v1839 = vsel %vm543, %v489, 0
        %v1841 = vsel %vm543, %v1775, 0
        %1843 = vmatprep.subr.mxu0 %v1781
        %1844 = vmatpush1.msra.mxu0 %v1779
        %1845 = vmatprep.subr.mxu0 0.0
        %1846 = vmatpush1.msra.mxu0 0.0
        %1847 = vmatprep.subr.mxu0 0.0
        %1848 = vmatpush1.msra.mxu0 0.0
        %1849 = vmatprep.subr.mxu0 0.0
        %1850 = vmatpush1.msra.mxu0 0.0
        %1851 = vmatprep.subr.mxu0 0.0
        %1852 = vmatpush1.msra.mxu0 0.0
        %1853 = vmatprep.subr.mxu0 0.0
        %1854 = vmatpush1.msra.mxu0 0.0
        %1855 = vmatprep.subr.mxu0 0.0
        %1856 = vmatpush1.msra.mxu0 0.0
        %1857 = vmatprep.subr.mxu0 0.0
        %1858 = vmatpush1.msra.mxu0 0.0
        %1859 = vmatprep.subr.mxu0 0.0
        %1860 = vmatpush1.msra.mxu0 0.0
        %1861 = vmatprep.subr.mxu0 0.0
        %1862 = vmatpush1.msra.mxu0 0.0
        %1863 = vmatprep.subr.mxu0 0.0
        %1864 = vmatpush1.msra.mxu0 0.0
        %1865 = vmatprep.subr.mxu0 0.0
        %1866 = vmatpush1.msra.mxu0 0.0
        %1867 = vmatprep.subr.mxu0 0.0
        %1868 = vmatpush1.msra.mxu0 0.0
        %1869 = vmatprep.subr.mxu0 0.0
        %1870 = vmatpush1.msra.mxu0 0.0
        %1871 = vmatprep.subr.mxu0 0.0
        %1872 = vmatpush1.msra.mxu0 0.0
        %1873 = vmatprep.subr.mxu0 0.0
        %1874 = vmatpush1.msra.mxu0 0.0
        %1875 = vmatprep.subr.mxu0 0.0
        %1876 = vmatpush1.msra.mxu0 0.0
        %1877 = vmatprep.subr.mxu0 0.0
        %1878 = vmatpush1.msra.mxu0 0.0
        %1879 = vmatprep.subr.mxu0 0.0
        %1880 = vmatpush1.msra.mxu0 0.0
        %1881 = vmatprep.subr.mxu0 0.0
        %1882 = vmatpush1.msra.mxu0 0.0
        %1883 = vmatprep.subr.mxu0 0.0
        %1884 = vmatpush1.msra.mxu0 0.0
        %1885 = vmatprep.subr.mxu0 0.0
        %1886 = vmatpush1.msra.mxu0 0.0
        %1887 = vmatprep.subr.mxu0 0.0
        %1888 = vmatpush1.msra.mxu0 0.0
        %1889 = vmatprep.subr.mxu0 0.0
        %1890 = vmatpush1.msra.mxu0 0.0
        %1891 = vmatprep.subr.mxu0 0.0
        %1892 = vmatpush1.msra.mxu0 0.0
        %1893 = vmatprep.subr.mxu0 0.0
        %1894 = vmatpush1.msra.mxu0 0.0
        %1895 = vmatprep.subr.mxu0 0.0
        %1896 = vmatpush1.msra.mxu0 0.0
        %1897 = vmatprep.subr.mxu0 0.0
        %1898 = vmatpush1.msra.mxu0 0.0
        %1899 = vmatprep.subr.mxu0 0.0
        %1900 = vmatpush1.msra.mxu0 0.0
        %1901 = vmatprep.subr.mxu0 0.0
        %1902 = vmatpush1.msra.mxu0 0.0
        %1903 = vmatprep.subr.mxu0 0.0
        %1904 = vmatpush1.msra.mxu0 0.0
        %1905 = vmatprep.subr.mxu0 0.0
        %1906 = vmatpush1.msra.mxu0 0.0
        %1907 = vmatprep.mubr.f32.mxu0 0.0
        %1908 = vmatmul.mubr.f32.gmra.mrb[0].mxu0 %v1777
        %v1909 = vpop.f32.mrb[0].mxu0
        %v1910 = vadd.f32 %v675, %v1909
        %v1911 = vpop.f32.mrb[0].mxu0
        %v1912 = vadd.f32 %v677, %v1911
        %1913 = vdwg.mxu0
        %1914 = vmatprep.subr.mxu0 %v1785
        %1915 = vmatpush1.msra.mxu0 %v1783
        %1916 = vmatprep.subr.mxu0 0.0
        %1917 = vmatpush1.msra.mxu0 0.0
        %1918 = vmatprep.subr.mxu0 0.0
        %1919 = vmatpush1.msra.mxu0 0.0
        %1920 = vmatprep.subr.mxu0 0.0
        %1921 = vmatpush1.msra.mxu0 0.0
        %1922 = vmatprep.subr.mxu0 0.0
        %1923 = vmatpush1.msra.mxu0 0.0
        %1924 = vmatprep.subr.mxu0 0.0
        %1925 = vmatpush1.msra.mxu0 0.0
        %1926 = vmatprep.subr.mxu0 0.0
        %1927 = vmatpush1.msra.mxu0 0.0
        %1928 = vmatprep.subr.mxu0 0.0
        %1929 = vmatpush1.msra.mxu0 0.0
        %1930 = vmatprep.subr.mxu0 0.0
        %1931 = vmatpush1.msra.mxu0 0.0
        %1932 = vmatprep.subr.mxu0 0.0
        %1933 = vmatpush1.msra.mxu0 0.0
        %1934 = vmatprep.subr.mxu0 0.0
        %1935 = vmatpush1.msra.mxu0 0.0
        %1936 = vmatprep.subr.mxu0 0.0
        %1937 = vmatpush1.msra.mxu0 0.0
        %1938 = vmatprep.subr.mxu0 0.0
        %1939 = vmatpush1.msra.mxu0 0.0
        %1940 = vmatprep.subr.mxu0 0.0
        %1941 = vmatpush1.msra.mxu0 0.0
        %1942 = vmatprep.subr.mxu0 0.0
        %1943 = vmatpush1.msra.mxu0 0.0
        %1944 = vmatprep.subr.mxu0 0.0
        %1945 = vmatpush1.msra.mxu0 0.0
        %1946 = vmatprep.subr.mxu0 0.0
        %1947 = vmatpush1.msra.mxu0 0.0
        %1948 = vmatprep.subr.mxu0 0.0
        %1949 = vmatpush1.msra.mxu0 0.0
        %1950 = vmatprep.subr.mxu0 0.0
        %1951 = vmatpush1.msra.mxu0 0.0
        %1952 = vmatprep.subr.mxu0 0.0
        %1953 = vmatpush1.msra.mxu0 0.0
        %1954 = vmatprep.subr.mxu0 0.0
        %1955 = vmatpush1.msra.mxu0 0.0
        %1956 = vmatprep.subr.mxu0 0.0
        %1957 = vmatpush1.msra.mxu0 0.0
        %1958 = vmatprep.subr.mxu0 0.0
        %1959 = vmatpush1.msra.mxu0 0.0
        %1960 = vmatprep.subr.mxu0 0.0
        %1961 = vmatpush1.msra.mxu0 0.0
        %1962 = vmatprep.subr.mxu0 0.0
        %1963 = vmatpush1.msra.mxu0 0.0
        %1964 = vmatprep.subr.mxu0 0.0
        %1965 = vmatpush1.msra.mxu0 0.0
        %1966 = vmatprep.subr.mxu0 0.0
        %1967 = vmatpush1.msra.mxu0 0.0
        %1968 = vmatprep.subr.mxu0 0.0
        %1969 = vmatpush1.msra.mxu0 0.0
        %1970 = vmatprep.subr.mxu0 0.0
        %1971 = vmatpush1.msra.mxu0 0.0
        %1972 = vmatprep.subr.mxu0 0.0
        %1973 = vmatpush1.msra.mxu0 0.0
        %1974 = vmatprep.subr.mxu0 0.0
        %1975 = vmatpush1.msra.mxu0 0.0
        %1976 = vmatprep.subr.mxu0 0.0
        %1977 = vmatpush1.msra.mxu0 0.0
        %1978 = vmatprep.mubr.f32.mxu0 0.0
        %1979 = vmatmul.mubr.f32.gmra.mrb[0].mxu0 %v1777
        %v1980 = vpop.f32.mrb[0].mxu0
        %v1981 = vadd.f32 %v746, %v1980
        %v1982 = vpop.f32.mrb[0].mxu0
        %v1983 = vadd.f32 %v748, %v1982
        %1984 = vdwg.mxu0
        %1985 = vmatprep.subr.mxu0 %v1789
        %1986 = vmatpush1.msra.mxu0 %v1787
        %1987 = vmatprep.subr.mxu0 0.0
        %1988 = vmatpush1.msra.mxu0 0.0
        %1989 = vmatprep.subr.mxu0 0.0
        %1990 = vmatpush1.msra.mxu0 0.0
        %1991 = vmatprep.subr.mxu0 0.0
        %1992 = vmatpush1.msra.mxu0 0.0
        %1993 = vmatprep.subr.mxu0 0.0
        %1994 = vmatpush1.msra.mxu0 0.0
        %1995 = vmatprep.subr.mxu0 0.0
        %1996 = vmatpush1.msra.mxu0 0.0
        %1997 = vmatprep.subr.mxu0 0.0
        %1998 = vmatpush1.msra.mxu0 0.0
        %1999 = vmatprep.subr.mxu0 0.0
        %2000 = vmatpush1.msra.mxu0 0.0
        %2001 = vmatprep.subr.mxu0 0.0
        %2002 = vmatpush1.msra.mxu0 0.0
        %2003 = vmatprep.subr.mxu0 0.0
        %2004 = vmatpush1.msra.mxu0 0.0
        %2005 = vmatprep.subr.mxu0 0.0
        %2006 = vmatpush1.msra.mxu0 0.0
        %2007 = vmatprep.subr.mxu0 0.0
        %2008 = vmatpush1.msra.mxu0 0.0
        %2009 = vmatprep.subr.mxu0 0.0
        %2010 = vmatpush1.msra.mxu0 0.0
        %2011 = vmatprep.subr.mxu0 0.0
        %2012 = vmatpush1.msra.mxu0 0.0
        %2013 = vmatprep.subr.mxu0 0.0
        %2014 = vmatpush1.msra.mxu0 0.0
        %2015 = vmatprep.subr.mxu0 0.0
        %2016 = vmatpush1.msra.mxu0 0.0
        %2017 = vmatprep.subr.mxu0 0.0
        %2018 = vmatpush1.msra.mxu0 0.0
        %2019 = vmatprep.subr.mxu0 0.0
        %2020 = vmatpush1.msra.mxu0 0.0
        %2021 = vmatprep.subr.mxu0 0.0
        %2022 = vmatpush1.msra.mxu0 0.0
        %2023 = vmatprep.subr.mxu0 0.0
        %2024 = vmatpush1.msra.mxu0 0.0
        %2025 = vmatprep.subr.mxu0 0.0
        %2026 = vmatpush1.msra.mxu0 0.0
        %2027 = vmatprep.subr.mxu0 0.0
        %2028 = vmatpush1.msra.mxu0 0.0
        %2029 = vmatprep.subr.mxu0 0.0
        %2030 = vmatpush1.msra.mxu0 0.0
        %2031 = vmatprep.subr.mxu0 0.0
        %2032 = vmatpush1.msra.mxu0 0.0
        %2033 = vmatprep.subr.mxu0 0.0
        %2034 = vmatpush1.msra.mxu0 0.0
        %2035 = vmatprep.subr.mxu0 0.0
        %2036 = vmatpush1.msra.mxu0 0.0
        %2037 = vmatprep.subr.mxu0 0.0
        %2038 = vmatpush1.msra.mxu0 0.0
        %2039 = vmatprep.subr.mxu0 0.0
        %2040 = vmatpush1.msra.mxu0 0.0
        %2041 = vmatprep.subr.mxu0 0.0
        %2042 = vmatpush1.msra.mxu0 0.0
        %2043 = vmatprep.subr.mxu0 0.0
        %2044 = vmatpush1.msra.mxu0 0.0
        %2045 = vmatprep.subr.mxu0 0.0
        %2046 = vmatpush1.msra.mxu0 0.0
        %2047 = vmatprep.subr.mxu0 0.0
        %2048 = vmatpush1.msra.mxu0 0.0
        %2049 = vmatprep.mubr.f32.mxu0 0.0
        %2050 = vmatmul.mubr.f32.gmra.mrb[0].mxu0 %v1777
        %v2051 = vpop.f32.mrb[0].mxu0
        %v2052 = vadd.f32 %v817, %v2051
        %v2053 = vpop.f32.mrb[0].mxu0
        %v2054 = vadd.f32 %v819, %v2053
        %2055 = vdwg.mxu0
        %2056 = vmatprep.subr.mxu0 %v1793
        %2057 = vmatpush1.msra.mxu0 %v1791
        %2058 = vmatprep.subr.mxu0 0.0
        %2059 = vmatpush1.msra.mxu0 0.0
        %2060 = vmatprep.subr.mxu0 0.0
        %2061 = vmatpush1.msra.mxu0 0.0
        %2062 = vmatprep.subr.mxu0 0.0
        %2063 = vmatpush1.msra.mxu0 0.0
        %2064 = vmatprep.subr.mxu0 0.0
        %2065 = vmatpush1.msra.mxu0 0.0
        %2066 = vmatprep.subr.mxu0 0.0
        %2067 = vmatpush1.msra.mxu0 0.0
        %2068 = vmatprep.subr.mxu0 0.0
        %2069 = vmatpush1.msra.mxu0 0.0
        %2070 = vmatprep.subr.mxu0 0.0
        %2071 = vmatpush1.msra.mxu0 0.0
        %2072 = vmatprep.subr.mxu0 0.0
        %2073 = vmatpush1.msra.mxu0 0.0
        %2074 = vmatprep.subr.mxu0 0.0
        %2075 = vmatpush1.msra.mxu0 0.0
        %2076 = vmatprep.subr.mxu0 0.0
        %2077 = vmatpush1.msra.mxu0 0.0
        %2078 = vmatprep.subr.mxu0 0.0
        %2079 = vmatpush1.msra.mxu0 0.0
        %2080 = vmatprep.subr.mxu0 0.0
        %2081 = vmatpush1.msra.mxu0 0.0
        %2082 = vmatprep.subr.mxu0 0.0
        %2083 = vmatpush1.msra.mxu0 0.0
        %2084 = vmatprep.subr.mxu0 0.0
        %2085 = vmatpush1.msra.mxu0 0.0
        %2086 = vmatprep.subr.mxu0 0.0
        %2087 = vmatpush1.msra.mxu0 0.0
        %2088 = vmatprep.subr.mxu0 0.0
        %2089 = vmatpush1.msra.mxu0 0.0
        %2090 = vmatprep.subr.mxu0 0.0
        %2091 = vmatpush1.msra.mxu0 0.0
        %2092 = vmatprep.subr.mxu0 0.0
        %2093 = vmatpush1.msra.mxu0 0.0
        %2094 = vmatprep.subr.mxu0 0.0
        %2095 = vmatpush1.msra.mxu0 0.0
        %2096 = vmatprep.subr.mxu0 0.0
        %2097 = vmatpush1.msra.mxu0 0.0
        %2098 = vmatprep.subr.mxu0 0.0
        %2099 = vmatpush1.msra.mxu0 0.0
        %2100 = vmatprep.subr.mxu0 0.0
        %2101 = vmatpush1.msra.mxu0 0.0
        %2102 = vmatprep.subr.mxu0 0.0
        %2103 = vmatpush1.msra.mxu0 0.0
        %2104 = vmatprep.subr.mxu0 0.0
        %2105 = vmatpush1.msra.mxu0 0.0
        %2106 = vmatprep.subr.mxu0 0.0
        %2107 = vmatpush1.msra.mxu0 0.0
        %2108 = vmatprep.subr.mxu0 0.0
        %2109 = vmatpush1.msra.mxu0 0.0
        %2110 = vmatprep.subr.mxu0 0.0
        %2111 = vmatpush1.msra.mxu0 0.0
        %2112 = vmatprep.subr.mxu0 0.0
        %2113 = vmatpush1.msra.mxu0 0.0
        %2114 = vmatprep.subr.mxu0 0.0
        %2115 = vmatpush1.msra.mxu0 0.0
        %2116 = vmatprep.subr.mxu0 0.0
        %2117 = vmatpush1.msra.mxu0 0.0
        %2118 = vmatprep.subr.mxu0 0.0
        %2119 = vmatpush1.msra.mxu0 0.0
        %2120 = vmatprep.mubr.f32.mxu0 0.0
        %2121 = vmatmul.mubr.f32.gmra.mrb[0].mxu0 %v1777
        %v2122 = vpop.f32.mrb[0].mxu0
        %v2123 = vadd.f32 %v888, %v2122
        %v2124 = vpop.f32.mrb[0].mxu0
        %v2125 = vadd.f32 %v890, %v2124
        %2126 = vdwg.mxu0
        %2127 = vmatprep.subr.mxu0 %v1797
        %2128 = vmatpush1.msra.mxu0 %v1795
        %2129 = vmatprep.subr.mxu0 0.0
        %2130 = vmatpush1.msra.mxu0 0.0
        %2131 = vmatprep.subr.mxu0 0.0
        %2132 = vmatpush1.msra.mxu0 0.0
        %2133 = vmatprep.subr.mxu0 0.0
        %2134 = vmatpush1.msra.mxu0 0.0
        %2135 = vmatprep.subr.mxu0 0.0
        %2136 = vmatpush1.msra.mxu0 0.0
        %2137 = vmatprep.subr.mxu0 0.0
        %2138 = vmatpush1.msra.mxu0 0.0
        %2139 = vmatprep.subr.mxu0 0.0
        %2140 = vmatpush1.msra.mxu0 0.0
        %2141 = vmatprep.subr.mxu0 0.0
        %2142 = vmatpush1.msra.mxu0 0.0
        %2143 = vmatprep.subr.mxu0 0.0
        %2144 = vmatpush1.msra.mxu0 0.0
        %2145 = vmatprep.subr.mxu0 0.0
        %2146 = vmatpush1.msra.mxu0 0.0
        %2147 = vmatprep.subr.mxu0 0.0
        %2148 = vmatpush1.msra.mxu0 0.0
        %2149 = vmatprep.subr.mxu0 0.0
        %2150 = vmatpush1.msra.mxu0 0.0
        %2151 = vmatprep.subr.mxu0 0.0
        %2152 = vmatpush1.msra.mxu0 0.0
        %2153 = vmatprep.subr.mxu0 0.0
        %2154 = vmatpush1.msra.mxu0 0.0
        %2155 = vmatprep.subr.mxu0 0.0
        %2156 = vmatpush1.msra.mxu0 0.0
        %2157 = vmatprep.subr.mxu0 0.0
        %2158 = vmatpush1.msra.mxu0 0.0
        %2159 = vmatprep.subr.mxu0 0.0
        %2160 = vmatpush1.msra.mxu0 0.0
        %2161 = vmatprep.subr.mxu0 0.0
        %2162 = vmatpush1.msra.mxu0 0.0
        %2163 = vmatprep.subr.mxu0 0.0
        %2164 = vmatpush1.msra.mxu0 0.0
        %2165 = vmatprep.subr.mxu0 0.0
        %2166 = vmatpush1.msra.mxu0 0.0
        %2167 = vmatprep.subr.mxu0 0.0
        %2168 = vmatpush1.msra.mxu0 0.0
        %2169 = vmatprep.subr.mxu0 0.0
        %2170 = vmatpush1.msra.mxu0 0.0
        %2171 = vmatprep.subr.mxu0 0.0
        %2172 = vmatpush1.msra.mxu0 0.0
        %2173 = vmatprep.subr.mxu0 0.0
        %2174 = vmatpush1.msra.mxu0 0.0
        %2175 = vmatprep.subr.mxu0 0.0
        %2176 = vmatpush1.msra.mxu0 0.0
        %2177 = vmatprep.subr.mxu0 0.0
        %2178 = vmatpush1.msra.mxu0 0.0
        %2179 = vmatprep.subr.mxu0 0.0
        %2180 = vmatpush1.msra.mxu0 0.0
        %2181 = vmatprep.subr.mxu0 0.0
        %2182 = vmatpush1.msra.mxu0 0.0
        %2183 = vmatprep.subr.mxu0 0.0
        %2184 = vmatpush1.msra.mxu0 0.0
        %2185 = vmatprep.subr.mxu0 0.0
        %2186 = vmatpush1.msra.mxu0 0.0
        %2187 = vmatprep.subr.mxu0 0.0
        %2188 = vmatpush1.msra.mxu0 0.0
        %2189 = vmatprep.subr.mxu0 0.0
        %2190 = vmatpush1.msra.mxu0 0.0
        %2191 = vmatprep.mubr.f32.mxu0 0.0
        %2192 = vmatmul.mubr.f32.gmra.mrb[0].mxu0 %v1777
        %v2193 = vpop.f32.mrb[0].mxu0
        %v2194 = vadd.f32 %v959, %v2193
        %v2195 = vpop.f32.mrb[0].mxu0
        %v2196 = vadd.f32 %v961, %v2195
        %2197 = vdwg.mxu0
        %2198 = vmatprep.subr.mxu0 %v1801
        %2199 = vmatpush1.msra.mxu0 %v1799
        %2200 = vmatprep.subr.mxu0 0.0
        %2201 = vmatpush1.msra.mxu0 0.0
        %2202 = vmatprep.subr.mxu0 0.0
        %2203 = vmatpush1.msra.mxu0 0.0
        %2204 = vmatprep.subr.mxu0 0.0
        %2205 = vmatpush1.msra.mxu0 0.0
        %2206 = vmatprep.subr.mxu0 0.0
        %2207 = vmatpush1.msra.mxu0 0.0
        %2208 = vmatprep.subr.mxu0 0.0
        %2209 = vmatpush1.msra.mxu0 0.0
        %2210 = vmatprep.subr.mxu0 0.0
        %2211 = vmatpush1.msra.mxu0 0.0
        %2212 = vmatprep.subr.mxu0 0.0
        %2213 = vmatpush1.msra.mxu0 0.0
        %2214 = vmatprep.subr.mxu0 0.0
        %2215 = vmatpush1.msra.mxu0 0.0
        %2216 = vmatprep.subr.mxu0 0.0
        %2217 = vmatpush1.msra.mxu0 0.0
        %2218 = vmatprep.subr.mxu0 0.0
        %2219 = vmatpush1.msra.mxu0 0.0
        %2220 = vmatprep.subr.mxu0 0.0
        %2221 = vmatpush1.msra.mxu0 0.0
        %2222 = vmatprep.subr.mxu0 0.0
        %2223 = vmatpush1.msra.mxu0 0.0
        %2224 = vmatprep.subr.mxu0 0.0
        %2225 = vmatpush1.msra.mxu0 0.0
        %2226 = vmatprep.subr.mxu0 0.0
        %2227 = vmatpush1.msra.mxu0 0.0
        %2228 = vmatprep.subr.mxu0 0.0
        %2229 = vmatpush1.msra.mxu0 0.0
        %2230 = vmatprep.subr.mxu0 0.0
        %2231 = vmatpush1.msra.mxu0 0.0
        %2232 = vmatprep.subr.mxu0 0.0
        %2233 = vmatpush1.msra.mxu0 0.0
        %2234 = vmatprep.subr.mxu0 0.0
        %2235 = vmatpush1.msra.mxu0 0.0
        %2236 = vmatprep.subr.mxu0 0.0
        %2237 = vmatpush1.msra.mxu0 0.0
        %2238 = vmatprep.subr.mxu0 0.0
        %2239 = vmatpush1.msra.mxu0 0.0
        %2240 = vmatprep.subr.mxu0 0.0
        %2241 = vmatpush1.msra.mxu0 0.0
        %2242 = vmatprep.subr.mxu0 0.0
        %2243 = vmatpush1.msra.mxu0 0.0
        %2244 = vmatprep.subr.mxu0 0.0
        %2245 = vmatpush1.msra.mxu0 0.0
        %2246 = vmatprep.subr.mxu0 0.0
        %2247 = vmatpush1.msra.mxu0 0.0
        %2248 = vmatprep.subr.mxu0 0.0
        %2249 = vmatpush1.msra.mxu0 0.0
        %2250 = vmatprep.subr.mxu0 0.0
        %2251 = vmatpush1.msra.mxu0 0.0
        %2252 = vmatprep.subr.mxu0 0.0
        %2253 = vmatpush1.msra.mxu0 0.0
        %2254 = vmatprep.subr.mxu0 0.0
        %2255 = vmatpush1.msra.mxu0 0.0
        %2256 = vmatprep.subr.mxu0 0.0
        %2257 = vmatpush1.msra.mxu0 0.0
        %2258 = vmatprep.subr.mxu0 0.0
        %2259 = vmatpush1.msra.mxu0 0.0
        %2260 = vmatprep.subr.mxu0 0.0
        %2261 = vmatpush1.msra.mxu0 0.0
        %2262 = vmatprep.mubr.f32.mxu0 0.0
        %2263 = vmatmul.mubr.f32.gmra.mrb[0].mxu0 %v1777
        %v2264 = vpop.f32.mrb[0].mxu0
        %v2265 = vadd.f32 %v1030, %v2264
        %v2266 = vpop.f32.mrb[0].mxu0
        %v2267 = vadd.f32 %v1032, %v2266
        %2268 = vdwg.mxu0
        %2269 = vmatprep.subr.mxu0 %v1805
        %2270 = vmatpush1.msra.mxu0 %v1803
        %2271 = vmatprep.subr.mxu0 0.0
        %2272 = vmatpush1.msra.mxu0 0.0
        %2273 = vmatprep.subr.mxu0 0.0
        %2274 = vmatpush1.msra.mxu0 0.0
        %2275 = vmatprep.subr.mxu0 0.0
        %2276 = vmatpush1.msra.mxu0 0.0
        %2277 = vmatprep.subr.mxu0 0.0
        %2278 = vmatpush1.msra.mxu0 0.0
        %2279 = vmatprep.subr.mxu0 0.0
        %2280 = vmatpush1.msra.mxu0 0.0
        %2281 = vmatprep.subr.mxu0 0.0
        %2282 = vmatpush1.msra.mxu0 0.0
        %2283 = vmatprep.subr.mxu0 0.0
        %2284 = vmatpush1.msra.mxu0 0.0
        %2285 = vmatprep.subr.mxu0 0.0
        %2286 = vmatpush1.msra.mxu0 0.0
        %2287 = vmatprep.subr.mxu0 0.0
        %2288 = vmatpush1.msra.mxu0 0.0
        %2289 = vmatprep.subr.mxu0 0.0
        %2290 = vmatpush1.msra.mxu0 0.0
        %2291 = vmatprep.subr.mxu0 0.0
        %2292 = vmatpush1.msra.mxu0 0.0
        %2293 = vmatprep.subr.mxu0 0.0
        %2294 = vmatpush1.msra.mxu0 0.0
        %2295 = vmatprep.subr.mxu0 0.0
        %2296 = vmatpush1.msra.mxu0 0.0
        %2297 = vmatprep.subr.mxu0 0.0
        %2298 = vmatpush1.msra.mxu0 0.0
        %2299 = vmatprep.subr.mxu0 0.0
        %2300 = vmatpush1.msra.mxu0 0.0
        %2301 = vmatprep.subr.mxu0 0.0
        %2302 = vmatpush1.msra.mxu0 0.0
        %2303 = vmatprep.subr.mxu0 0.0
        %2304 = vmatpush1.msra.mxu0 0.0
        %2305 = vmatprep.subr.mxu0 0.0
        %2306 = vmatpush1.msra.mxu0 0.0
        %2307 = vmatprep.subr.mxu0 0.0
        %2308 = vmatpush1.msra.mxu0 0.0
        %2309 = vmatprep.subr.mxu0 0.0
        %2310 = vmatpush1.msra.mxu0 0.0
        %2311 = vmatprep.subr.mxu0 0.0
        %2312 = vmatpush1.msra.mxu0 0.0
        %2313 = vmatprep.subr.mxu0 0.0
        %2314 = vmatpush1.msra.mxu0 0.0
        %2315 = vmatprep.subr.mxu0 0.0
        %2316 = vmatpush1.msra.mxu0 0.0
        %2317 = vmatprep.subr.mxu0 0.0
        %2318 = vmatpush1.msra.mxu0 0.0
        %2319 = vmatprep.subr.mxu0 0.0
        %2320 = vmatpush1.msra.mxu0 0.0
        %2321 = vmatprep.subr.mxu0 0.0
        %2322 = vmatpush1.msra.mxu0 0.0
        %2323 = vmatprep.subr.mxu0 0.0
        %2324 = vmatpush1.msra.mxu0 0.0
        %2325 = vmatprep.subr.mxu0 0.0
        %2326 = vmatpush1.msra.mxu0 0.0
        %2327 = vmatprep.subr.mxu0 0.0
        %2328 = vmatpush1.msra.mxu0 0.0
        %2329 = vmatprep.subr.mxu0 0.0
        %2330 = vmatpush1.msra.mxu0 0.0
        %2331 = vmatprep.subr.mxu0 0.0
        %2332 = vmatpush1.msra.mxu0 0.0
        %2333 = vmatprep.mubr.f32.mxu0 0.0
        %2334 = vmatmul.mubr.f32.gmra.mrb[0].mxu0 %v1777
        %v2335 = vpop.f32.mrb[0].mxu0
        %v2336 = vadd.f32 %v1101, %v2335
        %v2337 = vpop.f32.mrb[0].mxu0
        %v2338 = vadd.f32 %v1103, %v2337
        %2339 = vdwg.mxu0
        %2340 = vmatprep.subr.mxu0 %v1809
        %2341 = vmatpush1.msra.mxu0 %v1807
        %2342 = vmatprep.subr.mxu0 0.0
        %2343 = vmatpush1.msra.mxu0 0.0
        %2344 = vmatprep.subr.mxu0 0.0
        %2345 = vmatpush1.msra.mxu0 0.0
        %2346 = vmatprep.subr.mxu0 0.0
        %2347 = vmatpush1.msra.mxu0 0.0
        %2348 = vmatprep.subr.mxu0 0.0
        %2349 = vmatpush1.msra.mxu0 0.0
        %2350 = vmatprep.subr.mxu0 0.0
        %2351 = vmatpush1.msra.mxu0 0.0
        %2352 = vmatprep.subr.mxu0 0.0
        %2353 = vmatpush1.msra.mxu0 0.0
        %2354 = vmatprep.subr.mxu0 0.0
        %2355 = vmatpush1.msra.mxu0 0.0
        %2356 = vmatprep.subr.mxu0 0.0
        %2357 = vmatpush1.msra.mxu0 0.0
        %2358 = vmatprep.subr.mxu0 0.0
        %2359 = vmatpush1.msra.mxu0 0.0
        %2360 = vmatprep.subr.mxu0 0.0
        %2361 = vmatpush1.msra.mxu0 0.0
        %2362 = vmatprep.subr.mxu0 0.0
        %2363 = vmatpush1.msra.mxu0 0.0
        %2364 = vmatprep.subr.mxu0 0.0
        %2365 = vmatpush1.msra.mxu0 0.0
        %2366 = vmatprep.subr.mxu0 0.0
        %2367 = vmatpush1.msra.mxu0 0.0
        %2368 = vmatprep.subr.mxu0 0.0
        %2369 = vmatpush1.msra.mxu0 0.0
        %2370 = vmatprep.subr.mxu0 0.0
        %2371 = vmatpush1.msra.mxu0 0.0
        %2372 = vmatprep.subr.mxu0 0.0
        %2373 = vmatpush1.msra.mxu0 0.0
        %2374 = vmatprep.subr.mxu0 0.0
        %2375 = vmatpush1.msra.mxu0 0.0
        %2376 = vmatprep.subr.mxu0 0.0
        %2377 = vmatpush1.msra.mxu0 0.0
        %2378 = vmatprep.subr.mxu0 0.0
        %2379 = vmatpush1.msra.mxu0 0.0
        %2380 = vmatprep.subr.mxu0 0.0
        %2381 = vmatpush1.msra.mxu0 0.0
        %2382 = vmatprep.subr.mxu0 0.0
        %2383 = vmatpush1.msra.mxu0 0.0
        %2384 = vmatprep.subr.mxu0 0.0
        %2385 = vmatpush1.msra.mxu0 0.0
        %2386 = vmatprep.subr.mxu0 0.0
        %2387 = vmatpush1.msra.mxu0 0.0
        %2388 = vmatprep.subr.mxu0 0.0
        %2389 = vmatpush1.msra.mxu0 0.0
        %2390 = vmatprep.subr.mxu0 0.0
        %2391 = vmatpush1.msra.mxu0 0.0
        %2392 = vmatprep.subr.mxu0 0.0
        %2393 = vmatpush1.msra.mxu0 0.0
        %2394 = vmatprep.subr.mxu0 0.0
        %2395 = vmatpush1.msra.mxu0 0.0
        %2396 = vmatprep.subr.mxu0 0.0
        %2397 = vmatpush1.msra.mxu0 0.0
        %2398 = vmatprep.subr.mxu0 0.0
        %2399 = vmatpush1.msra.mxu0 0.0
        %2400 = vmatprep.subr.mxu0 0.0
        %2401 = vmatpush1.msra.mxu0 0.0
        %2402 = vmatprep.subr.mxu0 0.0
        %2403 = vmatpush1.msra.mxu0 0.0
        %2404 = vmatprep.mubr.f32.mxu0 0.0
        %2405 = vmatmul.mubr.f32.gmra.mrb[0].mxu0 %v1777
        %v2406 = vpop.f32.mrb[0].mxu0
        %v2407 = vadd.f32 %v1172, %v2406
        %v2408 = vpop.f32.mrb[0].mxu0
        %v2409 = vadd.f32 %v1174, %v2408
        %2410 = vdwg.mxu0
        %2411 = vmatprep.subr.mxu0 %v1813
        %2412 = vmatpush1.msra.mxu0 %v1811
        %2413 = vmatprep.subr.mxu0 0.0
        %2414 = vmatpush1.msra.mxu0 0.0
        %2415 = vmatprep.subr.mxu0 0.0
        %2416 = vmatpush1.msra.mxu0 0.0
        %2417 = vmatprep.subr.mxu0 0.0
        %2418 = vmatpush1.msra.mxu0 0.0
        %2419 = vmatprep.subr.mxu0 0.0
        %2420 = vmatpush1.msra.mxu0 0.0
        %2421 = vmatprep.subr.mxu0 0.0
        %2422 = vmatpush1.msra.mxu0 0.0
        %2423 = vmatprep.subr.mxu0 0.0
        %2424 = vmatpush1.msra.mxu0 0.0
        %2425 = vmatprep.subr.mxu0 0.0
        %2426 = vmatpush1.msra.mxu0 0.0
        %2427 = vmatprep.subr.mxu0 0.0
        %2428 = vmatpush1.msra.mxu0 0.0
        %2429 = vmatprep.subr.mxu0 0.0
        %2430 = vmatpush1.msra.mxu0 0.0
        %2431 = vmatprep.subr.mxu0 0.0
        %2432 = vmatpush1.msra.mxu0 0.0
        %2433 = vmatprep.subr.mxu0 0.0
        %2434 = vmatpush1.msra.mxu0 0.0
        %2435 = vmatprep.subr.mxu0 0.0
        %2436 = vmatpush1.msra.mxu0 0.0
        %2437 = vmatprep.subr.mxu0 0.0
        %2438 = vmatpush1.msra.mxu0 0.0
        %2439 = vmatprep.subr.mxu0 0.0
        %2440 = vmatpush1.msra.mxu0 0.0
        %2441 = vmatprep.subr.mxu0 0.0
        %2442 = vmatpush1.msra.mxu0 0.0
        %2443 = vmatprep.subr.mxu0 0.0
        %2444 = vmatpush1.msra.mxu0 0.0
        %2445 = vmatprep.subr.mxu0 0.0
        %2446 = vmatpush1.msra.mxu0 0.0
        %2447 = vmatprep.subr.mxu0 0.0
        %2448 = vmatpush1.msra.mxu0 0.0
        %2449 = vmatprep.subr.mxu0 0.0
        %2450 = vmatpush1.msra.mxu0 0.0
        %2451 = vmatprep.subr.mxu0 0.0
        %2452 = vmatpush1.msra.mxu0 0.0
        %2453 = vmatprep.subr.mxu0 0.0
        %2454 = vmatpush1.msra.mxu0 0.0
        %2455 = vmatprep.subr.mxu0 0.0
        %2456 = vmatpush1.msra.mxu0 0.0
        %2457 = vmatprep.subr.mxu0 0.0
        %2458 = vmatpush1.msra.mxu0 0.0
        %2459 = vmatprep.subr.mxu0 0.0
        %2460 = vmatpush1.msra.mxu0 0.0
        %2461 = vmatprep.subr.mxu0 0.0
        %2462 = vmatpush1.msra.mxu0 0.0
        %2463 = vmatprep.subr.mxu0 0.0
        %2464 = vmatpush1.msra.mxu0 0.0
        %2465 = vmatprep.subr.mxu0 0.0
        %2466 = vmatpush1.msra.mxu0 0.0
        %2467 = vmatprep.subr.mxu0 0.0
        %2468 = vmatpush1.msra.mxu0 0.0
        %2469 = vmatprep.subr.mxu0 0.0
        %2470 = vmatpush1.msra.mxu0 0.0
        %2471 = vmatprep.subr.mxu0 0.0
        %2472 = vmatpush1.msra.mxu0 0.0
        %2473 = vmatprep.subr.mxu0 0.0
        %2474 = vmatpush1.msra.mxu0 0.0
        %2475 = vmatprep.mubr.f32.mxu0 0.0
        %2476 = vmatmul.mubr.f32.gmra.mrb[0].mxu0 %v1777
        %v2477 = vpop.f32.mrb[0].mxu0
        %v2478 = vadd.f32 %v1243, %v2477
        %v2479 = vpop.f32.mrb[0].mxu0
        %v2480 = vadd.f32 %v1245, %v2479
        %2481 = vdwg.mxu0
        %2482 = vmatprep.subr.mxu0 %v1817
        %2483 = vmatpush1.msra.mxu0 %v1815
        %2484 = vmatprep.subr.mxu0 0.0
        %2485 = vmatpush1.msra.mxu0 0.0
        %2486 = vmatprep.subr.mxu0 0.0
        %2487 = vmatpush1.msra.mxu0 0.0
        %2488 = vmatprep.subr.mxu0 0.0
        %2489 = vmatpush1.msra.mxu0 0.0
        %2490 = vmatprep.subr.mxu0 0.0
        %2491 = vmatpush1.msra.mxu0 0.0
        %2492 = vmatprep.subr.mxu0 0.0
        %2493 = vmatpush1.msra.mxu0 0.0
        %2494 = vmatprep.subr.mxu0 0.0
        %2495 = vmatpush1.msra.mxu0 0.0
        %2496 = vmatprep.subr.mxu0 0.0
        %2497 = vmatpush1.msra.mxu0 0.0
        %2498 = vmatprep.subr.mxu0 0.0
        %2499 = vmatpush1.msra.mxu0 0.0
        %2500 = vmatprep.subr.mxu0 0.0
        %2501 = vmatpush1.msra.mxu0 0.0
        %2502 = vmatprep.subr.mxu0 0.0
        %2503 = vmatpush1.msra.mxu0 0.0
        %2504 = vmatprep.subr.mxu0 0.0
        %2505 = vmatpush1.msra.mxu0 0.0
        %2506 = vmatprep.subr.mxu0 0.0
        %2507 = vmatpush1.msra.mxu0 0.0
        %2508 = vmatprep.subr.mxu0 0.0
        %2509 = vmatpush1.msra.mxu0 0.0
        %2510 = vmatprep.subr.mxu0 0.0
        %2511 = vmatpush1.msra.mxu0 0.0
        %2512 = vmatprep.subr.mxu0 0.0
        %2513 = vmatpush1.msra.mxu0 0.0
        %2514 = vmatprep.subr.mxu0 0.0
        %2515 = vmatpush1.msra.mxu0 0.0
        %2516 = vmatprep.subr.mxu0 0.0
        %2517 = vmatpush1.msra.mxu0 0.0
        %2518 = vmatprep.subr.mxu0 0.0
        %2519 = vmatpush1.msra.mxu0 0.0
        %2520 = vmatprep.subr.mxu0 0.0
        %2521 = vmatpush1.msra.mxu0 0.0
        %2522 = vmatprep.subr.mxu0 0.0
        %2523 = vmatpush1.msra.mxu0 0.0
        %2524 = vmatprep.subr.mxu0 0.0
        %2525 = vmatpush1.msra.mxu0 0.0
        %2526 = vmatprep.subr.mxu0 0.0
        %2527 = vmatpush1.msra.mxu0 0.0
        %2528 = vmatprep.subr.mxu0 0.0
        %2529 = vmatpush1.msra.mxu0 0.0
        %2530 = vmatprep.subr.mxu0 0.0
        %2531 = vmatpush1.msra.mxu0 0.0
        %2532 = vmatprep.subr.mxu0 0.0
        %2533 = vmatpush1.msra.mxu0 0.0
        %2534 = vmatprep.subr.mxu0 0.0
        %2535 = vmatpush1.msra.mxu0 0.0
        %2536 = vmatprep.subr.mxu0 0.0
        %2537 = vmatpush1.msra.mxu0 0.0
        %2538 = vmatprep.subr.mxu0 0.0
        %2539 = vmatpush1.msra.mxu0 0.0
        %2540 = vmatprep.subr.mxu0 0.0
        %2541 = vmatpush1.msra.mxu0 0.0
        %2542 = vmatprep.subr.mxu0 0.0
        %2543 = vmatpush1.msra.mxu0 0.0
        %2544 = vmatprep.subr.mxu0 0.0
        %2545 = vmatpush1.msra.mxu0 0.0
        %2546 = vmatprep.mubr.f32.mxu0 0.0
        %2547 = vmatmul.mubr.f32.gmra.mrb[0].mxu0 %v1777
        %v2548 = vpop.f32.mrb[0].mxu0
        %v2549 = vadd.f32 %v1314, %v2548
        %v2550 = vpop.f32.mrb[0].mxu0
        %v2551 = vadd.f32 %v1316, %v2550
        %2552 = vdwg.mxu0
        %2553 = vmatprep.subr.mxu0 %v1821
        %2554 = vmatpush1.msra.mxu0 %v1819
        %2555 = vmatprep.subr.mxu0 0.0
        %2556 = vmatpush1.msra.mxu0 0.0
        %2557 = vmatprep.subr.mxu0 0.0
        %2558 = vmatpush1.msra.mxu0 0.0
        %2559 = vmatprep.subr.mxu0 0.0
        %2560 = vmatpush1.msra.mxu0 0.0
        %2561 = vmatprep.subr.mxu0 0.0
        %2562 = vmatpush1.msra.mxu0 0.0
        %2563 = vmatprep.subr.mxu0 0.0
        %2564 = vmatpush1.msra.mxu0 0.0
        %2565 = vmatprep.subr.mxu0 0.0
        %2566 = vmatpush1.msra.mxu0 0.0
        %2567 = vmatprep.subr.mxu0 0.0
        %2568 = vmatpush1.msra.mxu0 0.0
        %2569 = vmatprep.subr.mxu0 0.0
        %2570 = vmatpush1.msra.mxu0 0.0
        %2571 = vmatprep.subr.mxu0 0.0
        %2572 = vmatpush1.msra.mxu0 0.0
        %2573 = vmatprep.subr.mxu0 0.0
        %2574 = vmatpush1.msra.mxu0 0.0
        %2575 = vmatprep.subr.mxu0 0.0
        %2576 = vmatpush1.msra.mxu0 0.0
        %2577 = vmatprep.subr.mxu0 0.0
        %2578 = vmatpush1.msra.mxu0 0.0
        %2579 = vmatprep.subr.mxu0 0.0
        %2580 = vmatpush1.msra.mxu0 0.0
        %2581 = vmatprep.subr.mxu0 0.0
        %2582 = vmatpush1.msra.mxu0 0.0
        %2583 = vmatprep.subr.mxu0 0.0
        %2584 = vmatpush1.msra.mxu0 0.0
        %2585 = vmatprep.subr.mxu0 0.0
        %2586 = vmatpush1.msra.mxu0 0.0
        %2587 = vmatprep.subr.mxu0 0.0
        %2588 = vmatpush1.msra.mxu0 0.0
        %2589 = vmatprep.subr.mxu0 0.0
        %2590 = vmatpush1.msra.mxu0 0.0
        %2591 = vmatprep.subr.mxu0 0.0
        %2592 = vmatpush1.msra.mxu0 0.0
        %2593 = vmatprep.subr.mxu0 0.0
        %2594 = vmatpush1.msra.mxu0 0.0
        %2595 = vmatprep.subr.mxu0 0.0
        %2596 = vmatpush1.msra.mxu0 0.0
        %2597 = vmatprep.subr.mxu0 0.0
        %2598 = vmatpush1.msra.mxu0 0.0
        %2599 = vmatprep.subr.mxu0 0.0
        %2600 = vmatpush1.msra.mxu0 0.0
        %2601 = vmatprep.subr.mxu0 0.0
        %2602 = vmatpush1.msra.mxu0 0.0
        %2603 = vmatprep.subr.mxu0 0.0
        %2604 = vmatpush1.msra.mxu0 0.0
        %2605 = vmatprep.subr.mxu0 0.0
        %2606 = vmatpush1.msra.mxu0 0.0
        %2607 = vmatprep.subr.mxu0 0.0
        %2608 = vmatpush1.msra.mxu0 0.0
        %2609 = vmatprep.subr.mxu0 0.0
        %2610 = vmatpush1.msra.mxu0 0.0
        %2611 = vmatprep.subr.mxu0 0.0
        %2612 = vmatpush1.msra.mxu0 0.0
        %2613 = vmatprep.subr.mxu0 0.0
        %2614 = vmatpush1.msra.mxu0 0.0
        %2615 = vmatprep.subr.mxu0 0.0
        %2616 = vmatpush1.msra.mxu0 0.0
        %2617 = vmatprep.mubr.f32.mxu0 0.0
        %2618 = vmatmul.mubr.f32.gmra.mrb[0].mxu0 %v1777
        %v2619 = vpop.f32.mrb[0].mxu0
        %v2620 = vadd.f32 %v1385, %v2619
        %v2621 = vpop.f32.mrb[0].mxu0
        %v2622 = vadd.f32 %v1387, %v2621
        %2623 = vdwg.mxu0
        %2624 = vmatprep.subr.mxu0 %v1825
        %2625 = vmatpush1.msra.mxu0 %v1823
        %2626 = vmatprep.subr.mxu0 0.0
        %2627 = vmatpush1.msra.mxu0 0.0
        %2628 = vmatprep.subr.mxu0 0.0
        %2629 = vmatpush1.msra.mxu0 0.0
        %2630 = vmatprep.subr.mxu0 0.0
        %2631 = vmatpush1.msra.mxu0 0.0
        %2632 = vmatprep.subr.mxu0 0.0
        %2633 = vmatpush1.msra.mxu0 0.0
        %2634 = vmatprep.subr.mxu0 0.0
        %2635 = vmatpush1.msra.mxu0 0.0
        %2636 = vmatprep.subr.mxu0 0.0
        %2637 = vmatpush1.msra.mxu0 0.0
        %2638 = vmatprep.subr.mxu0 0.0
        %2639 = vmatpush1.msra.mxu0 0.0
        %2640 = vmatprep.subr.mxu0 0.0
        %2641 = vmatpush1.msra.mxu0 0.0
        %2642 = vmatprep.subr.mxu0 0.0
        %2643 = vmatpush1.msra.mxu0 0.0
        %2644 = vmatprep.subr.mxu0 0.0
        %2645 = vmatpush1.msra.mxu0 0.0
        %2646 = vmatprep.subr.mxu0 0.0
        %2647 = vmatpush1.msra.mxu0 0.0
        %2648 = vmatprep.subr.mxu0 0.0
        %2649 = vmatpush1.msra.mxu0 0.0
        %2650 = vmatprep.subr.mxu0 0.0
        %2651 = vmatpush1.msra.mxu0 0.0
        %2652 = vmatprep.subr.mxu0 0.0
        %2653 = vmatpush1.msra.mxu0 0.0
        %2654 = vmatprep.subr.mxu0 0.0
        %2655 = vmatpush1.msra.mxu0 0.0
        %2656 = vmatprep.subr.mxu0 0.0
        %2657 = vmatpush1.msra.mxu0 0.0
        %2658 = vmatprep.subr.mxu0 0.0
        %2659 = vmatpush1.msra.mxu0 0.0
        %2660 = vmatprep.subr.mxu0 0.0
        %2661 = vmatpush1.msra.mxu0 0.0
        %2662 = vmatprep.subr.mxu0 0.0
        %2663 = vmatpush1.msra.mxu0 0.0
        %2664 = vmatprep.subr.mxu0 0.0
        %2665 = vmatpush1.msra.mxu0 0.0
        %2666 = vmatprep.subr.mxu0 0.0
        %2667 = vmatpush1.msra.mxu0 0.0
        %2668 = vmatprep.subr.mxu0 0.0
        %2669 = vmatpush1.msra.mxu0 0.0
        %2670 = vmatprep.subr.mxu0 0.0
        %2671 = vmatpush1.msra.mxu0 0.0
        %2672 = vmatprep.subr.mxu0 0.0
        %2673 = vmatpush1.msra.mxu0 0.0
        %2674 = vmatprep.subr.mxu0 0.0
        %2675 = vmatpush1.msra.mxu0 0.0
        %2676 = vmatprep.subr.mxu0 0.0
        %2677 = vmatpush1.msra.mxu0 0.0
        %2678 = vmatprep.subr.mxu0 0.0
        %2679 = vmatpush1.msra.mxu0 0.0
        %2680 = vmatprep.subr.mxu0 0.0
        %2681 = vmatpush1.msra.mxu0 0.0
        %2682 = vmatprep.subr.mxu0 0.0
        %2683 = vmatpush1.msra.mxu0 0.0
        %2684 = vmatprep.subr.mxu0 0.0
        %2685 = vmatpush1.msra.mxu0 0.0
        %2686 = vmatprep.subr.mxu0 0.0
        %2687 = vmatpush1.msra.mxu0 0.0
        %2688 = vmatprep.mubr.f32.mxu0 0.0
        %2689 = vmatmul.mubr.f32.gmra.mrb[0].mxu0 %v1777
        %v2690 = vpop.f32.mrb[0].mxu0
        %v2691 = vadd.f32 %v1456, %v2690
        %v2692 = vpop.f32.mrb[0].mxu0
        %v2693 = vadd.f32 %v1458, %v2692
        %2694 = vdwg.mxu0
        %2695 = vmatprep.subr.mxu0 %v1829
        %2696 = vmatpush1.msra.mxu0 %v1827
        %2697 = vmatprep.subr.mxu0 0.0
        %2698 = vmatpush1.msra.mxu0 0.0
        %2699 = vmatprep.subr.mxu0 0.0
        %2700 = vmatpush1.msra.mxu0 0.0
        %2701 = vmatprep.subr.mxu0 0.0
        %2702 = vmatpush1.msra.mxu0 0.0
        %2703 = vmatprep.subr.mxu0 0.0
        %2704 = vmatpush1.msra.mxu0 0.0
        %2705 = vmatprep.subr.mxu0 0.0
        %2706 = vmatpush1.msra.mxu0 0.0
        %2707 = vmatprep.subr.mxu0 0.0
        %2708 = vmatpush1.msra.mxu0 0.0
        %2709 = vmatprep.subr.mxu0 0.0
        %2710 = vmatpush1.msra.mxu0 0.0
        %2711 = vmatprep.subr.mxu0 0.0
        %2712 = vmatpush1.msra.mxu0 0.0
        %2713 = vmatprep.subr.mxu0 0.0
        %2714 = vmatpush1.msra.mxu0 0.0
        %2715 = vmatprep.subr.mxu0 0.0
        %2716 = vmatpush1.msra.mxu0 0.0
        %2717 = vmatprep.subr.mxu0 0.0
        %2718 = vmatpush1.msra.mxu0 0.0
        %2719 = vmatprep.subr.mxu0 0.0
        %2720 = vmatpush1.msra.mxu0 0.0
        %2721 = vmatprep.subr.mxu0 0.0
        %2722 = vmatpush1.msra.mxu0 0.0
        %2723 = vmatprep.subr.mxu0 0.0
        %2724 = vmatpush1.msra.mxu0 0.0
        %2725 = vmatprep.subr.mxu0 0.0
        %2726 = vmatpush1.msra.mxu0 0.0
        %2727 = vmatprep.subr.mxu0 0.0
        %2728 = vmatpush1.msra.mxu0 0.0
        %2729 = vmatprep.subr.mxu0 0.0
        %2730 = vmatpush1.msra.mxu0 0.0
        %2731 = vmatprep.subr.mxu0 0.0
        %2732 = vmatpush1.msra.mxu0 0.0
        %2733 = vmatprep.subr.mxu0 0.0
        %2734 = vmatpush1.msra.mxu0 0.0
        %2735 = vmatprep.subr.mxu0 0.0
        %2736 = vmatpush1.msra.mxu0 0.0
        %2737 = vmatprep.subr.mxu0 0.0
        %2738 = vmatpush1.msra.mxu0 0.0
        %2739 = vmatprep.subr.mxu0 0.0
        %2740 = vmatpush1.msra.mxu0 0.0
        %2741 = vmatprep.subr.mxu0 0.0
        %2742 = vmatpush1.msra.mxu0 0.0
        %2743 = vmatprep.subr.mxu0 0.0
        %2744 = vmatpush1.msra.mxu0 0.0
        %2745 = vmatprep.subr.mxu0 0.0
        %2746 = vmatpush1.msra.mxu0 0.0
        %2747 = vmatprep.subr.mxu0 0.0
        %2748 = vmatpush1.msra.mxu0 0.0
        %2749 = vmatprep.subr.mxu0 0.0
        %2750 = vmatpush1.msra.mxu0 0.0
        %2751 = vmatprep.subr.mxu0 0.0
        %2752 = vmatpush1.msra.mxu0 0.0
        %2753 = vmatprep.subr.mxu0 0.0
        %2754 = vmatpush1.msra.mxu0 0.0
        %2755 = vmatprep.subr.mxu0 0.0
        %2756 = vmatpush1.msra.mxu0 0.0
        %2757 = vmatprep.subr.mxu0 0.0
        %2758 = vmatpush1.msra.mxu0 0.0
        %2759 = vmatprep.mubr.f32.mxu0 0.0
        %2760 = vmatmul.mubr.f32.gmra.mrb[0].mxu0 %v1777
        %v2761 = vpop.f32.mrb[0].mxu0
        %v2762 = vadd.f32 %v1527, %v2761
        %v2763 = vpop.f32.mrb[0].mxu0
        %v2764 = vadd.f32 %v1529, %v2763
        %2765 = vdwg.mxu0
        %2766 = vmatprep.subr.mxu0 %v1833
        %2767 = vmatpush1.msra.mxu0 %v1831
        %2768 = vmatprep.subr.mxu0 0.0
        %2769 = vmatpush1.msra.mxu0 0.0
        %2770 = vmatprep.subr.mxu0 0.0
        %2771 = vmatpush1.msra.mxu0 0.0
        %2772 = vmatprep.subr.mxu0 0.0
        %2773 = vmatpush1.msra.mxu0 0.0
        %2774 = vmatprep.subr.mxu0 0.0
        %2775 = vmatpush1.msra.mxu0 0.0
        %2776 = vmatprep.subr.mxu0 0.0
        %2777 = vmatpush1.msra.mxu0 0.0
        %2778 = vmatprep.subr.mxu0 0.0
        %2779 = vmatpush1.msra.mxu0 0.0
        %2780 = vmatprep.subr.mxu0 0.0
        %2781 = vmatpush1.msra.mxu0 0.0
        %2782 = vmatprep.subr.mxu0 0.0
        %2783 = vmatpush1.msra.mxu0 0.0
        %2784 = vmatprep.subr.mxu0 0.0
        %2785 = vmatpush1.msra.mxu0 0.0
        %2786 = vmatprep.subr.mxu0 0.0
        %2787 = vmatpush1.msra.mxu0 0.0
        %2788 = vmatprep.subr.mxu0 0.0
        %2789 = vmatpush1.msra.mxu0 0.0
        %2790 = vmatprep.subr.mxu0 0.0
        %2791 = vmatpush1.msra.mxu0 0.0
        %2792 = vmatprep.subr.mxu0 0.0
        %2793 = vmatpush1.msra.mxu0 0.0
        %2794 = vmatprep.subr.mxu0 0.0
        %2795 = vmatpush1.msra.mxu0 0.0
        %2796 = vmatprep.subr.mxu0 0.0
        %2797 = vmatpush1.msra.mxu0 0.0
        %2798 = vmatprep.subr.mxu0 0.0
        %2799 = vmatpush1.msra.mxu0 0.0
        %2800 = vmatprep.subr.mxu0 0.0
        %2801 = vmatpush1.msra.mxu0 0.0
        %2802 = vmatprep.subr.mxu0 0.0
        %2803 = vmatpush1.msra.mxu0 0.0
        %2804 = vmatprep.subr.mxu0 0.0
        %2805 = vmatpush1.msra.mxu0 0.0
        %2806 = vmatprep.subr.mxu0 0.0
        %2807 = vmatpush1.msra.mxu0 0.0
        %2808 = vmatprep.subr.mxu0 0.0
        %2809 = vmatpush1.msra.mxu0 0.0
        %2810 = vmatprep.subr.mxu0 0.0
        %2811 = vmatpush1.msra.mxu0 0.0
        %2812 = vmatprep.subr.mxu0 0.0
        %2813 = vmatpush1.msra.mxu0 0.0
        %2814 = vmatprep.subr.mxu0 0.0
        %2815 = vmatpush1.msra.mxu0 0.0
        %2816 = vmatprep.subr.mxu0 0.0
        %2817 = vmatpush1.msra.mxu0 0.0
        %2818 = vmatprep.subr.mxu0 0.0
        %2819 = vmatpush1.msra.mxu0 0.0
        %2820 = vmatprep.subr.mxu0 0.0
        %2821 = vmatpush1.msra.mxu0 0.0
        %2822 = vmatprep.subr.mxu0 0.0
        %2823 = vmatpush1.msra.mxu0 0.0
        %2824 = vmatprep.subr.mxu0 0.0
        %2825 = vmatpush1.msra.mxu0 0.0
        %2826 = vmatprep.subr.mxu0 0.0
        %2827 = vmatpush1.msra.mxu0 0.0
        %2828 = vmatprep.subr.mxu0 0.0
        %2829 = vmatpush1.msra.mxu0 0.0
        %2830 = vmatprep.mubr.f32.mxu0 0.0
        %2831 = vmatmul.mubr.f32.gmra.mrb[0].mxu0 %v1777
        %v2832 = vpop.f32.mrb[0].mxu0
        %v2833 = vadd.f32 %v1598, %v2832
        %v2834 = vpop.f32.mrb[0].mxu0
        %v2835 = vadd.f32 %v1600, %v2834
        %2836 = vdwg.mxu0
        %2837 = vmatprep.subr.mxu0 %v1837
        %2838 = vmatpush1.msra.mxu0 %v1835
        %2839 = vmatprep.subr.mxu0 0.0
        %2840 = vmatpush1.msra.mxu0 0.0
        %2841 = vmatprep.subr.mxu0 0.0
        %2842 = vmatpush1.msra.mxu0 0.0
        %2843 = vmatprep.subr.mxu0 0.0
        %2844 = vmatpush1.msra.mxu0 0.0
        %2845 = vmatprep.subr.mxu0 0.0
        %2846 = vmatpush1.msra.mxu0 0.0
        %2847 = vmatprep.subr.mxu0 0.0
        %2848 = vmatpush1.msra.mxu0 0.0
        %2849 = vmatprep.subr.mxu0 0.0
        %2850 = vmatpush1.msra.mxu0 0.0
        %2851 = vmatprep.subr.mxu0 0.0
        %2852 = vmatpush1.msra.mxu0 0.0
        %2853 = vmatprep.subr.mxu0 0.0
        %2854 = vmatpush1.msra.mxu0 0.0
        %2855 = vmatprep.subr.mxu0 0.0
        %2856 = vmatpush1.msra.mxu0 0.0
        %2857 = vmatprep.subr.mxu0 0.0
        %2858 = vmatpush1.msra.mxu0 0.0
        %2859 = vmatprep.subr.mxu0 0.0
        %2860 = vmatpush1.msra.mxu0 0.0
        %2861 = vmatprep.subr.mxu0 0.0
        %2862 = vmatpush1.msra.mxu0 0.0
        %2863 = vmatprep.subr.mxu0 0.0
        %2864 = vmatpush1.msra.mxu0 0.0
        %2865 = vmatprep.subr.mxu0 0.0
        %2866 = vmatpush1.msra.mxu0 0.0
        %2867 = vmatprep.subr.mxu0 0.0
        %2868 = vmatpush1.msra.mxu0 0.0
        %2869 = vmatprep.subr.mxu0 0.0
        %2870 = vmatpush1.msra.mxu0 0.0
        %2871 = vmatprep.subr.mxu0 0.0
        %2872 = vmatpush1.msra.mxu0 0.0
        %2873 = vmatprep.subr.mxu0 0.0
        %2874 = vmatpush1.msra.mxu0 0.0
        %2875 = vmatprep.subr.mxu0 0.0
        %2876 = vmatpush1.msra.mxu0 0.0
        %2877 = vmatprep.subr.mxu0 0.0
        %2878 = vmatpush1.msra.mxu0 0.0
        %2879 = vmatprep.subr.mxu0 0.0
        %2880 = vmatpush1.msra.mxu0 0.0
        %2881 = vmatprep.subr.mxu0 0.0
        %2882 = vmatpush1.msra.mxu0 0.0
        %2883 = vmatprep.subr.mxu0 0.0
        %2884 = vmatpush1.msra.mxu0 0.0
        %2885 = vmatprep.subr.mxu0 0.0
        %2886 = vmatpush1.msra.mxu0 0.0
        %2887 = vmatprep.subr.mxu0 0.0
        %2888 = vmatpush1.msra.mxu0 0.0
        %2889 = vmatprep.subr.mxu0 0.0
        %2890 = vmatpush1.msra.mxu0 0.0
        %2891 = vmatprep.subr.mxu0 0.0
        %2892 = vmatpush1.msra.mxu0 0.0
        %2893 = vmatprep.subr.mxu0 0.0
        %2894 = vmatpush1.msra.mxu0 0.0
        %2895 = vmatprep.subr.mxu0 0.0
        %2896 = vmatpush1.msra.mxu0 0.0
        %2897 = vmatprep.subr.mxu0 0.0
        %2898 = vmatpush1.msra.mxu0 0.0
        %2899 = vmatprep.subr.mxu0 0.0
        %2900 = vmatpush1.msra.mxu0 0.0
        %2901 = vmatprep.mubr.f32.mxu0 0.0
        %2902 = vmatmul.mubr.f32.gmra.mrb[0].mxu0 %v1777
        %v2903 = vpop.f32.mrb[0].mxu0
        %v2904 = vadd.f32 %v1669, %v2903
        %v2905 = vpop.f32.mrb[0].mxu0
        %v2906 = vadd.f32 %v1671, %v2905
        %2907 = vdwg.mxu0
        %2908 = vmatprep.subr.mxu0 %v1841
        %2909 = vmatpush1.msra.mxu0 %v1839
        %2910 = vmatprep.subr.mxu0 0.0
        %2911 = vmatpush1.msra.mxu0 0.0
        %2912 = vmatprep.subr.mxu0 0.0
        %2913 = vmatpush1.msra.mxu0 0.0
        %2914 = vmatprep.subr.mxu0 0.0
        %2915 = vmatpush1.msra.mxu0 0.0
        %2916 = vmatprep.subr.mxu0 0.0
        %2917 = vmatpush1.msra.mxu0 0.0
        %2918 = vmatprep.subr.mxu0 0.0
        %2919 = vmatpush1.msra.mxu0 0.0
        %2920 = vmatprep.subr.mxu0 0.0
        %2921 = vmatpush1.msra.mxu0 0.0
        %2922 = vmatprep.subr.mxu0 0.0
        %2923 = vmatpush1.msra.mxu0 0.0
        %2924 = vmatprep.subr.mxu0 0.0
        %2925 = vmatpush1.msra.mxu0 0.0
        %2926 = vmatprep.subr.mxu0 0.0
        %2927 = vmatpush1.msra.mxu0 0.0
        %2928 = vmatprep.subr.mxu0 0.0
        %2929 = vmatpush1.msra.mxu0 0.0
        %2930 = vmatprep.subr.mxu0 0.0
        %2931 = vmatpush1.msra.mxu0 0.0
        %2932 = vmatprep.subr.mxu0 0.0
        %2933 = vmatpush1.msra.mxu0 0.0
        %2934 = vmatprep.subr.mxu0 0.0
        %2935 = vmatpush1.msra.mxu0 0.0
        %2936 = vmatprep.subr.mxu0 0.0
        %2937 = vmatpush1.msra.mxu0 0.0
        %2938 = vmatprep.subr.mxu0 0.0
        %2939 = vmatpush1.msra.mxu0 0.0
        %2940 = vmatprep.subr.mxu0 0.0
        %2941 = vmatpush1.msra.mxu0 0.0
        %2942 = vmatprep.subr.mxu0 0.0
        %2943 = vmatpush1.msra.mxu0 0.0
        %2944 = vmatprep.subr.mxu0 0.0
        %2945 = vmatpush1.msra.mxu0 0.0
        %2946 = vmatprep.subr.mxu0 0.0
        %2947 = vmatpush1.msra.mxu0 0.0
        %2948 = vmatprep.subr.mxu0 0.0
        %2949 = vmatpush1.msra.mxu0 0.0
        %2950 = vmatprep.subr.mxu0 0.0
        %2951 = vmatpush1.msra.mxu0 0.0
        %2952 = vmatprep.subr.mxu0 0.0
        %2953 = vmatpush1.msra.mxu0 0.0
        %2954 = vmatprep.subr.mxu0 0.0
        %2955 = vmatpush1.msra.mxu0 0.0
        %2956 = vmatprep.subr.mxu0 0.0
        %2957 = vmatpush1.msra.mxu0 0.0
        %2958 = vmatprep.subr.mxu0 0.0
        %2959 = vmatpush1.msra.mxu0 0.0
        %2960 = vmatprep.subr.mxu0 0.0
        %2961 = vmatpush1.msra.mxu0 0.0
        %2962 = vmatprep.subr.mxu0 0.0
        %2963 = vmatpush1.msra.mxu0 0.0
        %2964 = vmatprep.subr.mxu0 0.0
        %2965 = vmatpush1.msra.mxu0 0.0
        %2966 = vmatprep.subr.mxu0 0.0
        %2967 = vmatpush1.msra.mxu0 0.0
        %2968 = vmatprep.subr.mxu0 0.0
        %2969 = vmatpush1.msra.mxu0 0.0
        %2970 = vmatprep.subr.mxu0 0.0
        %2971 = vmatpush1.msra.mxu0 0.0
        %2972 = vmatprep.mubr.f32.mxu0 0.0
        %2973 = vmatmul.mubr.f32.gmra.mrb[0].mxu0 %v1777
        %v2974 = vpop.f32.mrb[0].mxu0
        %v2975 = vadd.f32 %v1740, %v2974
        %v2976 = vpop.f32.mrb[0].mxu0
        %v2977 = vadd.f32 %v1742, %v2976
        %2978 = vdwg.mxu0
        %s2979 = smul.u32 %s457, 32
        %s2980 = smul.addr %s2979, 8
        %s2981 = scalar_lea.vmem [#allocation2], %s2980
        %2982 = vst [vmem:[%s2981] sm:$0xff] %v1910
        %2983 = vst [vmem:[%s2981 + $0x8] sm:$0xff] %v1912
        %2984 = vst [vmem:[%s2981 + $0x10] sm:$0xff] %v1981
        %2985 = vst [vmem:[%s2981 + $0x18] sm:$0xff] %v1983
        %2986 = vst [vmem:[%s2981 + $0x20] sm:$0xff] %v2052
        %2987 = vst [vmem:[%s2981 + $0x28] sm:$0xff] %v2054
        %2988 = vst [vmem:[%s2981 + $0x30] sm:$0xff] %v2123
        %2989 = vst [vmem:[%s2981 + $0x38] sm:$0xff] %v2125
        %2990 = vst [vmem:[%s2981 + $0x40] sm:$0xff] %v2194
        %2991 = vst [vmem:[%s2981 + $0x48] sm:$0xff] %v2196
        %2992 = vst [vmem:[%s2981 + $0x50] sm:$0xff] %v2265
        %2993 = vst [vmem:[%s2981 + $0x58] sm:$0xff] %v2267
        %2994 = vst [vmem:[%s2981 + $0x60] sm:$0xff] %v2336
        %2995 = vst [vmem:[%s2981 + $0x68] sm:$0xff] %v2338
        %2996 = vst [vmem:[%s2981 + $0x70] sm:$0xff] %v2407
        %2997 = vst [vmem:[%s2981 + $0x78] sm:$0xff] %v2409
        %2998 = vst [vmem:[%s2981 + $0x80] sm:$0xff] %v2478
        %2999 = vst [vmem:[%s2981 + $0x88] sm:$0xff] %v2480
        %3000 = vst [vmem:[%s2981 + $0x90] sm:$0xff] %v2549
        %3001 = vst [vmem:[%s2981 + $0x98] sm:$0xff] %v2551
        %3002 = vst [vmem:[%s2981 + $0xa0] sm:$0xff] %v2620
        %3003 = vst [vmem:[%s2981 + $0xa8] sm:$0xff] %v2622
        %3004 = vst [vmem:[%s2981 + $0xb0] sm:$0xff] %v2691
        %3005 = vst [vmem:[%s2981 + $0xb8] sm:$0xff] %v2693
        %3006 = vst [vmem:[%s2981 + $0xc0] sm:$0xff] %v2762
        %3007 = vst [vmem:[%s2981 + $0xc8] sm:$0xff] %v2764
        %3008 = vst [vmem:[%s2981 + $0xd0] sm:$0xff] %v2833
        %3009 = vst [vmem:[%s2981 + $0xd8] sm:$0xff] %v2835
        %3010 = vst [vmem:[%s2981 + $0xe0] sm:$0xff] %v2904
        %3011 = vst [vmem:[%s2981 + $0xe8] sm:$0xff] %v2906
        %3012 = vst [vmem:[%s2981 + $0xf0] sm:$0xff] %v2975
        %3013 = vst [vmem:[%s2981 + $0xf8] sm:$0xff] %v2977
        %v3014 = vld [vmem:[#allocation3] sm:$0xff]
        %v3015 = vadd.f32 %v1910, %v1912
        %v3016 = vadd.f32 %v3015, %v1981
        %v3017 = vadd.f32 %v3016, %v1983
        %v3018 = vadd.f32 %v3017, %v2052
        %v3019 = vadd.f32 %v3018, %v2054
        %v3020 = vadd.f32 %v3019, %v2123
        %v3021 = vadd.f32 %v3020, %v2125
        %v3022 = vadd.f32 %v3021, %v2194
        %v3023 = vadd.f32 %v3022, %v2196
        %v3024 = vadd.f32 %v3023, %v2265
        %v3025 = vadd.f32 %v3024, %v2267
        %v3026 = vadd.f32 %v3025, %v2336
        %v3027 = vadd.f32 %v3026, %v2338
        %v3028 = vadd.f32 %v3027, %v2407
        %v3029 = vadd.f32 %v3028, %v2409
        %v3030 = vadd.f32 %v3029, %v2478
        %v3031 = vadd.f32 %v3030, %v2480
        %v3032 = vadd.f32 %v3031, %v2549
        %v3033 = vadd.f32 %v3032, %v2551
        %v3034 = vadd.f32 %v3033, %v2620
        %v3035 = vadd.f32 %v3034, %v2622
        %v3036 = vadd.f32 %v3035, %v2691
        %v3037 = vadd.f32 %v3036, %v2693
        %v3038 = vadd.f32 %v3037, %v2762
        %v3039 = vadd.f32 %v3038, %v2764
        %v3040 = vadd.f32 %v3039, %v2833
        %v3041 = vadd.f32 %v3040, %v2835
        %v3042 = vadd.f32 %v3041, %v2904
        %v3043 = vadd.f32 %v3042, %v2906
        %v3044 = vadd.f32 %v3043, %v2975
        %v3045 = vadd.f32 %v3044, %v2977
        %3046 = vadd.xlane.f32.xlu0 %v3045
        %v3047 = vpop.xlane.xlu0 %3046
        %v3048 = vadd.f32 %v3014, %v3047
        %vm3049 = vcmask 7168
        %3050 = vst.msk [vmem:[#allocation3] sm:$0xff] %vm3049, %v3048
        %s3051 = scalar_lea.vmem [#allocation3], 8
        %v3052 = vld [vmem:[%s3051] sm:$0xff]
        %v3053 = vmul.f32 %v1910, %v1910
        %v3054 = vmul.f32 %v1912, %v1912
        %v3055 = vmul.f32 %v1981, %v1981
        %v3056 = vmul.f32 %v1983, %v1983
        %v3057 = vmul.f32 %v2052, %v2052
        %v3058 = vmul.f32 %v2054, %v2054
        %v3059 = vmul.f32 %v2123, %v2123
        %v3060 = vmul.f32 %v2125, %v2125
        %v3061 = vmul.f32 %v2194, %v2194
        %v3062 = vmul.f32 %v2196, %v2196
        %v3063 = vmul.f32 %v2265, %v2265
        %v3064 = vmul.f32 %v2267, %v2267
        %v3065 = vmul.f32 %v2336, %v2336
        %v3066 = vmul.f32 %v2338, %v2338
        %v3067 = vmul.f32 %v2407, %v2407
        %v3068 = vmul.f32 %v2409, %v2409
        %v3069 = vmul.f32 %v2478, %v2478
        %v3070 = vmul.f32 %v2480, %v2480
        %v3071 = vmul.f32 %v2549, %v2549
        %v3072 = vmul.f32 %v2551, %v2551
        %v3073 = vmul.f32 %v2620, %v2620
        %v3074 = vmul.f32 %v2622, %v2622
        %v3075 = vmul.f32 %v2691, %v2691
        %v3076 = vmul.f32 %v2693, %v2693
        %v3077 = vmul.f32 %v2762, %v2762
        %v3078 = vmul.f32 %v2764, %v2764
        %v3079 = vmul.f32 %v2833, %v2833
        %v3080 = vmul.f32 %v2835, %v2835
        %v3081 = vmul.f32 %v2904, %v2904
        %v3082 = vmul.f32 %v2906, %v2906
        %v3083 = vmul.f32 %v2975, %v2975
        %v3084 = vmul.f32 %v2977, %v2977
        %v3085 = vadd.f32 %v3053, %v3054
        %v3086 = vadd.f32 %v3085, %v3055
        %v3087 = vadd.f32 %v3086, %v3056
        %v3088 = vadd.f32 %v3087, %v3057
        %v3089 = vadd.f32 %v3088, %v3058
        %v3090 = vadd.f32 %v3089, %v3059
        %v3091 = vadd.f32 %v3090, %v3060
        %v3092 = vadd.f32 %v3091, %v3061
        %v3093 = vadd.f32 %v3092, %v3062
        %v3094 = vadd.f32 %v3093, %v3063
        %v3095 = vadd.f32 %v3094, %v3064
        %v3096 = vadd.f32 %v3095, %v3065
        %v3097 = vadd.f32 %v3096, %v3066
        %v3098 = vadd.f32 %v3097, %v3067
        %v3099 = vadd.f32 %v3098, %v3068
        %v3100 = vadd.f32 %v3099, %v3069
        %v3101 = vadd.f32 %v3100, %v3070
        %v3102 = vadd.f32 %v3101, %v3071
        %v3103 = vadd.f32 %v3102, %v3072
        %v3104 = vadd.f32 %v3103, %v3073
        %v3105 = vadd.f32 %v3104, %v3074
        %v3106 = vadd.f32 %v3105, %v3075
        %v3107 = vadd.f32 %v3106, %v3076
        %v3108 = vadd.f32 %v3107, %v3077
        %v3109 = vadd.f32 %v3108, %v3078
        %v3110 = vadd.f32 %v3109, %v3079
        %v3111 = vadd.f32 %v3110, %v3080
        %v3112 = vadd.f32 %v3111, %v3081
        %v3113 = vadd.f32 %v3112, %v3082
        %v3114 = vadd.f32 %v3113, %v3083
        %v3115 = vadd.f32 %v3114, %v3084
        %3116 = vadd.xlane.f32.xlu0 %v3115
        %v3117 = vpop.xlane.xlu0 %3116
        %v3118 = vadd.f32 %v3052, %v3117
        %3119 = vst.msk [vmem:[%s3051] sm:$0xff] %vm3049, %v3118
      $region60: #{xmodule2_forward.1} parent=51 // pred_fallthru
        _
      %p3120 = scmp.eq.s32.totalorder %s24, 1
      // Predicated region
      $region61: #{xmodule2_forward.1} parent=51 // pred_check
        %p3121 = pneg %p3120
      $region62: #{xmodule2_forward.1} parent=51 // pred_check_branch
        %3123 = sbr.rel (%p3121) target = $region64
      $region63: #{xmodule2_forward.1} parent=51 // pred_region
        %v3124 = vld [vmem:[%s4] sm:$0xff]
        %v3125 = vld [vmem:[#allocation3] sm:$0xff]
        %s3126 = scalar_lea.vmem [#allocation3], 8
        %v3127 = vld [vmem:[%s3126] sm:$0xff]
        %v3128 = vrcp.pop 8192.0
        %v3129 = vmul.f32 %v3125, %v3128
        %v3130 = vadd.f32 %v3129, %v3124
        %v3131 = vmul.f32 %v3124, 2.0
        %v3132 = vmul.f32 %v3131, %v3125
        %v3133 = vadd.f32 %v3127, %v3132
        %v3134 = vmul.f32 %v3133, %v3128
        %v3135 = vmul.f32 %v3124, %v3124
        %v3136 = vadd.f32 %v3134, %v3135
        %v3137 = vmul.f32 %v3130, %v3130
        %v3138 = vsub.f32 %v3136, %v3137
        %v3139 = vmax.f32 %v3138, 0.0
        %v3140 = vld [vmem:[%s5] sm:$0xff]
        %v3141 = vadd.f32 %v3139, 1e-05
        %v3142 = vrsqrt.pop %v3141
        %v3143 = vmul.f32 %v3140, %v3142
        %v3144 = vld [vmem:[%s6] sm:$0xff]
        %v3145 = vsub.f32 %v3124, %v3130
        %v3146 = vmul.f32 %v3145, %v3143
        %v3147 = vadd.f32 %v3144, %v3146
        %v3148 = vld [vmem:[%s442] sm:$0xff]
        %s3149 = smul.u32 %s457, 32
        %s3150 = smul.addr %s3149, 8
        %s3151 = scalar_lea.vmem [#allocation2], %s3150
        %v3152 = vld [vmem:[%s3151] sm:$0xff]
        %v3153 = vld [vmem:[%s3151 + $0x8] sm:$0xff]
        %v3154 = vld [vmem:[%s3151 + $0x10] sm:$0xff]
        %v3155 = vld [vmem:[%s3151 + $0x18] sm:$0xff]
        %v3156 = vld [vmem:[%s3151 + $0x20] sm:$0xff]
        %v3157 = vld [vmem:[%s3151 + $0x28] sm:$0xff]
        %v3158 = vld [vmem:[%s3151 + $0x30] sm:$0xff]
        %v3159 = vld [vmem:[%s3151 + $0x38] sm:$0xff]
        %v3160 = vld [vmem:[%s3151 + $0x40] sm:$0xff]
        %v3161 = vld [vmem:[%s3151 + $0x48] sm:$0xff]
        %v3162 = vld [vmem:[%s3151 + $0x50] sm:$0xff]
        %v3163 = vld [vmem:[%s3151 + $0x58] sm:$0xff]
        %v3164 = vld [vmem:[%s3151 + $0x60] sm:$0xff]
        %v3165 = vld [vmem:[%s3151 + $0x68] sm:$0xff]
        %v3166 = vld [vmem:[%s3151 + $0x70] sm:$0xff]
        %v3167 = vld [vmem:[%s3151 + $0x78] sm:$0xff]
        %v3168 = vld [vmem:[%s3151 + $0x80] sm:$0xff]
        %v3169 = vld [vmem:[%s3151 + $0x88] sm:$0xff]
        %v3170 = vld [vmem:[%s3151 + $0x90] sm:$0xff]
        %v3171 = vld [vmem:[%s3151 + $0x98] sm:$0xff]
        %v3172 = vld [vmem:[%s3151 + $0xa0] sm:$0xff]
        %v3173 = vld [vmem:[%s3151 + $0xa8] sm:$0xff]
        %v3174 = vld [vmem:[%s3151 + $0xb0] sm:$0xff]
        %v3175 = vld [vmem:[%s3151 + $0xb8] sm:$0xff]
        %v3176 = vld [vmem:[%s3151 + $0xc0] sm:$0xff]
        %v3177 = vld [vmem:[%s3151 + $0xc8] sm:$0xff]
        %v3178 = vld [vmem:[%s3151 + $0xd0] sm:$0xff]
        %v3179 = vld [vmem:[%s3151 + $0xd8] sm:$0xff]
        %v3180 = vld [vmem:[%s3151 + $0xe0] sm:$0xff]
        %v3181 = vld [vmem:[%s3151 + $0xe8] sm:$0xff]
        %v3182 = vld [vmem:[%s3151 + $0xf0] sm:$0xff]
        %v3183 = vld [vmem:[%s3151 + $0xf8] sm:$0xff]
        %v3184 = vmul.f32 %v3143, %v3148
        %3186 = vset.pattern.permute.xlu0 0
        %3187 = vperm.xlu0 %3186, %v3184
        %v3188 = vpop.permute.xlu0 %3187
        %v3190 = vmul.f32 %v3152, %v3188
        %v3191 = vmul.f32 %v3153, %v3188
        %v3192 = vmul.f32 %v3154, %v3188
        %v3193 = vmul.f32 %v3155, %v3188
        %v3194 = vmul.f32 %v3156, %v3188
        %v3195 = vmul.f32 %v3157, %v3188
        %v3196 = vmul.f32 %v3158, %v3188
        %v3197 = vmul.f32 %v3159, %v3188
        %v3198 = vmul.f32 %v3160, %v3188
        %v3199 = vmul.f32 %v3161, %v3188
        %v3200 = vmul.f32 %v3162, %v3188
        %v3201 = vmul.f32 %v3163, %v3188
        %v3202 = vmul.f32 %v3164, %v3188
        %v3203 = vmul.f32 %v3165, %v3188
        %v3204 = vmul.f32 %v3166, %v3188
        %v3205 = vmul.f32 %v3167, %v3188
        %v3206 = vmul.f32 %v3168, %v3188
        %v3207 = vmul.f32 %v3169, %v3188
        %v3208 = vmul.f32 %v3170, %v3188
        %v3209 = vmul.f32 %v3171, %v3188
        %v3210 = vmul.f32 %v3172, %v3188
        %v3211 = vmul.f32 %v3173, %v3188
        %v3212 = vmul.f32 %v3174, %v3188
        %v3213 = vmul.f32 %v3175, %v3188
        %v3214 = vmul.f32 %v3176, %v3188
        %v3215 = vmul.f32 %v3177, %v3188
        %v3216 = vmul.f32 %v3178, %v3188
        %v3217 = vmul.f32 %v3179, %v3188
        %v3218 = vmul.f32 %v3180, %v3188
        %v3219 = vmul.f32 %v3181, %v3188
        %v3220 = vmul.f32 %v3182, %v3188
        %v3221 = vmul.f32 %v3183, %v3188
        %v3222 = vmul.f32 %v3147, %v3148
        %3224 = vset.pattern.permute.xlu0 0
        %3225 = vperm.xlu0 %3224, %v3222
        %v3226 = vpop.permute.xlu0 %3225
        %v3228 = vadd.f32 %v3190, %v3226
        %v3229 = vadd.f32 %v3191, %v3226
        %v3230 = vadd.f32 %v3192, %v3226
        %v3231 = vadd.f32 %v3193, %v3226
        %v3232 = vadd.f32 %v3194, %v3226
        %v3233 = vadd.f32 %v3195, %v3226
        %v3234 = vadd.f32 %v3196, %v3226
        %v3235 = vadd.f32 %v3197, %v3226
        %v3236 = vadd.f32 %v3198, %v3226
        %v3237 = vadd.f32 %v3199, %v3226
        %v3238 = vadd.f32 %v3200, %v3226
        %v3239 = vadd.f32 %v3201, %v3226
        %v3240 = vadd.f32 %v3202, %v3226
        %v3241 = vadd.f32 %v3203, %v3226
        %v3242 = vadd.f32 %v3204, %v3226
        %v3243 = vadd.f32 %v3205, %v3226
        %v3244 = vadd.f32 %v3206, %v3226
        %v3245 = vadd.f32 %v3207, %v3226
        %v3246 = vadd.f32 %v3208, %v3226
        %v3247 = vadd.f32 %v3209, %v3226
        %v3248 = vadd.f32 %v3210, %v3226
        %v3249 = vadd.f32 %v3211, %v3226
        %v3250 = vadd.f32 %v3212, %v3226
        %v3251 = vadd.f32 %v3213, %v3226
        %v3252 = vadd.f32 %v3214, %v3226
        %v3253 = vadd.f32 %v3215, %v3226
        %v3254 = vadd.f32 %v3216, %v3226
        %v3255 = vadd.f32 %v3217, %v3226
        %v3256 = vadd.f32 %v3218, %v3226
        %v3257 = vadd.f32 %v3219, %v3226
        %v3258 = vadd.f32 %v3220, %v3226
        %v3259 = vadd.f32 %v3221, %v3226
        %v3260 = vmax.f32 %v3228, 0.0
        %v3261 = vmax.f32 %v3229, 0.0
        %v3262 = vmax.f32 %v3230, 0.0
        %v3263 = vmax.f32 %v3231, 0.0
        %v3264 = vmax.f32 %v3232, 0.0
        %v3265 = vmax.f32 %v3233, 0.0
        %v3266 = vmax.f32 %v3234, 0.0
        %v3267 = vmax.f32 %v3235, 0.0
        %v3268 = vmax.f32 %v3236, 0.0
        %v3269 = vmax.f32 %v3237, 0.0
        %v3270 = vmax.f32 %v3238, 0.0
        %v3271 = vmax.f32 %v3239, 0.0
        %v3272 = vmax.f32 %v3240, 0.0
        %v3273 = vmax.f32 %v3241, 0.0
        %v3274 = vmax.f32 %v3242, 0.0
        %v3275 = vmax.f32 %v3243, 0.0
        %v3276 = vmax.f32 %v3244, 0.0
        %v3277 = vmax.f32 %v3245, 0.0
        %v3278 = vmax.f32 %v3246, 0.0
        %v3279 = vmax.f32 %v3247, 0.0
        %v3280 = vmax.f32 %v3248, 0.0
        %v3281 = vmax.f32 %v3249, 0.0
        %v3282 = vmax.f32 %v3250, 0.0
        %v3283 = vmax.f32 %v3251, 0.0
        %v3284 = vmax.f32 %v3252, 0.0
        %v3285 = vmax.f32 %v3253, 0.0
        %v3286 = vmax.f32 %v3254, 0.0
        %v3287 = vmax.f32 %v3255, 0.0
        %v3288 = vmax.f32 %v3256, 0.0
        %v3289 = vmax.f32 %v3257, 0.0
        %v3290 = vmax.f32 %v3258, 0.0
        %v3291 = vmax.f32 %v3259, 0.0
        %3292 = vst [vmem:[%s453] sm:$0xff] %v3260
        %3293 = vst [vmem:[%s453 + $0x8] sm:$0xff] %v3261
        %3294 = vst [vmem:[%s453 + $0x10] sm:$0xff] %v3262
        %3295 = vst [vmem:[%s453 + $0x18] sm:$0xff] %v3263
        %3296 = vst [vmem:[%s453 + $0x20] sm:$0xff] %v3264
        %3297 = vst [vmem:[%s453 + $0x28] sm:$0xff] %v3265
        %3298 = vst [vmem:[%s453 + $0x30] sm:$0xff] %v3266
        %3299 = vst [vmem:[%s453 + $0x38] sm:$0xff] %v3267
        %3300 = vst [vmem:[%s453 + $0x40] sm:$0xff] %v3268
        %3301 = vst [vmem:[%s453 + $0x48] sm:$0xff] %v3269
        %3302 = vst [vmem:[%s453 + $0x50] sm:$0xff] %v3270
        %3303 = vst [vmem:[%s453 + $0x58] sm:$0xff] %v3271
        %3304 = vst [vmem:[%s453 + $0x60] sm:$0xff] %v3272
        %3305 = vst [vmem:[%s453 + $0x68] sm:$0xff] %v3273
        %3306 = vst [vmem:[%s453 + $0x70] sm:$0xff] %v3274
        %3307 = vst [vmem:[%s453 + $0x78] sm:$0xff] %v3275
        %3308 = vst [vmem:[%s453 + $0x80] sm:$0xff] %v3276
        %3309 = vst [vmem:[%s453 + $0x88] sm:$0xff] %v3277
        %3310 = vst [vmem:[%s453 + $0x90] sm:$0xff] %v3278
        %3311 = vst [vmem:[%s453 + $0x98] sm:$0xff] %v3279
        %3312 = vst [vmem:[%s453 + $0xa0] sm:$0xff] %v3280
        %3313 = vst [vmem:[%s453 + $0xa8] sm:$0xff] %v3281
        %3314 = vst [vmem:[%s453 + $0xb0] sm:$0xff] %v3282
        %3315 = vst [vmem:[%s453 + $0xb8] sm:$0xff] %v3283
        %3316 = vst [vmem:[%s453 + $0xc0] sm:$0xff] %v3284
        %3317 = vst [vmem:[%s453 + $0xc8] sm:$0xff] %v3285
        %3318 = vst [vmem:[%s453 + $0xd0] sm:$0xff] %v3286
        %3319 = vst [vmem:[%s453 + $0xd8] sm:$0xff] %v3287
        %3320 = vst [vmem:[%s453 + $0xe0] sm:$0xff] %v3288
        %3321 = vst [vmem:[%s453 + $0xe8] sm:$0xff] %v3289
        %3322 = vst [vmem:[%s453 + $0xf0] sm:$0xff] %v3290
        %3323 = vst [vmem:[%s453 + $0xf8] sm:$0xff] %v3291
      $region64: #{xmodule2_forward.1} parent=51 // pred_fallthru
        _
      %s3324 = smul.u32 %s25, %s24
      %s3325 = smul.u32 %s26, %s24
      %s3326 = smul.u32 32, %s3325
      %p3327 = scmp.lt.s32.totalorder %s3324, 1
      %s3328 = scalar_select %p3327, %s3324, 1
      %p3329 = scmp.lt.s32.totalorder %s3326, 31
      %s3330 = scalar_select %p3329, %s3326, 31
      %s3331 = smul.addr %s3328, 32
      %s3332 = sadd.s32 %s3330, %s3331
      %s3333 = smul.addr %s3332, 8
      %s3334 = scalar_lea.vmem %s8, %s3333
      // Predicated region
      $region65: #{xmodule2_forward.1} parent=51 // pred_check
        %p3335 = pneg %p261
      $region66: #{xmodule2_forward.1} parent=51 // pred_check_branch
        %3337 = sbr.rel (%p3335) target = $region68
      $region67: #{xmodule2_forward.1} parent=51 // pred_region
        %s3338 = smul.u32 %s25, %s24
        %s3339 = smul.u32 %s26, %s24
        %s3340 = smul.u32 32, %s3339
      $region68: #{xmodule2_forward.1} parent=51 // pred_fallthru
        _
    $region52: #{xmodule2_forward.1} parent=5 // pred_fallthru
      _
    %p3341 = scmp.le.s32.totalorder 2, %s14
    // Predicated region
    $region69: #{xmodule2_forward.1} parent=5 // pred_check
      %p3342 = pneg %p3341
    $region70: #{xmodule2_forward.1} parent=5 // pred_check_branch
      %3344 = sbr.rel (%p3342) target = $region72
    $region71: #{xmodule2_forward.1} parent=5 // pred_region
      %s3345 = ssub.s32 %s14, 2
      // Predicated region
      $region73: #{xmodule2_forward.1} parent=71 // pred_check
        %p3346 = pneg %p267
      $region74: #{xmodule2_forward.1} parent=71 // pred_check_branch
        %3348 = sbr.rel (%p3346) target = $region76
      $region75: #{xmodule2_forward.1} parent=71 // pred_region
        %s3349 = smul.u32 %s28, %s27
        %s3350 = smul.u32 %s29, %s27
        %s3351 = smul.u32 32, %s3350
        %p3352 = scmp.lt.s32.totalorder %s3349, 1
        %s3353 = scalar_select %p3352, %s3349, 1
        %p3354 = scmp.lt.s32.totalorder %s3351, 31
        %s3355 = scalar_select %p3354, %s3351, 31
        %s3356 = smul.addr %s3353, 32
        %s3357 = sadd.s32 %s3355, %s3356
        %s3358 = smul.addr %s3357, 8
        %s3359 = scalar_lea.vmem %s8, %s3358
      $region76: #{xmodule2_forward.1} parent=71 // pred_fallthru
        _
    $region72: #{xmodule2_forward.1} parent=5 // pred_fallthru
      _
  $region6: #{xmodule2_forward.1} parent=0 // loop_footer
    %s18 = sadd.s32 1, %s14
  $region7: #{xmodule2_forward.1} parent=0 // loop_footer_branch
    %13 = sbr.rel target = $region3
  $region8: #{xmodule2_forward.1} parent=0 // loop_exit
    _

</llo_original>
